<compile_context>
chip_gen: v7x
topology: tpu7x:2x2x1
jax: 0.10.0
libtpu: 0.0.40
codegen_flags: <defaults>
</compile_context>

<pallas_src>
import functools

import jax
import jax.numpy as jnp
from jax import lax
from jax.experimental import pallas as pl
from jax.experimental.pallas import tpu as pltpu

EPS = 1e-5  # PyTorch nn.LayerNorm default


# ---------------------------------------------------------------------------
# math helpers (pure jnp; _layernorm is shared with the reference)
# ---------------------------------------------------------------------------
def _layernorm(x, g, b):
    mu = jnp.mean(x, axis=-1, keepdims=True)
    var = jnp.mean((x - mu) ** 2, axis=-1, keepdims=True)
    return (x - mu) * jax.lax.rsqrt(var + EPS) * g + b


def _mm(a, w):
    """Linear-layer matmul: activations cast to the weight streaming dtype (f32 or
    bf16), accumulation kept in f32 via preferred_element_type."""
    return jnp.dot(a.astype(w.dtype), w, preferred_element_type=jnp.float32)


def _softmax(s):
    """Numerically safe softmax over the last axis.  Exact division (the approx EUP
    reciprocal compounded to >2e-3 over depth in the previous version)."""
    m = jnp.max(s, axis=-1, keepdims=True)
    e = jnp.exp(s - m)
    return e / jnp.sum(e, axis=-1, keepdims=True)


def _split_heads(x2d, batch, n, heads, dim_head):
    # (B*n, heads*dim_head) -> (B*heads, n, dim_head)   ('b n (h d) -> (b h) n d')
    x = x2d.reshape(batch, n, heads, dim_head)
    x = jnp.swapaxes(x, 1, 2)
    return x.reshape(batch * heads, n, dim_head)


def _merge_heads(x3d, batch, n, heads, dim_head):
    # (B*heads, n, dim_head) -> (B*n, heads*dim_head)   ('(b h) n d -> b n (h d)')
    x = x3d.reshape(batch, heads, n, dim_head)
    x = jnp.swapaxes(x, 1, 2)
    return x.reshape(batch * n, heads * dim_head)


def _mha(q, k, v, w_out, b_out, batch, heads, dim_head, scale):
    """Multi-head attention + output projection on batch-flattened activations.

    q: (B*Nq, inner), k/v: (B*Nk, inner).  Heads are folded into the dot_general
    batch dimension (single batched matmul for scores and for PV), and the head
    concat goes through ONE full-K output projection matmul.
    """
    nq = q.shape[0] // batch
    nk = k.shape[0] // batch
    qh = _split_heads(q, batch, nq, heads, dim_head)
    kh = _split_heads(k, batch, nk, heads, dim_head)
    vh = _split_heads(v, batch, nk, heads, dim_head)
    s = lax.dot_general(qh, kh, (((2,), (2,)), ((0,), (0,))),
                        preferred_element_type=jnp.float32) * scale
    p = _softmax(s)
    o = lax.dot_general(p, vh, (((2,), (1,)), ((0,), (0,))),
                        preferred_element_type=jnp.float32)
    o2d = _merge_heads(o, batch, nq, heads, dim_head)
    return _mm(o2d, w_out) + b_out


# ---------------------------------------------------------------------------
# fused Pallas kernel: all depth layers + final LayerNorm
# grid = (batch_blocks [parallel], depth [arbitrary, innermost])
# residual stream lives in out_ref (resident across the depth axis)
# ---------------------------------------------------------------------------
def cross_transformer_kernel(
        enc_ref, qx_ref,
        ln1_g_ref, ln1_b_ref, w_qkv_ref, w_osa_ref, b_osa_ref,
        ln2_g_ref, ln2_b_ref, w_q_ref, w_kv_ref, w_oca_ref, b_oca_ref,
        ln3_g_ref, ln3_b_ref, w1_ref, b1_ref, w2_ref, b2_ref,
        fin_g_ref, fin_b_ref,
        out_ref,
        *, batch, heads, dim_head):
    inner = heads * dim_head
    scale = dim_head ** -0.5
    d = pl.program_id(1)
    is_last = d == pl.num_programs(1) - 1

    @pl.when(d == 0)
    def _():
        out_ref[...] = qx_ref[...]          # seed the residual stream once per batch block

    qx = out_ref[...]                       # (rows_q, dim), resident across layers
    enc = enc_ref[...]                      # (rows_x, dim), resident across layers

    # current layer's weights (leading depth-block axis dropped via [0])
    ln1_g, ln1_b = ln1_g_ref[0], ln1_b_ref[0]
    w_qkv = w_qkv_ref[0]
    w_osa, b_osa = w_osa_ref[0], b_osa_ref[0]
    ln2_g, ln2_b = ln2_g_ref[0], ln2_b_ref[0]
    w_q, w_kv = w_q_ref[0], w_kv_ref[0]
    w_oca, b_oca = w_oca_ref[0], b_oca_ref[0]
    ln3_g, ln3_b = ln3_g_ref[0], ln3_b_ref[0]
    w1, b1 = w1_ref[0], b1_ref[0]
    w2, b2 = w2_ref[0], b2_ref[0]

    # ---- PreNorm self-attention on the query stream (inner Attention module) ----
    xn = _layernorm(qx, ln1_g, ln1_b)
    qkv = _mm(xn, w_qkv)                                        # (rows_q, 3*inner)
    sa = _mha(qkv[:, 0:inner], qkv[:, inner:2 * inner], qkv[:, 2 * inner:3 * inner],
              w_osa, b_osa, batch, heads, dim_head, scale)
    q_in = _layernorm(sa + qx, ln2_g, ln2_b)

    # ---- cross-attention: queries from q_in, keys/values from the encoder ----
    # (at realistic Nx this block becomes a flash-style online-softmax loop over Nx tiles)
    qc = _mm(q_in, w_q)                                         # (rows_q, inner)
    kv = _mm(enc, w_kv)                                         # (rows_x, 2*inner)
    ca = _mha(qc, kv[:, 0:inner], kv[:, inner:2 * inner],
              w_oca, b_oca, batch, heads, dim_head, scale)
    x = ca + q_in

    # ---- PreNorm feed-forward (Linear -> Tanh -> Linear) + residual ----
    xn3 = _layernorm(x, ln3_g, ln3_b)
    h1 = jnp.tanh(_mm(xn3, w1) + b1)
    new_q = _mm(h1, w2) + b2 + x

    @pl.when(jnp.logical_not(is_last))
    def _():
        out_ref[...] = new_q                # carry residual stream to the next layer

    @pl.when(is_last)
    def _():
        out_ref[...] = _layernorm(new_q, fin_g_ref[...], fin_b_ref[...])


# ---------------------------------------------------------------------------
# wrapper
# ---------------------------------------------------------------------------
_LAYER_WEIGHT_NAMES = ("ln1_g", "ln1_b", "w_qkv", "w_osa", "b_osa",
                       "ln2_g", "ln2_b", "w_q", "w_kv", "w_oca", "b_oca",
                       "ln3_g", "ln3_b", "w1", "b1", "w2", "b2")
_MATMUL_WEIGHTS = frozenset(("w_qkv", "w_osa", "w_q", "w_kv", "w_oca", "w1", "w2"))


def cross_transformer_forward(x, q_x, params, heads, dim_head, *,
                              batch_blocks=1,
                              weight_dtype=jnp.float32,
                              vmem_limit_bytes=None):
    """CrossTransformer.forward.

    x:   (B, Nx, dim) encoder output (constant across layers)
    q_x: (B, Nq, dim) query stream (updated layer by layer), final LayerNorm at the end.

    batch_blocks : leading "parallel" grid axis (set >=2 on v7x to use both TensorCores).
    weight_dtype : streaming dtype for matmul weights (jnp.bfloat16 on v6e/v7x at
                   realistic sizes; f32 accumulation is kept either way).
    """
    B, Nx, dim = x.shape
    _, Nq, _ = q_x.shape
    depth = len(params["layers"])
    assert B % batch_blocks == 0
    bb = B // batch_blocks                   # batches handled per grid block

    enc_flat = x.reshape(B * Nx, dim).astype(jnp.float32)
    qx_flat = q_x.reshape(B * Nq, dim).astype(jnp.float32)

    def _cast(name, w):
        return w.astype(weight_dtype) if name in _MATMUL_WEIGHTS else w

    stacked = [jnp.stack([_cast(n, lp[n]) for lp in params["layers"]], axis=0)
               for n in _LAYER_WEIGHT_NAMES]

    kernel = functools.partial(cross_transformer_kernel,
                               batch=bb, heads=heads, dim_head=dim_head)

    def row_spec(nrows):                     # per-batch-block slab, resident across depth
        return pl.BlockSpec((nrows, dim), lambda b, d: (b, 0))

    def stacked_spec(w):                     # per-layer weight streamed along depth axis
        return pl.BlockSpec((1,) + w.shape[1:], lambda b, d: (d, 0, 0))

    out_flat = pl.pallas_call(
        kernel,
        out_shape=jax.ShapeDtypeStruct((B * Nq, dim), jnp.float32),
        grid=(batch_blocks, depth),          # depth innermost: out block revisited consecutively
        in_specs=[row_spec(bb * Nx),                          # encoder slab
                  row_spec(bb * Nq)]                          # initial q_x slab
                 + [stacked_spec(w) for w in stacked]
                 + [pl.BlockSpec((1, dim), lambda b, d: (0, 0)),   # final norm gamma
                    pl.BlockSpec((1, dim), lambda b, d: (0, 0))],  # final norm beta
        out_specs=row_spec(bb * Nq),         # residual stream accumulates here across layers
        compiler_params=pltpu.CompilerParams(
            dimension_semantics=("parallel", "arbitrary"),
            vmem_limit_bytes=vmem_limit_bytes),
    )(enc_flat, qx_flat, *stacked, params["norm_g"], params["norm_b"])

    return out_flat.reshape(B, Nq, dim)


# ---------------------------------------------------------------------------
# deterministic parameter init (synthetic; shapes match the PyTorch module)
# ---------------------------------------------------------------------------
def init_params(key, dim, depth, heads, dim_head, mlp_dim):
    inner = heads * dim_head
    state = {"key": key}

    def nxt():
        state["key"], sub = jax.random.split(state["key"])
        return sub

    def lin_w(din, dout):
        return jax.random.normal(nxt(), (din, dout), jnp.float32) * (din ** -0.5)

    def vec(n, scale=0.05):
        return scale * jax.random.normal(nxt(), (1, n), jnp.float32)

    layers = []
    for _ in range(depth):
        layers.append(dict(
            ln1_g=jnp.ones((1, dim), jnp.float32) + vec(dim),
            ln1_b=vec(dim),
            w_qkv=lin_w(dim, 3 * inner),          # Attention.to_qkv (no bias)
            w_osa=lin_w(inner, dim),              # Attention.to_out
            b_osa=vec(dim),
            ln2_g=jnp.ones((1, dim), jnp.float32) + vec(dim),
            ln2_b=vec(dim),
            w_q=lin_w(dim, inner),                # CrossAttention.to_q (no bias)
            w_kv=lin_w(dim, 2 * inner),           # CrossAttention.to_kv (no bias)
            w_oca=lin_w(inner, dim),              # CrossAttention.to_out
            b_oca=vec(dim),
            ln3_g=jnp.ones((1, dim), jnp.float32) + vec(dim),
            ln3_b=vec(dim),
            w1=lin_w(dim, mlp_dim),               # FeedForward linear 1
            b1=vec(mlp_dim),
            w2=lin_w(mlp_dim, dim),               # FeedForward linear 2
            b2=vec(dim),
        ))
    return dict(layers=layers,
                norm_g=jnp.ones((1, dim), jnp.float32),
                norm_b=jnp.zeros((1, dim), jnp.float32))


# ---------------------------------------------------------------------------
# pure-JAX reference (mirrors the PyTorch forward) for validation
# ---------------------------------------------------------------------------
def _ref_mha(q, k, v, heads, dim_head, scale):
    B, Nq, _ = q.shape
    Nk = k.shape[1]
    qh = q.reshape(B, Nq, heads, dim_head).transpose(0, 2, 1, 3)
    kh = k.reshape(B, Nk, heads, dim_head).transpose(0, 2, 1, 3)
    vh = v.reshape(B, Nk, heads, dim_head).transpose(0, 2, 1, 3)
    s = jnp.einsum("bhqd,bhkd->bhqk", qh, kh) * scale
    p = jax.nn.softmax(s, axis=-1)
    o = jnp.einsum("bhqk,bhkd->bhqd", p, vh)
    return o.transpose(0, 2, 1, 3).reshape(B, Nq, heads * dim_head)


def ref_forward(x, q_x, params, heads, dim_head):
    scale = dim_head ** -0.5
    enc = x
    for lp in params["layers"]:
        xn = _layernorm(q_x, lp["ln1_g"], lp["ln1_b"])
        q_s, k_s, v_s = jnp.split(xn @ lp["w_qkv"], 3, axis=-1)
        sa = _ref_mha(q_s, k_s, v_s, heads, dim_head, scale) @ lp["w_osa"] + lp["b_osa"]
        q_in = _layernorm(sa + q_x, lp["ln2_g"], lp["ln2_b"])
        qc = q_in @ lp["w_q"]
        kc, vc = jnp.split(enc @ lp["w_kv"], 2, axis=-1)
        ca = _ref_mha(qc, kc, vc, heads, dim_head, scale) @ lp["w_oca"] + lp["b_oca"]
        xx = ca + q_in
        xn3 = _layernorm(xx, lp["ln3_g"], lp["ln3_b"])
        ff = jnp.tanh(xn3 @ lp["w1"] + lp["b1"]) @ lp["w2"] + lp["b2"]
        q_x = ff + xx
    return _layernorm(q_x, params["norm_g"], params["norm_b"])


# ---------------------------------------------------------------------------
if __name__ == "__main__":
    DIM, DEPTH, HEADS, DIM_HEAD, MLP_DIM = 32, 2, 2, 16, 64
    B, NX, NQ = 2, 16, 8

    key = jax.random.PRNGKey(0)
    kx, kq, kp = jax.random.split(key, 3)
    x = jax.random.normal(kx, (B, NX, DIM), jnp.float32)     # encoder tokens
    q_x = jax.random.normal(kq, (B, NQ, DIM), jnp.float32)   # query tokens
    params = init_params(kp, DIM, DEPTH, HEADS, DIM_HEAD, MLP_DIM)

    # batch_blocks=2 exercises the leading "parallel" (megacore) axis: one batch per block.
    out = cross_transformer_forward(x, q_x, params, HEADS, DIM_HEAD, batch_blocks=2)
    out = jax.block_until_ready(out)

    ref = ref_forward(x, q_x, params, HEADS, DIM_HEAD)
    assert out.shape == (B, NQ, DIM)
    err = float(jnp.max(jnp.abs(out - ref)))
    # Exact softmax division restored -> tolerance is tight again.
    assert jnp.allclose(out, ref, atol=5e-4, rtol=5e-4), err
    print("KERNEL_OK")
</pallas_src>

<mosaic_0001>
module attributes {stable_mosaic.version = 11 : i64} {
  func.func @cross_transformer_kernel(%arg0: i32, %arg1: i32, %arg2: memref<16x32xf32, #tpu.memory_space<vmem>>, %arg3: memref<8x32xf32, #tpu.memory_space<vmem>>, %arg4: memref<1x1x32xf32, #tpu.memory_space<vmem>>, %arg5: memref<1x1x32xf32, #tpu.memory_space<vmem>>, %arg6: memref<1x32x96xf32, #tpu.memory_space<vmem>>, %arg7: memref<1x32x32xf32, #tpu.memory_space<vmem>>, %arg8: memref<1x1x32xf32, #tpu.memory_space<vmem>>, %arg9: memref<1x1x32xf32, #tpu.memory_space<vmem>>, %arg10: memref<1x1x32xf32, #tpu.memory_space<vmem>>, %arg11: memref<1x32x32xf32, #tpu.memory_space<vmem>>, %arg12: memref<1x32x64xf32, #tpu.memory_space<vmem>>, %arg13: memref<1x32x32xf32, #tpu.memory_space<vmem>>, %arg14: memref<1x1x32xf32, #tpu.memory_space<vmem>>, %arg15: memref<1x1x32xf32, #tpu.memory_space<vmem>>, %arg16: memref<1x1x32xf32, #tpu.memory_space<vmem>>, %arg17: memref<1x32x64xf32, #tpu.memory_space<vmem>>, %arg18: memref<1x1x64xf32, #tpu.memory_space<vmem>>, %arg19: memref<1x64x32xf32, #tpu.memory_space<vmem>>, %arg20: memref<1x1x32xf32, #tpu.memory_space<vmem>>, %arg21: memref<1x32xf32, #tpu.memory_space<vmem>>, %arg22: memref<1x32xf32, #tpu.memory_space<vmem>>, %arg23: memref<8x32xf32, #tpu.memory_space<vmem>>) attributes {dimension_semantics = [#tpu.dimension_semantics<parallel>, #tpu.dimension_semantics<arbitrary>], iteration_bounds = array<i64: 2, 2>, scalar_prefetch = 0 : i64, scratch_operands = 0 : i64, tpu.core_type = #tpu.core_type<tc>, window_params = [{transform_indices = @transform_0, window_bounds = array<i64: 16, 32>}, {transform_indices = @transform_1, window_bounds = array<i64: 8, 32>}, {transform_indices = @transform_2, window_bounds = array<i64: 1, 1, 32>}, {transform_indices = @transform_3, window_bounds = array<i64: 1, 1, 32>}, {transform_indices = @transform_4, window_bounds = array<i64: 1, 32, 96>}, {transform_indices = @transform_5, window_bounds = array<i64: 1, 32, 32>}, {transform_indices = @transform_6, window_bounds = array<i64: 1, 1, 32>}, {transform_indices = @transform_7, window_bounds = array<i64: 1, 1, 32>}, {transform_indices = @transform_8, window_bounds = array<i64: 1, 1, 32>}, {transform_indices = @transform_9, window_bounds = array<i64: 1, 32, 32>}, {transform_indices = @transform_10, window_bounds = array<i64: 1, 32, 64>}, {transform_indices = @transform_11, window_bounds = array<i64: 1, 32, 32>}, {transform_indices = @transform_12, window_bounds = array<i64: 1, 1, 32>}, {transform_indices = @transform_13, window_bounds = array<i64: 1, 1, 32>}, {transform_indices = @transform_14, window_bounds = array<i64: 1, 1, 32>}, {transform_indices = @transform_15, window_bounds = array<i64: 1, 32, 64>}, {transform_indices = @transform_16, window_bounds = array<i64: 1, 1, 64>}, {transform_indices = @transform_17, window_bounds = array<i64: 1, 64, 32>}, {transform_indices = @transform_18, window_bounds = array<i64: 1, 1, 32>}, {pipeline_mode = #tpu.pipeline_mode<synchronous>, transform_indices = @transform_19, window_bounds = array<i64: 1, 32>}, {pipeline_mode = #tpu.pipeline_mode<synchronous>, transform_indices = @transform_20, window_bounds = array<i64: 1, 32>}, {transform_indices = @transform_21, window_bounds = array<i64: 8, 32>}]} {
    %c1_i32 = arith.constant 1 : i32
    %0 = arith.cmpi eq, %arg1, %c1_i32 : i32
    %c0_i32 = arith.constant 0 : i32
    %1 = arith.cmpi eq, %arg1, %c0_i32 : i32
    %2 = arith.extui %1 : i1 to i32
    %c0_i32_0 = arith.constant 0 : i32
    %3 = arith.cmpi ne, %2, %c0_i32_0 : i32
    scf.if %3 {
      %c0_88 = arith.constant 0 : index
      %c0_89 = arith.constant 0 : index
      %185 = vector.load %arg3[%c0_88, %c0_89] : memref<8x32xf32, #tpu.memory_space<vmem>>, vector<8x32xf32>
      %c0_90 = arith.constant 0 : index
      %c0_91 = arith.constant 0 : index
      %186 = vector.load %arg23[%c0_90, %c0_91] : memref<8x32xf32, #tpu.memory_space<vmem>>, vector<8x32xf32>
      tpu.vector_store %arg23[%c0_90, %c0_91], %185 {strides = array<i32>} : memref<8x32xf32, #tpu.memory_space<vmem>>, vector<8x32xf32>,
    } else {
    }
    %c0 = arith.constant 0 : index
    %c0_1 = arith.constant 0 : index
    %4 = vector.load %arg23[%c0, %c0_1] : memref<8x32xf32, #tpu.memory_space<vmem>>, vector<8x32xf32>
    %c0_2 = arith.constant 0 : index
    %c0_3 = arith.constant 0 : index
    %5 = vector.load %arg2[%c0_2, %c0_3] : memref<16x32xf32, #tpu.memory_space<vmem>>, vector<16x32xf32>
    %c0_4 = arith.constant 0 : index
    %c0_5 = arith.constant 0 : index
    %c0_6 = arith.constant 0 : index
    %6 = vector.load %arg4[%c0_4, %c0_5, %c0_6] : memref<1x1x32xf32, #tpu.memory_space<vmem>>, vector<1x1x32xf32>
    %7 = vector.shape_cast %6 : vector<1x1x32xf32> to vector<1x32xf32>
    %c0_7 = arith.constant 0 : index
    %c0_8 = arith.constant 0 : index
    %c0_9 = arith.constant 0 : index
    %8 = vector.load %arg5[%c0_7, %c0_8, %c0_9] : memref<1x1x32xf32, #tpu.memory_space<vmem>>, vector<1x1x32xf32>
    %9 = vector.shape_cast %8 : vector<1x1x32xf32> to vector<1x32xf32>
    %c0_10 = arith.constant 0 : index
    %c0_11 = arith.constant 0 : index
    %c0_12 = arith.constant 0 : index
    %10 = vector.load %arg6[%c0_10, %c0_11, %c0_12] : memref<1x32x96xf32, #tpu.memory_space<vmem>>, vector<1x32x96xf32>
    %11 = vector.shape_cast %10 : vector<1x32x96xf32> to vector<32x96xf32>
    %c0_13 = arith.constant 0 : index
    %c0_14 = arith.constant 0 : index
    %c0_15 = arith.constant 0 : index
    %12 = vector.load %arg7[%c0_13, %c0_14, %c0_15] : memref<1x32x32xf32, #tpu.memory_space<vmem>>, vector<1x32x32xf32>
    %13 = vector.shape_cast %12 : vector<1x32x32xf32> to vector<32x32xf32>
    %c0_16 = arith.constant 0 : index
    %c0_17 = arith.constant 0 : index
    %c0_18 = arith.constant 0 : index
    %14 = vector.load %arg8[%c0_16, %c0_17, %c0_18] : memref<1x1x32xf32, #tpu.memory_space<vmem>>, vector<1x1x32xf32>
    %15 = vector.shape_cast %14 : vector<1x1x32xf32> to vector<1x32xf32>
    %c0_19 = arith.constant 0 : index
    %c0_20 = arith.constant 0 : index
    %c0_21 = arith.constant 0 : index
    %16 = vector.load %arg9[%c0_19, %c0_20, %c0_21] : memref<1x1x32xf32, #tpu.memory_space<vmem>>, vector<1x1x32xf32>
    %17 = vector.shape_cast %16 : vector<1x1x32xf32> to vector<1x32xf32>
    %c0_22 = arith.constant 0 : index
    %c0_23 = arith.constant 0 : index
    %c0_24 = arith.constant 0 : index
    %18 = vector.load %arg10[%c0_22, %c0_23, %c0_24] : memref<1x1x32xf32, #tpu.memory_space<vmem>>, vector<1x1x32xf32>
    %19 = vector.shape_cast %18 : vector<1x1x32xf32> to vector<1x32xf32>
    %c0_25 = arith.constant 0 : index
    %c0_26 = arith.constant 0 : index
    %c0_27 = arith.constant 0 : index
    %20 = vector.load %arg11[%c0_25, %c0_26, %c0_27] : memref<1x32x32xf32, #tpu.memory_space<vmem>>, vector<1x32x32xf32>
    %21 = vector.shape_cast %20 : vector<1x32x32xf32> to vector<32x32xf32>
    %c0_28 = arith.constant 0 : index
    %c0_29 = arith.constant 0 : index
    %c0_30 = arith.constant 0 : index
    %22 = vector.load %arg12[%c0_28, %c0_29, %c0_30] : memref<1x32x64xf32, #tpu.memory_space<vmem>>, vector<1x32x64xf32>
    %23 = vector.shape_cast %22 : vector<1x32x64xf32> to vector<32x64xf32>
    %c0_31 = arith.constant 0 : index
    %c0_32 = arith.constant 0 : index
    %c0_33 = arith.constant 0 : index
    %24 = vector.load %arg13[%c0_31, %c0_32, %c0_33] : memref<1x32x32xf32, #tpu.memory_space<vmem>>, vector<1x32x32xf32>
    %25 = vector.shape_cast %24 : vector<1x32x32xf32> to vector<32x32xf32>
    %c0_34 = arith.constant 0 : index
    %c0_35 = arith.constant 0 : index
    %c0_36 = arith.constant 0 : index
    %26 = vector.load %arg14[%c0_34, %c0_35, %c0_36] : memref<1x1x32xf32, #tpu.memory_space<vmem>>, vector<1x1x32xf32>
    %27 = vector.shape_cast %26 : vector<1x1x32xf32> to vector<1x32xf32>
    %c0_37 = arith.constant 0 : index
    %c0_38 = arith.constant 0 : index
    %c0_39 = arith.constant 0 : index
    %28 = vector.load %arg15[%c0_37, %c0_38, %c0_39] : memref<1x1x32xf32, #tpu.memory_space<vmem>>, vector<1x1x32xf32>
    %29 = vector.shape_cast %28 : vector<1x1x32xf32> to vector<1x32xf32>
    %c0_40 = arith.constant 0 : index
    %c0_41 = arith.constant 0 : index
    %c0_42 = arith.constant 0 : index
    %30 = vector.load %arg16[%c0_40, %c0_41, %c0_42] : memref<1x1x32xf32, #tpu.memory_space<vmem>>, vector<1x1x32xf32>
    %31 = vector.shape_cast %30 : vector<1x1x32xf32> to vector<1x32xf32>
    %c0_43 = arith.constant 0 : index
    %c0_44 = arith.constant 0 : index
    %c0_45 = arith.constant 0 : index
    %32 = vector.load %arg17[%c0_43, %c0_44, %c0_45] : memref<1x32x64xf32, #tpu.memory_space<vmem>>, vector<1x32x64xf32>
    %33 = vector.shape_cast %32 : vector<1x32x64xf32> to vector<32x64xf32>
    %c0_46 = arith.constant 0 : index
    %c0_47 = arith.constant 0 : index
    %c0_48 = arith.constant 0 : index
    %34 = vector.load %arg18[%c0_46, %c0_47, %c0_48] : memref<1x1x64xf32, #tpu.memory_space<vmem>>, vector<1x1x64xf32>
    %35 = vector.shape_cast %34 : vector<1x1x64xf32> to vector<1x64xf32>
    %c0_49 = arith.constant 0 : index
    %c0_50 = arith.constant 0 : index
    %c0_51 = arith.constant 0 : index
    %36 = vector.load %arg19[%c0_49, %c0_50, %c0_51] : memref<1x64x32xf32, #tpu.memory_space<vmem>>, vector<1x64x32xf32>
    %37 = vector.shape_cast %36 : vector<1x64x32xf32> to vector<64x32xf32>
    %c0_52 = arith.constant 0 : index
    %c0_53 = arith.constant 0 : index
    %c0_54 = arith.constant 0 : index
    %38 = vector.load %arg20[%c0_52, %c0_53, %c0_54] : memref<1x1x32xf32, #tpu.memory_space<vmem>>, vector<1x1x32xf32>
    %39 = vector.shape_cast %38 : vector<1x1x32xf32> to vector<1x32xf32>
    %cst = arith.constant dense<0.000000e+00> : vector<8xf32>
    %40 = vector.multi_reduction <add>, %4, %cst [1] : vector<8x32xf32> to vector<8xf32>
    %41 = vector.shape_cast %40 : vector<8xf32> to vector<8x1xf32>
    %cst_55 = arith.constant 3.200000e+01 : f32
    %42 = vector.broadcast %cst_55 : f32 to vector<8x1xf32>
    %43 = arith.divf %41, %42 : vector<8x1xf32>
    %44 = vector.broadcast %43 : vector<8x1xf32> to vector<8x32xf32>
    %45 = arith.subf %4, %44 : vector<8x32xf32>
    %46 = arith.mulf %45, %45 : vector<8x32xf32>
    %cst_56 = arith.constant dense<0.000000e+00> : vector<8xf32>
    %47 = vector.multi_reduction <add>, %46, %cst_56 [1] : vector<8x32xf32> to vector<8xf32>
    %48 = vector.shape_cast %47 : vector<8xf32> to vector<8x1xf32>
    %cst_57 = arith.constant 3.200000e+01 : f32
    %49 = vector.broadcast %cst_57 : f32 to vector<8x1xf32>
    %50 = arith.divf %48, %49 : vector<8x1xf32>
    %51 = vector.broadcast %43 : vector<8x1xf32> to vector<8x32xf32>
    %52 = arith.subf %4, %51 : vector<8x32xf32>
    %cst_58 = arith.constant 9.99999974E-6 : f32
    %53 = vector.broadcast %cst_58 : f32 to vector<8x1xf32>
    %54 = arith.addf %50, %53 : vector<8x1xf32>
    %55 = math.rsqrt %54 : vector<8x1xf32>
    %56 = vector.broadcast %55 : vector<8x1xf32> to vector<8x32xf32>
    %57 = arith.mulf %52, %56 : vector<8x32xf32>
    %58 = vector.broadcast %7 : vector<1x32xf32> to vector<8x32xf32>
    %59 = arith.mulf %57, %58 : vector<8x32xf32>
    %60 = vector.broadcast %9 : vector<1x32xf32> to vector<8x32xf32>
    %61 = arith.addf %59, %60 : vector<8x32xf32>
    %cst_59 = arith.constant dense<0.000000e+00> : vector<8x96xf32>
    %62 = tpu.matmul %61, %11, %cst_59 {dimension_numbers = #tpu.dot_dimension_numbers<[1], [0], [0], [1], [0, 0, 1, 1], [], []>} : vector<8x32xf32>, vector<32x96xf32>, vector<8x96xf32> -> vector<8x96xf32>
    %63 = vector.extract_strided_slice %62 {offsets = [0, 0], sizes = [8, 32], strides = [1, 1]} : vector<8x96xf32> to vector<8x32xf32>
    %64 = vector.extract_strided_slice %62 {offsets = [0, 32], sizes = [8, 32], strides = [1, 1]} : vector<8x96xf32> to vector<8x32xf32>
    %65 = vector.extract_strided_slice %62 {offsets = [0, 64], sizes = [8, 32], strides = [1, 1]} : vector<8x96xf32> to vector<8x32xf32>
    %66 = vector.shape_cast %63 : vector<8x32xf32> to vector<1x8x2x16xf32>
    %67 = tpu.transpose %66, [0, 2, 1, 3] : vector<1x8x2x16xf32> -> vector<1x2x8x16xf32>
    %68 = vector.shape_cast %67 : vector<1x2x8x16xf32> to vector<2x8x16xf32>
    %69 = vector.shape_cast %64 : vector<8x32xf32> to vector<1x8x2x16xf32>
    %70 = tpu.transpose %69, [0, 2, 1, 3] : vector<1x8x2x16xf32> -> vector<1x2x8x16xf32>
    %71 = vector.shape_cast %70 : vector<1x2x8x16xf32> to vector<2x8x16xf32>
    %72 = vector.shape_cast %65 : vector<8x32xf32> to vector<1x8x2x16xf32>
    %73 = tpu.transpose %72, [0, 2, 1, 3] : vector<1x8x2x16xf32> -> vector<1x2x8x16xf32>
    %74 = vector.shape_cast %73 : vector<1x2x8x16xf32> to vector<2x8x16xf32>
    %cst_60 = arith.constant dense<0.000000e+00> : vector<2x8x8xf32>
    %75 = tpu.matmul %68, %71, %cst_60 {dimension_numbers = #tpu.dot_dimension_numbers<[2], [2], [1], [1], [0, 0, 0, 1, 1, 1], [0], [0]>} : vector<2x8x16xf32>, vector<2x8x16xf32>, vector<2x8x8xf32> -> vector<2x8x8xf32>
    %cst_61 = arith.constant 2.500000e-01 : f32
    %76 = vector.broadcast %cst_61 : f32 to vector<2x8x8xf32>
    %77 = arith.mulf %75, %76 : vector<2x8x8xf32>
    %cst_62 = arith.constant dense<0xFF800000> : vector<2x8xf32>
    %78 = vector.multi_reduction <maximumf>, %77, %cst_62 [2] : vector<2x8x8xf32> to vector<2x8xf32>
    %79 = vector.shape_cast %78 : vector<2x8xf32> to vector<2x8x1xf32>
    %80 = vector.broadcast %79 : vector<2x8x1xf32> to vector<2x8x8xf32>
    %81 = arith.subf %77, %80 : vector<2x8x8xf32>
    %82 = math.exp %81 : vector<2x8x8xf32>
    %cst_63 = arith.constant dense<0.000000e+00> : vector<2x8xf32>
    %83 = vector.multi_reduction <add>, %82, %cst_63 [2] : vector<2x8x8xf32> to vector<2x8xf32>
    %84 = vector.shape_cast %83 : vector<2x8xf32> to vector<2x8x1xf32>
    %85 = vector.broadcast %84 : vector<2x8x1xf32> to vector<2x8x8xf32>
    %86 = arith.divf %82, %85 : vector<2x8x8xf32>
    %cst_64 = arith.constant dense<0.000000e+00> : vector<2x8x16xf32>
    %87 = tpu.matmul %86, %74, %cst_64 {dimension_numbers = #tpu.dot_dimension_numbers<[2], [1], [1], [2], [0, 0, 0, 1, 1, 2], [0], [0]>} : vector<2x8x8xf32>, vector<2x8x16xf32>, vector<2x8x16xf32> -> vector<2x8x16xf32>
    %88 = vector.shape_cast %87 : vector<2x8x16xf32> to vector<1x2x8x16xf32>
    %89 = tpu.transpose %88, [0, 2, 1, 3] : vector<1x2x8x16xf32> -> vector<1x8x2x16xf32>
    %90 = vector.shape_cast %89 : vector<1x8x2x16xf32> to vector<8x32xf32>
    %cst_65 = arith.constant dense<0.000000e+00> : vector<8x32xf32>
    %91 = tpu.matmul %90, %13, %cst_65 {dimension_numbers = #tpu.dot_dimension_numbers<[1], [0], [0], [1], [0, 0, 1, 1], [], []>} : vector<8x32xf32>, vector<32x32xf32>, vector<8x32xf32> -> vector<8x32xf32>
    %92 = vector.broadcast %15 : vector<1x32xf32> to vector<8x32xf32>
    %93 = arith.addf %91, %92 : vector<8x32xf32>
    %94 = arith.addf %93, %4 : vector<8x32xf32>
    %cst_66 = arith.constant dense<0.000000e+00> : vector<8xf32>
    %95 = vector.multi_reduction <add>, %94, %cst_66 [1] : vector<8x32xf32> to vector<8xf32>
    %96 = vector.shape_cast %95 : vector<8xf32> to vector<8x1xf32>
    %cst_67 = arith.constant 3.200000e+01 : f32
    %97 = vector.broadcast %cst_67 : f32 to vector<8x1xf32>
    %98 = arith.divf %96, %97 : vector<8x1xf32>
    %99 = vector.broadcast %98 : vector<8x1xf32> to vector<8x32xf32>
    %100 = arith.subf %94, %99 : vector<8x32xf32>
    %101 = arith.mulf %100, %100 : vector<8x32xf32>
    %cst_68 = arith.constant dense<0.000000e+00> : vector<8xf32>
    %102 = vector.multi_reduction <add>, %101, %cst_68 [1] : vector<8x32xf32> to vector<8xf32>
    %103 = vector.shape_cast %102 : vector<8xf32> to vector<8x1xf32>
    %cst_69 = arith.constant 3.200000e+01 : f32
    %104 = vector.broadcast %cst_69 : f32 to vector<8x1xf32>
    %105 = arith.divf %103, %104 : vector<8x1xf32>
    %106 = vector.broadcast %98 : vector<8x1xf32> to vector<8x32xf32>
    %107 = arith.subf %94, %106 : vector<8x32xf32>
    %cst_70 = arith.constant 9.99999974E-6 : f32
    %108 = vector.broadcast %cst_70 : f32 to vector<8x1xf32>
    %109 = arith.addf %105, %108 : vector<8x1xf32>
    %110 = math.rsqrt %109 : vector<8x1xf32>
    %111 = vector.broadcast %110 : vector<8x1xf32> to vector<8x32xf32>
    %112 = arith.mulf %107, %111 : vector<8x32xf32>
    %113 = vector.broadcast %17 : vector<1x32xf32> to vector<8x32xf32>
    %114 = arith.mulf %112, %113 : vector<8x32xf32>
    %115 = vector.broadcast %19 : vector<1x32xf32> to vector<8x32xf32>
    %116 = arith.addf %114, %115 : vector<8x32xf32>
    %cst_71 = arith.constant dense<0.000000e+00> : vector<8x32xf32>
    %117 = tpu.matmul %116, %21, %cst_71 {dimension_numbers = #tpu.dot_dimension_numbers<[1], [0], [0], [1], [0, 0, 1, 1], [], []>} : vector<8x32xf32>, vector<32x32xf32>, vector<8x32xf32> -> vector<8x32xf32>
    %cst_72 = arith.constant dense<0.000000e+00> : vector<16x64xf32>
    %118 = tpu.matmul %5, %23, %cst_72 {dimension_numbers = #tpu.dot_dimension_numbers<[1], [0], [0], [1], [0, 0, 1, 1], [], []>} : vector<16x32xf32>, vector<32x64xf32>, vector<16x64xf32> -> vector<16x64xf32>
    %119 = vector.extract_strided_slice %118 {offsets = [0, 0], sizes = [16, 32], strides = [1, 1]} : vector<16x64xf32> to vector<16x32xf32>
    %120 = vector.extract_strided_slice %118 {offsets = [0, 32], sizes = [16, 32], strides = [1, 1]} : vector<16x64xf32> to vector<16x32xf32>
    %121 = vector.shape_cast %117 : vector<8x32xf32> to vector<1x8x2x16xf32>
    %122 = tpu.transpose %121, [0, 2, 1, 3] : vector<1x8x2x16xf32> -> vector<1x2x8x16xf32>
    %123 = vector.shape_cast %122 : vector<1x2x8x16xf32> to vector<2x8x16xf32>
    %124 = vector.shape_cast %119 : vector<16x32xf32> to vector<1x16x2x16xf32>
    %125 = tpu.transpose %124, [0, 2, 1, 3] : vector<1x16x2x16xf32> -> vector<1x2x16x16xf32>
    %126 = vector.shape_cast %125 : vector<1x2x16x16xf32> to vector<2x16x16xf32>
    %127 = vector.shape_cast %120 : vector<16x32xf32> to vector<1x16x2x16xf32>
    %128 = tpu.transpose %127, [0, 2, 1, 3] : vector<1x16x2x16xf32> -> vector<1x2x16x16xf32>
    %129 = vector.shape_cast %128 : vector<1x2x16x16xf32> to vector<2x16x16xf32>
    %cst_73 = arith.constant dense<0.000000e+00> : vector<2x8x16xf32>
    %130 = tpu.matmul %123, %126, %cst_73 {dimension_numbers = #tpu.dot_dimension_numbers<[2], [2], [1], [1], [0, 0, 0, 1, 1, 1], [0], [0]>} : vector<2x8x16xf32>, vector<2x16x16xf32>, vector<2x8x16xf32> -> vector<2x8x16xf32>
    %cst_74 = arith.constant 2.500000e-01 : f32
    %131 = vector.broadcast %cst_74 : f32 to vector<2x8x16xf32>
    %132 = arith.mulf %130, %131 : vector<2x8x16xf32>
    %cst_75 = arith.constant dense<0xFF800000> : vector<2x8xf32>
    %133 = vector.multi_reduction <maximumf>, %132, %cst_75 [2] : vector<2x8x16xf32> to vector<2x8xf32>
    %134 = vector.shape_cast %133 : vector<2x8xf32> to vector<2x8x1xf32>
    %135 = vector.broadcast %134 : vector<2x8x1xf32> to vector<2x8x16xf32>
    %136 = arith.subf %132, %135 : vector<2x8x16xf32>
    %137 = math.exp %136 : vector<2x8x16xf32>
    %cst_76 = arith.constant dense<0.000000e+00> : vector<2x8xf32>
    %138 = vector.multi_reduction <add>, %137, %cst_76 [2] : vector<2x8x16xf32> to vector<2x8xf32>
    %139 = vector.shape_cast %138 : vector<2x8xf32> to vector<2x8x1xf32>
    %140 = vector.broadcast %139 : vector<2x8x1xf32> to vector<2x8x16xf32>
    %141 = arith.divf %137, %140 : vector<2x8x16xf32>
    %cst_77 = arith.constant dense<0.000000e+00> : vector<2x8x16xf32>
    %142 = tpu.matmul %141, %129, %cst_77 {dimension_numbers = #tpu.dot_dimension_numbers<[2], [1], [1], [2], [0, 0, 0, 1, 1, 2], [0], [0]>} : vector<2x8x16xf32>, vector<2x16x16xf32>, vector<2x8x16xf32> -> vector<2x8x16xf32>
    %143 = vector.shape_cast %142 : vector<2x8x16xf32> to vector<1x2x8x16xf32>
    %144 = tpu.transpose %143, [0, 2, 1, 3] : vector<1x2x8x16xf32> -> vector<1x8x2x16xf32>
    %145 = vector.shape_cast %144 : vector<1x8x2x16xf32> to vector<8x32xf32>
    %cst_78 = arith.constant dense<0.000000e+00> : vector<8x32xf32>
    %146 = tpu.matmul %145, %25, %cst_78 {dimension_numbers = #tpu.dot_dimension_numbers<[1], [0], [0], [1], [0, 0, 1, 1], [], []>} : vector<8x32xf32>, vector<32x32xf32>, vector<8x32xf32> -> vector<8x32xf32>
    %147 = vector.broadcast %27 : vector<1x32xf32> to vector<8x32xf32>
    %148 = arith.addf %146, %147 : vector<8x32xf32>
    %149 = arith.addf %148, %116 : vector<8x32xf32>
    %cst_79 = arith.constant dense<0.000000e+00> : vector<8xf32>
    %150 = vector.multi_reduction <add>, %149, %cst_79 [1] : vector<8x32xf32> to vector<8xf32>
    %151 = vector.shape_cast %150 : vector<8xf32> to vector<8x1xf32>
    %cst_80 = arith.constant 3.200000e+01 : f32
    %152 = vector.broadcast %cst_80 : f32 to vector<8x1xf32>
    %153 = arith.divf %151, %152 : vector<8x1xf32>
    %154 = vector.broadcast %153 : vector<8x1xf32> to vector<8x32xf32>
    %155 = arith.subf %149, %154 : vector<8x32xf32>
    %156 = arith.mulf %155, %155 : vector<8x32xf32>
    %cst_81 = arith.constant dense<0.000000e+00> : vector<8xf32>
    %157 = vector.multi_reduction <add>, %156, %cst_81 [1] : vector<8x32xf32> to vector<8xf32>
    %158 = vector.shape_cast %157 : vector<8xf32> to vector<8x1xf32>
    %cst_82 = arith.constant 3.200000e+01 : f32
    %159 = vector.broadcast %cst_82 : f32 to vector<8x1xf32>
    %160 = arith.divf %158, %159 : vector<8x1xf32>
    %161 = vector.broadcast %153 : vector<8x1xf32> to vector<8x32xf32>
    %162 = arith.subf %149, %161 : vector<8x32xf32>
    %cst_83 = arith.constant 9.99999974E-6 : f32
    %163 = vector.broadcast %cst_83 : f32 to vector<8x1xf32>
    %164 = arith.addf %160, %163 : vector<8x1xf32>
    %165 = math.rsqrt %164 : vector<8x1xf32>
    %166 = vector.broadcast %165 : vector<8x1xf32> to vector<8x32xf32>
    %167 = arith.mulf %162, %166 : vector<8x32xf32>
    %168 = vector.broadcast %29 : vector<1x32xf32> to vector<8x32xf32>
    %169 = arith.mulf %167, %168 : vector<8x32xf32>
    %170 = vector.broadcast %31 : vector<1x32xf32> to vector<8x32xf32>
    %171 = arith.addf %169, %170 : vector<8x32xf32>
    %cst_84 = arith.constant dense<0.000000e+00> : vector<8x64xf32>
    %172 = tpu.matmul %171, %33, %cst_84 {dimension_numbers = #tpu.dot_dimension_numbers<[1], [0], [0], [1], [0, 0, 1, 1], [], []>} : vector<8x32xf32>, vector<32x64xf32>, vector<8x64xf32> -> vector<8x64xf32>
    %173 = vector.broadcast %35 : vector<1x64xf32> to vector<8x64xf32>
    %174 = arith.addf %172, %173 : vector<8x64xf32>
    %175 = math.tanh %174 : vector<8x64xf32>
    %cst_85 = arith.constant dense<0.000000e+00> : vector<8x32xf32>
    %176 = tpu.matmul %175, %37, %cst_85 {dimension_numbers = #tpu.dot_dimension_numbers<[1], [0], [0], [1], [0, 0, 1, 1], [], []>} : vector<8x64xf32>, vector<64x32xf32>, vector<8x32xf32> -> vector<8x32xf32>
    %177 = vector.broadcast %39 : vector<1x32xf32> to vector<8x32xf32>
    %178 = arith.addf %176, %177 : vector<8x32xf32>
    %179 = arith.addf %178, %149 : vector<8x32xf32>
    %true = arith.constant true
    %180 = arith.xori %0, %true : i1
    %181 = arith.extui %180 : i1 to i32
    %c0_i32_86 = arith.constant 0 : i32
    %182 = arith.cmpi ne, %181, %c0_i32_86 : i32
    scf.if %182 {
      %c0_88 = arith.constant 0 : index
      %c0_89 = arith.constant 0 : index
      %185 = vector.load %arg23[%c0_88, %c0_89] : memref<8x32xf32, #tpu.memory_space<vmem>>, vector<8x32xf32>
      tpu.vector_store %arg23[%c0_88, %c0_89], %179 {strides = array<i32>} : memref<8x32xf32, #tpu.memory_space<vmem>>, vector<8x32xf32>,
    } else {
    }
    %183 = arith.extui %0 : i1 to i32
    %c0_i32_87 = arith.constant 0 : i32
    %184 = arith.cmpi ne, %183, %c0_i32_87 : i32
    scf.if %184 {
      %c0_88 = arith.constant 0 : index
      %c0_89 = arith.constant 0 : index
      %185 = vector.load %arg21[%c0_88, %c0_89] : memref<1x32xf32, #tpu.memory_space<vmem>>, vector<1x32xf32>
      %c0_90 = arith.constant 0 : index
      %c0_91 = arith.constant 0 : index
      %186 = vector.load %arg22[%c0_90, %c0_91] : memref<1x32xf32, #tpu.memory_space<vmem>>, vector<1x32xf32>
      %cst_92 = arith.constant dense<0.000000e+00> : vector<8xf32>
      %187 = vector.multi_reduction <add>, %179, %cst_92 [1] : vector<8x32xf32> to vector<8xf32>
      %188 = vector.shape_cast %187 : vector<8xf32> to vector<8x1xf32>
      %cst_93 = arith.constant 3.200000e+01 : f32
      %189 = vector.broadcast %cst_93 : f32 to vector<8x1xf32>
      %190 = arith.divf %188, %189 : vector<8x1xf32>
      %191 = vector.broadcast %190 : vector<8x1xf32> to vector<8x32xf32>
      %192 = arith.subf %179, %191 : vector<8x32xf32>
      %193 = arith.mulf %192, %192 : vector<8x32xf32>
      %cst_94 = arith.constant dense<0.000000e+00> : vector<8xf32>
      %194 = vector.multi_reduction <add>, %193, %cst_94 [1] : vector<8x32xf32> to vector<8xf32>
      %195 = vector.shape_cast %194 : vector<8xf32> to vector<8x1xf32>
      %cst_95 = arith.constant 3.200000e+01 : f32
      %196 = vector.broadcast %cst_95 : f32 to vector<8x1xf32>
      %197 = arith.divf %195, %196 : vector<8x1xf32>
      %198 = vector.broadcast %190 : vector<8x1xf32> to vector<8x32xf32>
      %199 = arith.subf %179, %198 : vector<8x32xf32>
      %cst_96 = arith.constant 9.99999974E-6 : f32
      %200 = vector.broadcast %cst_96 : f32 to vector<8x1xf32>
      %201 = arith.addf %197, %200 : vector<8x1xf32>
      %202 = math.rsqrt %201 : vector<8x1xf32>
      %203 = vector.broadcast %202 : vector<8x1xf32> to vector<8x32xf32>
      %204 = arith.mulf %199, %203 : vector<8x32xf32>
      %205 = vector.broadcast %185 : vector<1x32xf32> to vector<8x32xf32>
      %206 = arith.mulf %204, %205 : vector<8x32xf32>
      %207 = vector.broadcast %186 : vector<1x32xf32> to vector<8x32xf32>
      %208 = arith.addf %206, %207 : vector<8x32xf32>
      %c0_97 = arith.constant 0 : index
      %c0_98 = arith.constant 0 : index
      %209 = vector.load %arg23[%c0_97, %c0_98] : memref<8x32xf32, #tpu.memory_space<vmem>>, vector<8x32xf32>
      tpu.vector_store %arg23[%c0_97, %c0_98], %208 {strides = array<i32>} : memref<8x32xf32, #tpu.memory_space<vmem>>, vector<8x32xf32>,
    } else {
    }
    return
  }
  func.func @transform_0(%arg0: i32, %arg1: i32) -> (i32, i32) {
    %c0_i32 = arith.constant 0 : i32
    %c0_i32_0 = arith.constant 0 : i32
    return %arg0, %c0_i32 : i32, i32
  }
  func.func @transform_1(%arg0: i32, %arg1: i32) -> (i32, i32) {
    %c0_i32 = arith.constant 0 : i32
    %c0_i32_0 = arith.constant 0 : i32
    return %arg0, %c0_i32 : i32, i32
  }
  func.func @transform_2(%arg0: i32, %arg1: i32) -> (i32, i32, i32) {
    %c0_i32 = arith.constant 0 : i32
    %c0_i32_0 = arith.constant 0 : i32
    %c0_i32_1 = arith.constant 0 : i32
    return %arg1, %c0_i32, %c0_i32_0 : i32, i32, i32
  }
  func.func @transform_3(%arg0: i32, %arg1: i32) -> (i32, i32, i32) {
    %c0_i32 = arith.constant 0 : i32
    %c0_i32_0 = arith.constant 0 : i32
    %c0_i32_1 = arith.constant 0 : i32
    return %arg1, %c0_i32, %c0_i32_0 : i32, i32, i32
  }
  func.func @transform_4(%arg0: i32, %arg1: i32) -> (i32, i32, i32) {
    %c0_i32 = arith.constant 0 : i32
    %c0_i32_0 = arith.constant 0 : i32
    %c0_i32_1 = arith.constant 0 : i32
    return %arg1, %c0_i32, %c0_i32_0 : i32, i32, i32
  }
  func.func @transform_5(%arg0: i32, %arg1: i32) -> (i32, i32, i32) {
    %c0_i32 = arith.constant 0 : i32
    %c0_i32_0 = arith.constant 0 : i32
    %c0_i32_1 = arith.constant 0 : i32
    return %arg1, %c0_i32, %c0_i32_0 : i32, i32, i32
  }
  func.func @transform_6(%arg0: i32, %arg1: i32) -> (i32, i32, i32) {
    %c0_i32 = arith.constant 0 : i32
    %c0_i32_0 = arith.constant 0 : i32
    %c0_i32_1 = arith.constant 0 : i32
    return %arg1, %c0_i32, %c0_i32_0 : i32, i32, i32
  }
  func.func @transform_7(%arg0: i32, %arg1: i32) -> (i32, i32, i32) {
    %c0_i32 = arith.constant 0 : i32
    %c0_i32_0 = arith.constant 0 : i32
    %c0_i32_1 = arith.constant 0 : i32
    return %arg1, %c0_i32, %c0_i32_0 : i32, i32, i32
  }
  func.func @transform_8(%arg0: i32, %arg1: i32) -> (i32, i32, i32) {
    %c0_i32 = arith.constant 0 : i32
    %c0_i32_0 = arith.constant 0 : i32
    %c0_i32_1 = arith.constant 0 : i32
    return %arg1, %c0_i32, %c0_i32_0 : i32, i32, i32
  }
  func.func @transform_9(%arg0: i32, %arg1: i32) -> (i32, i32, i32) {
    %c0_i32 = arith.constant 0 : i32
    %c0_i32_0 = arith.constant 0 : i32
    %c0_i32_1 = arith.constant 0 : i32
    return %arg1, %c0_i32, %c0_i32_0 : i32, i32, i32
  }
  func.func @transform_10(%arg0: i32, %arg1: i32) -> (i32, i32, i32) {
    %c0_i32 = arith.constant 0 : i32
    %c0_i32_0 = arith.constant 0 : i32
    %c0_i32_1 = arith.constant 0 : i32
    return %arg1, %c0_i32, %c0_i32_0 : i32, i32, i32
  }
  func.func @transform_11(%arg0: i32, %arg1: i32) -> (i32, i32, i32) {
    %c0_i32 = arith.constant 0 : i32
    %c0_i32_0 = arith.constant 0 : i32
    %c0_i32_1 = arith.constant 0 : i32
    return %arg1, %c0_i32, %c0_i32_0 : i32, i32, i32
  }
  func.func @transform_12(%arg0: i32, %arg1: i32) -> (i32, i32, i32) {
    %c0_i32 = arith.constant 0 : i32
    %c0_i32_0 = arith.constant 0 : i32
    %c0_i32_1 = arith.constant 0 : i32
    return %arg1, %c0_i32, %c0_i32_0 : i32, i32, i32
  }
  func.func @transform_13(%arg0: i32, %arg1: i32) -> (i32, i32, i32) {
    %c0_i32 = arith.constant 0 : i32
    %c0_i32_0 = arith.constant 0 : i32
    %c0_i32_1 = arith.constant 0 : i32
    return %arg1, %c0_i32, %c0_i32_0 : i32, i32, i32
  }
  func.func @transform_14(%arg0: i32, %arg1: i32) -> (i32, i32, i32) {
    %c0_i32 = arith.constant 0 : i32
    %c0_i32_0 = arith.constant 0 : i32
    %c0_i32_1 = arith.constant 0 : i32
    return %arg1, %c0_i32, %c0_i32_0 : i32, i32, i32
  }
  func.func @transform_15(%arg0: i32, %arg1: i32) -> (i32, i32, i32) {
    %c0_i32 = arith.constant 0 : i32
    %c0_i32_0 = arith.constant 0 : i32
    %c0_i32_1 = arith.constant 0 : i32
    return %arg1, %c0_i32, %c0_i32_0 : i32, i32, i32
  }
  func.func @transform_16(%arg0: i32, %arg1: i32) -> (i32, i32, i32) {
    %c0_i32 = arith.constant 0 : i32
    %c0_i32_0 = arith.constant 0 : i32
    %c0_i32_1 = arith.constant 0 : i32
    return %arg1, %c0_i32, %c0_i32_0 : i32, i32, i32
  }
  func.func @transform_17(%arg0: i32, %arg1: i32) -> (i32, i32, i32) {
    %c0_i32 = arith.constant 0 : i32
    %c0_i32_0 = arith.constant 0 : i32
    %c0_i32_1 = arith.constant 0 : i32
    return %arg1, %c0_i32, %c0_i32_0 : i32, i32, i32
  }
  func.func @transform_18(%arg0: i32, %arg1: i32) -> (i32, i32, i32) {
    %c0_i32 = arith.constant 0 : i32
    %c0_i32_0 = arith.constant 0 : i32
    %c0_i32_1 = arith.constant 0 : i32
    return %arg1, %c0_i32, %c0_i32_0 : i32, i32, i32
  }
  func.func @transform_19(%arg0: i32, %arg1: i32) -> (i32, i32) {
    %c0_i32 = arith.constant 0 : i32
    %c0_i32_0 = arith.constant 0 : i32
    %c0_i32_1 = arith.constant 0 : i32
    return %c0_i32, %c0_i32_0 : i32, i32
  }
  func.func @transform_20(%arg0: i32, %arg1: i32) -> (i32, i32) {
    %c0_i32 = arith.constant 0 : i32
    %c0_i32_0 = arith.constant 0 : i32
    %c0_i32_1 = arith.constant 0 : i32
    return %c0_i32, %c0_i32_0 : i32, i32
  }
  func.func @transform_21(%arg0: i32, %arg1: i32) -> (i32, i32) {
    %c0_i32 = arith.constant 0 : i32
    %c0_i32_0 = arith.constant 0 : i32
    return %arg0, %c0_i32 : i32, i32
  }
}

</mosaic_0001>

<llo_original>
// kernel: tpu_custom_call.1
$region0: #{tpu_custom_call.1}
  #allocation0 [shape = 'u32[]', space=smem, size = 0x4, offset = 0x4, fixed_abs, tag = 'smem constant byte address 0x4 - core index']
  #allocation1 [shape = 'u32[144,128]{1,0:T(1,128)}', space=vmem, size = 0x12000, scoped, tag = 'internal scratch']
  %s0 = inlined_call_operand.hbm [shape: f32[32,32], index: 0, kind: input, shape index: {}]
  %s1 = inlined_call_operand.hbm [shape: f32[16,32], index: 1, kind: input, shape index: {}]
  %s2 = inlined_call_operand.hbm [shape: f32[2,1,32], index: 2, kind: input, shape index: {}]
  %s3 = inlined_call_operand.hbm [shape: f32[2,1,32], index: 3, kind: input, shape index: {}]
  %s4 = inlined_call_operand.vmem [shape: f32[2,32,96], index: 4, kind: input, shape index: {}]
  %s5 = inlined_call_operand.vmem [shape: f32[2,32,32], index: 5, kind: input, shape index: {}]
  %s6 = inlined_call_operand.hbm [shape: f32[2,1,32], index: 6, kind: input, shape index: {}]
  %s7 = inlined_call_operand.hbm [shape: f32[2,1,32], index: 7, kind: input, shape index: {}]
  %s8 = inlined_call_operand.hbm [shape: f32[2,1,32], index: 8, kind: input, shape index: {}]
  %s9 = inlined_call_operand.vmem [shape: f32[2,32,32], index: 9, kind: input, shape index: {}]
  %s10 = inlined_call_operand.hbm [shape: f32[2,32,64], index: 10, kind: input, shape index: {}]
  %s11 = inlined_call_operand.hbm [shape: f32[2,32,32], index: 11, kind: input, shape index: {}]
  %s12 = inlined_call_operand.hbm [shape: f32[2,1,32], index: 12, kind: input, shape index: {}]
  %s13 = inlined_call_operand.hbm [shape: f32[2,1,32], index: 13, kind: input, shape index: {}]
  %s14 = inlined_call_operand.hbm [shape: f32[2,1,32], index: 14, kind: input, shape index: {}]
  %s15 = inlined_call_operand.hbm [shape: f32[2,32,64], index: 15, kind: input, shape index: {}]
  %s16 = inlined_call_operand.hbm [shape: f32[2,1,64], index: 16, kind: input, shape index: {}]
  %s17 = inlined_call_operand.vmem [shape: f32[2,64,32], index: 17, kind: input, shape index: {}]
  %s18 = inlined_call_operand.vmem [shape: f32[2,1,32], index: 18, kind: input, shape index: {}]
  %s19 = inlined_call_operand.vmem [shape: f32[1,32], index: 19, kind: input, shape index: {}]
  %s20 = inlined_call_operand.vmem [shape: f32[1,32], index: 20, kind: input, shape index: {}]
  %s21 = inlined_call_operand.hbm [shape: f32[16,32], index: 21, kind: output, shape index: {}]
  %s22 = sld [smem:[#allocation0]]
  $region185: #{tpu_custom_call.1} parent=0
    _
  %s24 = ssub.s32 1, %s22
  %s25 = scalar_select 0, %s24, %s22
  $region1: #{tpu_custom_call.1} parent=0
    #allocation2 [shape = 'u8[16384]{0}', space=vmem, size = 0x4000, scoped, tag = 'input window, operand 0']
    #allocation3 [shape = 's32[2]{0}', space=sflag, size = 0x8, scoped, tag = 'scoped memory for tpu_custom_call.1']
    #allocation4 [shape = 's32[2]{0}', space=sflag, size = 0x8, scoped, tag = 'scoped memory for tpu_custom_call.1']
    #allocation5 [shape = 'u8[8192]{0}', space=vmem, size = 0x2000, scoped, tag = 'input window, operand 1']
    #allocation6 [shape = 's32[2]{0}', space=sflag, size = 0x8, scoped, tag = 'scoped memory for tpu_custom_call.1']
    #allocation7 [shape = 'u8[1024]{0}', space=vmem, size = 0x400, scoped, tag = 'input window, operand 2']
    #allocation8 [shape = 'u8[1024]{0}', space=vmem, size = 0x400, scoped, tag = 'input window, operand 3']
    #allocation9 [shape = 's32[2]{0}', space=sflag, size = 0x8, scoped, tag = 'scoped memory for tpu_custom_call.1']
    #allocation10 [shape = 'u8[1024]{0}', space=vmem, size = 0x400, scoped, tag = 'input window, operand 6']
    #allocation11 [shape = 'u8[1024]{0}', space=vmem, size = 0x400, scoped, tag = 'input window, operand 7']
    #allocation12 [shape = 's32[2]{0}', space=sflag, size = 0x8, scoped, tag = 'scoped memory for tpu_custom_call.1']
    #allocation13 [shape = 'u8[1024]{0}', space=vmem, size = 0x400, scoped, tag = 'input window, operand 8']
    #allocation14 [shape = 'u8[32768]{0}', space=vmem, size = 0x8000, scoped, tag = 'input window, operand 10']
    #allocation15 [shape = 's32[2]{0}', space=sflag, size = 0x8, scoped, tag = 'scoped memory for tpu_custom_call.1']
    #allocation16 [shape = 'u8[32768]{0}', space=vmem, size = 0x8000, scoped, tag = 'input window, operand 11']
    #allocation17 [shape = 'u8[1024]{0}', space=vmem, size = 0x400, scoped, tag = 'input window, operand 12']
    #allocation18 [shape = 's32[2]{0}', space=sflag, size = 0x8, scoped, tag = 'scoped memory for tpu_custom_call.1']
    #allocation19 [shape = 'u8[1024]{0}', space=vmem, size = 0x400, scoped, tag = 'input window, operand 13']
    #allocation20 [shape = 'u8[1024]{0}', space=vmem, size = 0x400, scoped, tag = 'input window, operand 14']
    #allocation21 [shape = 's32[2]{0}', space=sflag, size = 0x8, scoped, tag = 'scoped memory for tpu_custom_call.1']
    #allocation22 [shape = 'u8[32768]{0}', space=vmem, size = 0x8000, scoped, tag = 'input window, operand 15']
    #allocation23 [shape = 'u8[1024]{0}', space=vmem, size = 0x400, scoped, tag = 'input window, operand 16']
    #allocation24 [shape = 's32[2]{0}', space=sflag, size = 0x8, scoped, tag = 'scoped memory for tpu_custom_call.1']
    #allocation25 [shape = 'u8[8192]{0}', space=vmem, size = 0x2000, scoped, tag = 'output window, operand 0']
    %26 = vsyncpa [#allocation3], 0
    %s27 = scalar_lea.sflag [#allocation3], 1
    %28 = vsyncpa %s27, 0
    %29 = vsyncpa [#allocation6], 0
    %s30 = scalar_lea.sflag [#allocation6], 1
    %31 = vsyncpa %s30, 0
    %32 = vsyncpa [#allocation9], 0
    %s33 = scalar_lea.sflag [#allocation9], 1
    %34 = vsyncpa %s33, 0
    %35 = vsyncpa [#allocation12], 0
    %s36 = scalar_lea.sflag [#allocation12], 1
    %37 = vsyncpa %s36, 0
    %38 = vsyncpa [#allocation15], 0
    %s39 = scalar_lea.sflag [#allocation15], 1
    %40 = vsyncpa %s39, 0
    %41 = vsyncpa [#allocation18], 0
    %s42 = scalar_lea.sflag [#allocation18], 1
    %43 = vsyncpa %s42, 0
    %44 = vsyncpa [#allocation21], 0
    %s45 = scalar_lea.sflag [#allocation21], 1
    %46 = vsyncpa %s45, 0
    %47 = vsyncpa [#allocation24], 0
    %s48 = scalar_lea.sflag [#allocation24], 1
    %49 = vsyncpa %s48, 0
    %50 = vsyncpa [#allocation4], 0
    %s51 = scalar_lea.sflag [#allocation4], 1
    %52 = vsyncpa %s51, 0
    loop: start=0, step=1, limit=6
    $region2: #{tpu_custom_call.1} parent=1 // loop_pre_header
      _
    $region3: #{tpu_custom_call.1} parent=1 // loop_header
      %s54 = sphi 0, %s58
      %p55 = scmp.ge.s32.totalorder %s54, 6
      %s61 = sphi 0, %s73
      %s62 = sphi 0, %s69
      %s63 = sphi 0, %s61
      %s64 = sphi 0, %s62
      %s65 = sphi 0, %s63
      %s66 = sphi 0, %s64
      %s76 = sphi 0, %s78
      %s79 = sphi 0, %s76
      %s80 = sphi 0, %s79
      %s96 = sphi 0, %s80
      %s102 = sphi 0, %s104
      %s105 = sphi 0, %s102
      %s106 = sphi 0, %s105
      %s122 = sphi 0, %s106
      %s128 = sphi 0, %s130
      %s131 = sphi 0, %s128
      %s132 = sphi 0, %s131
      %s148 = sphi 0, %s132
      %s154 = sphi 0, %s156
      %s157 = sphi 0, %s154
      %s158 = sphi 0, %s157
      %s174 = sphi 0, %s158
      %s180 = sphi 0, %s182
      %s183 = sphi 0, %s180
      %s184 = sphi 0, %s183
      %s200 = sphi 0, %s184
      %s206 = sphi 0, %s208
      %s209 = sphi 0, %s206
      %s210 = sphi 0, %s209
      %s226 = sphi 0, %s210
      %s232 = sphi 0, %s234
      %s235 = sphi 0, %s232
      %s236 = sphi 0, %s235
      %s252 = sphi 0, %s236
      %s258 = sphi 0, %s260
      %s261 = sphi 0, %s258
      %s262 = sphi 0, %s261
      %s278 = sphi 0, %s262
      %s284 = sphi 0, %s286
      %s287 = sphi 0, %s284
      %s288 = sphi 0, %s287
      %s304 = sphi 0, %s288
      %s310 = sphi 0, %s312
      %s313 = sphi 0, %s310
      %s314 = sphi 0, %s313
      %s330 = sphi 0, %s314
      %s336 = sphi 0, %s338
      %s339 = sphi 0, %s336
      %s340 = sphi 0, %s339
      %s356 = sphi 0, %s340
      %s362 = sphi 0, %s364
      %s365 = sphi 0, %s362
      %s366 = sphi 0, %s365
      %s382 = sphi 0, %s366
      %s388 = sphi 0, %s390
      %s391 = sphi 0, %s388
      %s392 = sphi 0, %s391
      %s408 = sphi 0, %s392
      %s414 = sphi 0, %s416
      %s417 = sphi 0, %s414
      %s418 = sphi 0, %s417
      %s434 = sphi 0, %s418
      %s440 = sphi 0, %s442
      %s443 = sphi 0, %s440
      %s444 = sphi 0, %s443
      %s460 = sphi 0, %s444
      %s466 = sphi 0, %s468
      %s469 = sphi 0, %s466
      %s470 = sphi 0, %s469
      %s486 = sphi 0, %s470
      %s492 = sphi 0, %s494
      %s495 = sphi 0, %s492
      %s496 = sphi 0, %s495
      %s512 = sphi 0, %s496
      %s518 = sphi 0, %s520
      %s521 = sphi 0, %s518
      %s522 = sphi 0, %s521
      %s538 = sphi 0, %s522
      %s544 = sphi 0, %s546
      %s547 = sphi 0, %s544
      %s548 = sphi 0, %s547
      %s564 = sphi 0, %s548
      %s568 = sphi 0, %s568
      %s570 = sphi 0, %s568
      %s571 = sphi 0, %s570
      %s585 = sphi 0, %s571
      %s589 = sphi 0, %s589
      %s591 = sphi 0, %s589
      %s592 = sphi 0, %s591
      %s606 = sphi 0, %s592
      %s612 = sphi 0, %s614
      %s615 = sphi 0, %s612
      %s616 = sphi 0, %s615
      %s632 = sphi 0, %s616
    $region4: #{tpu_custom_call.1} parent=1 // loop_header_branch
      %57 = sbr.rel (%p55) target = $region8
    $region5: #{tpu_custom_call.1} parent=1 // loop_body
      %s59 = ssub.s32 %s54, 1
      %s60 = ssub.s32 %s54, 2
      %s67 = sadd.s32 1, %s62
      %p68 = scmp.ge.s32.totalorder %s67, 2
      %s69 = scalar_select %p68, 0, %s67
      %s70 = sadd.s32 1, %s61
      %s71 = scalar_select %p68, %s70, %s61
      %p72 = scmp.ge.s32.totalorder %s71, 2
      %s73 = scalar_select %p72, 0, %s71
      %s74 = ssub.s32 %s61, %s73
      %p75 = scmp.eq.s32.totalorder %s74, 0
      %s77 = sadd.s32 %s76, 1
      %s78 = scalar_select %p75, %s76, %s77
      %p81 = pneg %p75
      %p82 = scmp.eq.s32.totalorder %s54, 3
      %p83 = por %p81, %p82
      %p84 = scmp.ne.s32.totalorder %s76, %s79
      %p85 = scmp.eq.s32.totalorder %s54, 0
      %p86 = por %p84, %p85
      %p87 = scmp.ne.s32.totalorder %s76, %s79
      %p88 = scmp.eq.s32.totalorder %s59, 3
      %p89 = por %p87, %p88
      %p90 = scmp.ne.s32.totalorder %s79, %s80
      %p91 = scmp.eq.s32.totalorder %s59, 0
      %p92 = por %p90, %p91
      %p93 = scmp.ne.s32.totalorder %s79, %s80
      %p94 = scmp.eq.s32.totalorder %s60, 3
      %p95 = por %p93, %p94
      %p97 = scmp.ne.s32.totalorder %s80, %s96
      %p98 = scmp.eq.s32.totalorder %s60, 0
      %p99 = por %p97, %p98
      %s100 = ssub.s32 %s61, %s73
      %p101 = scmp.eq.s32.totalorder %s100, 0
      %s103 = sadd.s32 %s102, 1
      %s104 = scalar_select %p101, %s102, %s103
      %p107 = pneg %p101
      %p108 = scmp.eq.s32.totalorder %s54, 3
      %p109 = por %p107, %p108
      %p110 = scmp.ne.s32.totalorder %s102, %s105
      %p111 = scmp.eq.s32.totalorder %s54, 0
      %p112 = por %p110, %p111
      %p113 = scmp.ne.s32.totalorder %s102, %s105
      %p114 = scmp.eq.s32.totalorder %s59, 3
      %p115 = por %p113, %p114
      %p116 = scmp.ne.s32.totalorder %s105, %s106
      %p117 = scmp.eq.s32.totalorder %s59, 0
      %p118 = por %p116, %p117
      %p119 = scmp.ne.s32.totalorder %s105, %s106
      %p120 = scmp.eq.s32.totalorder %s60, 3
      %p121 = por %p119, %p120
      %p123 = scmp.ne.s32.totalorder %s106, %s122
      %p124 = scmp.eq.s32.totalorder %s60, 0
      %p125 = por %p123, %p124
      %s126 = ssub.s32 %s62, %s69
      %p127 = scmp.eq.s32.totalorder %s126, 0
      %s129 = sadd.s32 %s128, 1
      %s130 = scalar_select %p127, %s128, %s129
      %p133 = pneg %p127
      %p134 = scmp.eq.s32.totalorder %s54, 3
      %p135 = por %p133, %p134
      %p136 = scmp.ne.s32.totalorder %s128, %s131
      %p137 = scmp.eq.s32.totalorder %s54, 0
      %p138 = por %p136, %p137
      %p139 = scmp.ne.s32.totalorder %s128, %s131
      %p140 = scmp.eq.s32.totalorder %s59, 3
      %p141 = por %p139, %p140
      %p142 = scmp.ne.s32.totalorder %s131, %s132
      %p143 = scmp.eq.s32.totalorder %s59, 0
      %p144 = por %p142, %p143
      %p145 = scmp.ne.s32.totalorder %s131, %s132
      %p146 = scmp.eq.s32.totalorder %s60, 3
      %p147 = por %p145, %p146
      %p149 = scmp.ne.s32.totalorder %s132, %s148
      %p150 = scmp.eq.s32.totalorder %s60, 0
      %p151 = por %p149, %p150
      %s152 = ssub.s32 %s62, %s69
      %p153 = scmp.eq.s32.totalorder %s152, 0
      %s155 = sadd.s32 %s154, 1
      %s156 = scalar_select %p153, %s154, %s155
      %p159 = pneg %p153
      %p160 = scmp.eq.s32.totalorder %s54, 3
      %p161 = por %p159, %p160
      %p162 = scmp.ne.s32.totalorder %s154, %s157
      %p163 = scmp.eq.s32.totalorder %s54, 0
      %p164 = por %p162, %p163
      %p165 = scmp.ne.s32.totalorder %s154, %s157
      %p166 = scmp.eq.s32.totalorder %s59, 3
      %p167 = por %p165, %p166
      %p168 = scmp.ne.s32.totalorder %s157, %s158
      %p169 = scmp.eq.s32.totalorder %s59, 0
      %p170 = por %p168, %p169
      %p171 = scmp.ne.s32.totalorder %s157, %s158
      %p172 = scmp.eq.s32.totalorder %s60, 3
      %p173 = por %p171, %p172
      %p175 = scmp.ne.s32.totalorder %s158, %s174
      %p176 = scmp.eq.s32.totalorder %s60, 0
      %p177 = por %p175, %p176
      %s178 = ssub.s32 %s62, %s69
      %p179 = scmp.eq.s32.totalorder %s178, 0
      %s181 = sadd.s32 %s180, 1
      %s182 = scalar_select %p179, %s180, %s181
      %p185 = pneg %p179
      %p186 = scmp.eq.s32.totalorder %s54, 3
      %p187 = por %p185, %p186
      %p188 = scmp.ne.s32.totalorder %s180, %s183
      %p189 = scmp.eq.s32.totalorder %s54, 0
      %p190 = por %p188, %p189
      %p191 = scmp.ne.s32.totalorder %s180, %s183
      %p192 = scmp.eq.s32.totalorder %s59, 3
      %p193 = por %p191, %p192
      %p194 = scmp.ne.s32.totalorder %s183, %s184
      %p195 = scmp.eq.s32.totalorder %s59, 0
      %p196 = por %p194, %p195
      %p197 = scmp.ne.s32.totalorder %s183, %s184
      %p198 = scmp.eq.s32.totalorder %s60, 3
      %p199 = por %p197, %p198
      %p201 = scmp.ne.s32.totalorder %s184, %s200
      %p202 = scmp.eq.s32.totalorder %s60, 0
      %p203 = por %p201, %p202
      %s204 = ssub.s32 %s62, %s69
      %p205 = scmp.eq.s32.totalorder %s204, 0
      %s207 = sadd.s32 %s206, 1
      %s208 = scalar_select %p205, %s206, %s207
      %p211 = pneg %p205
      %p212 = scmp.eq.s32.totalorder %s54, 3
      %p213 = por %p211, %p212
      %p214 = scmp.ne.s32.totalorder %s206, %s209
      %p215 = scmp.eq.s32.totalorder %s54, 0
      %p216 = por %p214, %p215
      %p217 = scmp.ne.s32.totalorder %s206, %s209
      %p218 = scmp.eq.s32.totalorder %s59, 3
      %p219 = por %p217, %p218
      %p220 = scmp.ne.s32.totalorder %s209, %s210
      %p221 = scmp.eq.s32.totalorder %s59, 0
      %p222 = por %p220, %p221
      %p223 = scmp.ne.s32.totalorder %s209, %s210
      %p224 = scmp.eq.s32.totalorder %s60, 3
      %p225 = por %p223, %p224
      %p227 = scmp.ne.s32.totalorder %s210, %s226
      %p228 = scmp.eq.s32.totalorder %s60, 0
      %p229 = por %p227, %p228
      %s230 = ssub.s32 %s62, %s69
      %p231 = scmp.eq.s32.totalorder %s230, 0
      %s233 = sadd.s32 %s232, 1
      %s234 = scalar_select %p231, %s232, %s233
      %p237 = pneg %p231
      %p238 = scmp.eq.s32.totalorder %s54, 3
      %p239 = por %p237, %p238
      %p240 = scmp.ne.s32.totalorder %s232, %s235
      %p241 = scmp.eq.s32.totalorder %s54, 0
      %p242 = por %p240, %p241
      %p243 = scmp.ne.s32.totalorder %s232, %s235
      %p244 = scmp.eq.s32.totalorder %s59, 3
      %p245 = por %p243, %p244
      %p246 = scmp.ne.s32.totalorder %s235, %s236
      %p247 = scmp.eq.s32.totalorder %s59, 0
      %p248 = por %p246, %p247
      %p249 = scmp.ne.s32.totalorder %s235, %s236
      %p250 = scmp.eq.s32.totalorder %s60, 3
      %p251 = por %p249, %p250
      %p253 = scmp.ne.s32.totalorder %s236, %s252
      %p254 = scmp.eq.s32.totalorder %s60, 0
      %p255 = por %p253, %p254
      %s256 = ssub.s32 %s62, %s69
      %p257 = scmp.eq.s32.totalorder %s256, 0
      %s259 = sadd.s32 %s258, 1
      %s260 = scalar_select %p257, %s258, %s259
      %p263 = pneg %p257
      %p264 = scmp.eq.s32.totalorder %s54, 3
      %p265 = por %p263, %p264
      %p266 = scmp.ne.s32.totalorder %s258, %s261
      %p267 = scmp.eq.s32.totalorder %s54, 0
      %p268 = por %p266, %p267
      %p269 = scmp.ne.s32.totalorder %s258, %s261
      %p270 = scmp.eq.s32.totalorder %s59, 3
      %p271 = por %p269, %p270
      %p272 = scmp.ne.s32.totalorder %s261, %s262
      %p273 = scmp.eq.s32.totalorder %s59, 0
      %p274 = por %p272, %p273
      %p275 = scmp.ne.s32.totalorder %s261, %s262
      %p276 = scmp.eq.s32.totalorder %s60, 3
      %p277 = por %p275, %p276
      %p279 = scmp.ne.s32.totalorder %s262, %s278
      %p280 = scmp.eq.s32.totalorder %s60, 0
      %p281 = por %p279, %p280
      %s282 = ssub.s32 %s62, %s69
      %p283 = scmp.eq.s32.totalorder %s282, 0
      %s285 = sadd.s32 %s284, 1
      %s286 = scalar_select %p283, %s284, %s285
      %p289 = pneg %p283
      %p290 = scmp.eq.s32.totalorder %s54, 3
      %p291 = por %p289, %p290
      %p292 = scmp.ne.s32.totalorder %s284, %s287
      %p293 = scmp.eq.s32.totalorder %s54, 0
      %p294 = por %p292, %p293
      %p295 = scmp.ne.s32.totalorder %s284, %s287
      %p296 = scmp.eq.s32.totalorder %s59, 3
      %p297 = por %p295, %p296
      %p298 = scmp.ne.s32.totalorder %s287, %s288
      %p299 = scmp.eq.s32.totalorder %s59, 0
      %p300 = por %p298, %p299
      %p301 = scmp.ne.s32.totalorder %s287, %s288
      %p302 = scmp.eq.s32.totalorder %s60, 3
      %p303 = por %p301, %p302
      %p305 = scmp.ne.s32.totalorder %s288, %s304
      %p306 = scmp.eq.s32.totalorder %s60, 0
      %p307 = por %p305, %p306
      %s308 = ssub.s32 %s62, %s69
      %p309 = scmp.eq.s32.totalorder %s308, 0
      %s311 = sadd.s32 %s310, 1
      %s312 = scalar_select %p309, %s310, %s311
      %p315 = pneg %p309
      %p316 = scmp.eq.s32.totalorder %s54, 3
      %p317 = por %p315, %p316
      %p318 = scmp.ne.s32.totalorder %s310, %s313
      %p319 = scmp.eq.s32.totalorder %s54, 0
      %p320 = por %p318, %p319
      %p321 = scmp.ne.s32.totalorder %s310, %s313
      %p322 = scmp.eq.s32.totalorder %s59, 3
      %p323 = por %p321, %p322
      %p324 = scmp.ne.s32.totalorder %s313, %s314
      %p325 = scmp.eq.s32.totalorder %s59, 0
      %p326 = por %p324, %p325
      %p327 = scmp.ne.s32.totalorder %s313, %s314
      %p328 = scmp.eq.s32.totalorder %s60, 3
      %p329 = por %p327, %p328
      %p331 = scmp.ne.s32.totalorder %s314, %s330
      %p332 = scmp.eq.s32.totalorder %s60, 0
      %p333 = por %p331, %p332
      %s334 = ssub.s32 %s62, %s69
      %p335 = scmp.eq.s32.totalorder %s334, 0
      %s337 = sadd.s32 %s336, 1
      %s338 = scalar_select %p335, %s336, %s337
      %p341 = pneg %p335
      %p342 = scmp.eq.s32.totalorder %s54, 3
      %p343 = por %p341, %p342
      %p344 = scmp.ne.s32.totalorder %s336, %s339
      %p345 = scmp.eq.s32.totalorder %s54, 0
      %p346 = por %p344, %p345
      %p347 = scmp.ne.s32.totalorder %s336, %s339
      %p348 = scmp.eq.s32.totalorder %s59, 3
      %p349 = por %p347, %p348
      %p350 = scmp.ne.s32.totalorder %s339, %s340
      %p351 = scmp.eq.s32.totalorder %s59, 0
      %p352 = por %p350, %p351
      %p353 = scmp.ne.s32.totalorder %s339, %s340
      %p354 = scmp.eq.s32.totalorder %s60, 3
      %p355 = por %p353, %p354
      %p357 = scmp.ne.s32.totalorder %s340, %s356
      %p358 = scmp.eq.s32.totalorder %s60, 0
      %p359 = por %p357, %p358
      %s360 = ssub.s32 %s62, %s69
      %p361 = scmp.eq.s32.totalorder %s360, 0
      %s363 = sadd.s32 %s362, 1
      %s364 = scalar_select %p361, %s362, %s363
      %p367 = pneg %p361
      %p368 = scmp.eq.s32.totalorder %s54, 3
      %p369 = por %p367, %p368
      %p370 = scmp.ne.s32.totalorder %s362, %s365
      %p371 = scmp.eq.s32.totalorder %s54, 0
      %p372 = por %p370, %p371
      %p373 = scmp.ne.s32.totalorder %s362, %s365
      %p374 = scmp.eq.s32.totalorder %s59, 3
      %p375 = por %p373, %p374
      %p376 = scmp.ne.s32.totalorder %s365, %s366
      %p377 = scmp.eq.s32.totalorder %s59, 0
      %p378 = por %p376, %p377
      %p379 = scmp.ne.s32.totalorder %s365, %s366
      %p380 = scmp.eq.s32.totalorder %s60, 3
      %p381 = por %p379, %p380
      %p383 = scmp.ne.s32.totalorder %s366, %s382
      %p384 = scmp.eq.s32.totalorder %s60, 0
      %p385 = por %p383, %p384
      %s386 = ssub.s32 %s62, %s69
      %p387 = scmp.eq.s32.totalorder %s386, 0
      %s389 = sadd.s32 %s388, 1
      %s390 = scalar_select %p387, %s388, %s389
      %p393 = pneg %p387
      %p394 = scmp.eq.s32.totalorder %s54, 3
      %p395 = por %p393, %p394
      %p396 = scmp.ne.s32.totalorder %s388, %s391
      %p397 = scmp.eq.s32.totalorder %s54, 0
      %p398 = por %p396, %p397
      %p399 = scmp.ne.s32.totalorder %s388, %s391
      %p400 = scmp.eq.s32.totalorder %s59, 3
      %p401 = por %p399, %p400
      %p402 = scmp.ne.s32.totalorder %s391, %s392
      %p403 = scmp.eq.s32.totalorder %s59, 0
      %p404 = por %p402, %p403
      %p405 = scmp.ne.s32.totalorder %s391, %s392
      %p406 = scmp.eq.s32.totalorder %s60, 3
      %p407 = por %p405, %p406
      %p409 = scmp.ne.s32.totalorder %s392, %s408
      %p410 = scmp.eq.s32.totalorder %s60, 0
      %p411 = por %p409, %p410
      %s412 = ssub.s32 %s62, %s69
      %p413 = scmp.eq.s32.totalorder %s412, 0
      %s415 = sadd.s32 %s414, 1
      %s416 = scalar_select %p413, %s414, %s415
      %p419 = pneg %p413
      %p420 = scmp.eq.s32.totalorder %s54, 3
      %p421 = por %p419, %p420
      %p422 = scmp.ne.s32.totalorder %s414, %s417
      %p423 = scmp.eq.s32.totalorder %s54, 0
      %p424 = por %p422, %p423
      %p425 = scmp.ne.s32.totalorder %s414, %s417
      %p426 = scmp.eq.s32.totalorder %s59, 3
      %p427 = por %p425, %p426
      %p428 = scmp.ne.s32.totalorder %s417, %s418
      %p429 = scmp.eq.s32.totalorder %s59, 0
      %p430 = por %p428, %p429
      %p431 = scmp.ne.s32.totalorder %s417, %s418
      %p432 = scmp.eq.s32.totalorder %s60, 3
      %p433 = por %p431, %p432
      %p435 = scmp.ne.s32.totalorder %s418, %s434
      %p436 = scmp.eq.s32.totalorder %s60, 0
      %p437 = por %p435, %p436
      %s438 = ssub.s32 %s62, %s69
      %p439 = scmp.eq.s32.totalorder %s438, 0
      %s441 = sadd.s32 %s440, 1
      %s442 = scalar_select %p439, %s440, %s441
      %p445 = pneg %p439
      %p446 = scmp.eq.s32.totalorder %s54, 3
      %p447 = por %p445, %p446
      %p448 = scmp.ne.s32.totalorder %s440, %s443
      %p449 = scmp.eq.s32.totalorder %s54, 0
      %p450 = por %p448, %p449
      %p451 = scmp.ne.s32.totalorder %s440, %s443
      %p452 = scmp.eq.s32.totalorder %s59, 3
      %p453 = por %p451, %p452
      %p454 = scmp.ne.s32.totalorder %s443, %s444
      %p455 = scmp.eq.s32.totalorder %s59, 0
      %p456 = por %p454, %p455
      %p457 = scmp.ne.s32.totalorder %s443, %s444
      %p458 = scmp.eq.s32.totalorder %s60, 3
      %p459 = por %p457, %p458
      %p461 = scmp.ne.s32.totalorder %s444, %s460
      %p462 = scmp.eq.s32.totalorder %s60, 0
      %p463 = por %p461, %p462
      %s464 = ssub.s32 %s62, %s69
      %p465 = scmp.eq.s32.totalorder %s464, 0
      %s467 = sadd.s32 %s466, 1
      %s468 = scalar_select %p465, %s466, %s467
      %p471 = pneg %p465
      %p472 = scmp.eq.s32.totalorder %s54, 3
      %p473 = por %p471, %p472
      %p474 = scmp.ne.s32.totalorder %s466, %s469
      %p475 = scmp.eq.s32.totalorder %s54, 0
      %p476 = por %p474, %p475
      %p477 = scmp.ne.s32.totalorder %s466, %s469
      %p478 = scmp.eq.s32.totalorder %s59, 3
      %p479 = por %p477, %p478
      %p480 = scmp.ne.s32.totalorder %s469, %s470
      %p481 = scmp.eq.s32.totalorder %s59, 0
      %p482 = por %p480, %p481
      %p483 = scmp.ne.s32.totalorder %s469, %s470
      %p484 = scmp.eq.s32.totalorder %s60, 3
      %p485 = por %p483, %p484
      %p487 = scmp.ne.s32.totalorder %s470, %s486
      %p488 = scmp.eq.s32.totalorder %s60, 0
      %p489 = por %p487, %p488
      %s490 = ssub.s32 %s62, %s69
      %p491 = scmp.eq.s32.totalorder %s490, 0
      %s493 = sadd.s32 %s492, 1
      %s494 = scalar_select %p491, %s492, %s493
      %p497 = pneg %p491
      %p498 = scmp.eq.s32.totalorder %s54, 3
      %p499 = por %p497, %p498
      %p500 = scmp.ne.s32.totalorder %s492, %s495
      %p501 = scmp.eq.s32.totalorder %s54, 0
      %p502 = por %p500, %p501
      %p503 = scmp.ne.s32.totalorder %s492, %s495
      %p504 = scmp.eq.s32.totalorder %s59, 3
      %p505 = por %p503, %p504
      %p506 = scmp.ne.s32.totalorder %s495, %s496
      %p507 = scmp.eq.s32.totalorder %s59, 0
      %p508 = por %p506, %p507
      %p509 = scmp.ne.s32.totalorder %s495, %s496
      %p510 = scmp.eq.s32.totalorder %s60, 3
      %p511 = por %p509, %p510
      %p513 = scmp.ne.s32.totalorder %s496, %s512
      %p514 = scmp.eq.s32.totalorder %s60, 0
      %p515 = por %p513, %p514
      %s516 = ssub.s32 %s62, %s69
      %p517 = scmp.eq.s32.totalorder %s516, 0
      %s519 = sadd.s32 %s518, 1
      %s520 = scalar_select %p517, %s518, %s519
      %p523 = pneg %p517
      %p524 = scmp.eq.s32.totalorder %s54, 3
      %p525 = por %p523, %p524
      %p526 = scmp.ne.s32.totalorder %s518, %s521
      %p527 = scmp.eq.s32.totalorder %s54, 0
      %p528 = por %p526, %p527
      %p529 = scmp.ne.s32.totalorder %s518, %s521
      %p530 = scmp.eq.s32.totalorder %s59, 3
      %p531 = por %p529, %p530
      %p532 = scmp.ne.s32.totalorder %s521, %s522
      %p533 = scmp.eq.s32.totalorder %s59, 0
      %p534 = por %p532, %p533
      %p535 = scmp.ne.s32.totalorder %s521, %s522
      %p536 = scmp.eq.s32.totalorder %s60, 3
      %p537 = por %p535, %p536
      %p539 = scmp.ne.s32.totalorder %s522, %s538
      %p540 = scmp.eq.s32.totalorder %s60, 0
      %p541 = por %p539, %p540
      %s542 = ssub.s32 %s62, %s69
      %p543 = scmp.eq.s32.totalorder %s542, 0
      %s545 = sadd.s32 %s544, 1
      %s546 = scalar_select %p543, %s544, %s545
      %p549 = pneg %p543
      %p550 = scmp.eq.s32.totalorder %s54, 3
      %p551 = por %p549, %p550
      %p552 = scmp.ne.s32.totalorder %s544, %s547
      %p553 = scmp.eq.s32.totalorder %s54, 0
      %p554 = por %p552, %p553
      %p555 = scmp.ne.s32.totalorder %s544, %s547
      %p556 = scmp.eq.s32.totalorder %s59, 3
      %p557 = por %p555, %p556
      %p558 = scmp.ne.s32.totalorder %s547, %s548
      %p559 = scmp.eq.s32.totalorder %s59, 0
      %p560 = por %p558, %p559
      %p561 = scmp.ne.s32.totalorder %s547, %s548
      %p562 = scmp.eq.s32.totalorder %s60, 3
      %p563 = por %p561, %p562
      %p565 = scmp.ne.s32.totalorder %s548, %s564
      %p566 = scmp.eq.s32.totalorder %s60, 0
      %p567 = por %p565, %p566
      %s569 = sadd.s32 %s568, 1
      %p572 = scmp.eq.s32.totalorder %s54, 3
      %p573 = scmp.ne.s32.totalorder %s568, %s570
      %p574 = scmp.eq.s32.totalorder %s54, 0
      %p575 = por %p573, %p574
      %p576 = scmp.ne.s32.totalorder %s568, %s570
      %p577 = scmp.eq.s32.totalorder %s59, 3
      %p578 = por %p576, %p577
      %p579 = scmp.ne.s32.totalorder %s570, %s571
      %p580 = scmp.eq.s32.totalorder %s59, 0
      %p581 = por %p579, %p580
      %p582 = scmp.ne.s32.totalorder %s570, %s571
      %p583 = scmp.eq.s32.totalorder %s60, 3
      %p584 = por %p582, %p583
      %p586 = scmp.ne.s32.totalorder %s571, %s585
      %p587 = scmp.eq.s32.totalorder %s60, 0
      %p588 = por %p586, %p587
      %s590 = sadd.s32 %s589, 1
      %p593 = scmp.eq.s32.totalorder %s54, 3
      %p594 = scmp.ne.s32.totalorder %s589, %s591
      %p595 = scmp.eq.s32.totalorder %s54, 0
      %p596 = por %p594, %p595
      %p597 = scmp.ne.s32.totalorder %s589, %s591
      %p598 = scmp.eq.s32.totalorder %s59, 3
      %p599 = por %p597, %p598
      %p600 = scmp.ne.s32.totalorder %s591, %s592
      %p601 = scmp.eq.s32.totalorder %s59, 0
      %p602 = por %p600, %p601
      %p603 = scmp.ne.s32.totalorder %s591, %s592
      %p604 = scmp.eq.s32.totalorder %s60, 3
      %p605 = por %p603, %p604
      %p607 = scmp.ne.s32.totalorder %s592, %s606
      %p608 = scmp.eq.s32.totalorder %s60, 0
      %p609 = por %p607, %p608
      %s610 = ssub.s32 %s61, %s73
      %p611 = scmp.eq.s32.totalorder %s610, 0
      %s613 = sadd.s32 %s612, 1
      %s614 = scalar_select %p611, %s612, %s613
      %p617 = pneg %p611
      %p618 = scmp.eq.s32.totalorder %s54, 3
      %p619 = por %p617, %p618
      %p620 = scmp.ne.s32.totalorder %s612, %s615
      %p621 = scmp.eq.s32.totalorder %s54, 0
      %p622 = por %p620, %p621
      %p623 = scmp.ne.s32.totalorder %s612, %s615
      %p624 = scmp.eq.s32.totalorder %s59, 3
      %p625 = por %p623, %p624
      %p626 = scmp.ne.s32.totalorder %s615, %s616
      %p627 = scmp.eq.s32.totalorder %s59, 0
      %p628 = por %p626, %p627
      %p629 = scmp.ne.s32.totalorder %s615, %s616
      %p630 = scmp.eq.s32.totalorder %s60, 3
      %p631 = por %p629, %p630
      %p633 = scmp.ne.s32.totalorder %s616, %s632
      %p634 = scmp.eq.s32.totalorder %s60, 0
      %p635 = por %p633, %p634
      %p636 = scmp.le.s32.totalorder 1, %s54
      %p637 = scmp.lt.s32.totalorder %s54, 5
      %p638 = pnand %p636, %p637
      %p639 = pneg %p638
      // Predicated region
      $region9: #{tpu_custom_call.1} parent=5 // pred_check
        _
      $region10: #{tpu_custom_call.1} parent=5 // pred_check_branch
        %641 = sbr.rel (%p638) target = $region12
      $region11: #{tpu_custom_call.1} parent=5 // pred_region
        %s642 = ssub.s32 %s54, 1
        // Predicated region
        $region13: #{tpu_custom_call.1} parent=11 // pred_check
          %p643 = pneg %p581
        $region14: #{tpu_custom_call.1} parent=11 // pred_check_branch
          %645 = sbr.rel (%p643) target = $region16
        $region15: #{tpu_custom_call.1} parent=11 // pred_region
          _
        $region16: #{tpu_custom_call.1} parent=11 // pred_fallthru
          _
        // Predicated region
        $region17: #{tpu_custom_call.1} parent=11 // pred_check
          %p646 = pneg %p602
        $region18: #{tpu_custom_call.1} parent=11 // pred_check_branch
          %648 = sbr.rel (%p646) target = $region20
        $region19: #{tpu_custom_call.1} parent=11 // pred_region
          _
        $region20: #{tpu_custom_call.1} parent=11 // pred_fallthru
          _
      $region12: #{tpu_custom_call.1} parent=5 // pred_fallthru
        _
      %p649 = scmp.lt.s32.totalorder %s54, 4
      // Predicated region
      $region21: #{tpu_custom_call.1} parent=5 // pred_check
        %p650 = pneg %p649
      $region22: #{tpu_custom_call.1} parent=5 // pred_check_branch
        %652 = sbr.rel (%p650) target = $region24
      $region23: #{tpu_custom_call.1} parent=5 // pred_region
        // Predicated region
        $region25: #{tpu_custom_call.1} parent=23 // pred_check
          %p653 = pneg %p86
        $region26: #{tpu_custom_call.1} parent=23 // pred_check_branch
          %655 = sbr.rel (%p653) target = $region28
        $region27: #{tpu_custom_call.1} parent=23 // pred_region
          %s656 = sand.u32 %s76, 1
          %s657 = scalar_lea.sflag [#allocation3], %s656
          %s658 = sand.u32 %s76, 1
          %s659 = smul.addr %s658, 16
          %s660 = scalar_lea.vmem [#allocation2], %s659
          %s661 = smul.u32 2, %s61
          %s663 = ssub.s32 256, 256
          %664 = vsyncadd %s657, %s663
          %s665 = smul.addr %s661, 128
          %s666 = scalar_lea.hbm %s0, %s665
          %s667 = sshll.u32 %s660, 4
          %s668 = int_to_ptr.vmem [resolvable:$true] %s667
          %673 = dma.hbm_to_vmem [thread:$0]  %s666, 256, %s668, %s657, 128, 128, 8
        $region28: #{tpu_custom_call.1} parent=23 // pred_fallthru
          _
        // Predicated region
        $region29: #{tpu_custom_call.1} parent=23 // pred_check
          %p674 = pneg %p112
        $region30: #{tpu_custom_call.1} parent=23 // pred_check_branch
          %676 = sbr.rel (%p674) target = $region32
        $region31: #{tpu_custom_call.1} parent=23 // pred_region
          %s677 = sand.u32 %s54, 1
          %s678 = scalar_lea.sflag [#allocation6], %s677
          %s679 = sand.u32 %s102, 1
          %s680 = smul.addr %s679, 8
          %s681 = scalar_lea.vmem [#allocation5], %s680
          %s683 = ssub.s32 128, 128
          %684 = vsyncadd %s678, %s683
          %s685 = smul.addr %s61, 128
          %s686 = scalar_lea.hbm %s1, %s685
          %s688 = sshll.u32 %s681, 4
          %s689 = int_to_ptr.vmem [resolvable:$true] %s688
          %691 = dma.hbm_to_vmem [thread:$0]  %s686, 128, %s689, %s678
        $region32: #{tpu_custom_call.1} parent=23 // pred_fallthru
          _
        // Predicated region
        $region33: #{tpu_custom_call.1} parent=23 // pred_check
          %p692 = pneg %p138
        $region34: #{tpu_custom_call.1} parent=23 // pred_check_branch
          %694 = sbr.rel (%p692) target = $region36
        $region35: #{tpu_custom_call.1} parent=23 // pred_region
          %s695 = sand.u32 %s54, 1
          %s696 = scalar_lea.sflag [#allocation6], %s695
          %s697 = sand.u32 %s128, 1
          %s698 = scalar_lea.vmem [#allocation7], %s697
          %s700 = ssub.s32 16, 16
          %701 = vsyncadd %s696, %s700
          %s702 = smul.addr %s62, 16
          %s703 = scalar_lea.hbm %s2, %s702
          %s705 = sshll.u32 %s698, 4
          %s706 = int_to_ptr.vmem [resolvable:$true] %s705
          %708 = dma.hbm_to_vmem [thread:$0]  %s703, 16, %s706, %s696
        $region36: #{tpu_custom_call.1} parent=23 // pred_fallthru
          _
        // Predicated region
        $region37: #{tpu_custom_call.1} parent=23 // pred_check
          %p709 = pneg %p164
        $region38: #{tpu_custom_call.1} parent=23 // pred_check_branch
          %711 = sbr.rel (%p709) target = $region40
        $region39: #{tpu_custom_call.1} parent=23 // pred_region
          %s712 = sand.u32 %s54, 1
          %s713 = scalar_lea.sflag [#allocation9], %s712
          %s714 = sand.u32 %s154, 1
          %s715 = scalar_lea.vmem [#allocation8], %s714
          %s717 = ssub.s32 16, 16
          %718 = vsyncadd %s713, %s717
          %s719 = smul.addr %s62, 16
          %s720 = scalar_lea.hbm %s3, %s719
          %s722 = sshll.u32 %s715, 4
          %s723 = int_to_ptr.vmem [resolvable:$true] %s722
          %725 = dma.hbm_to_vmem [thread:$0]  %s720, 16, %s723, %s713
        $region40: #{tpu_custom_call.1} parent=23 // pred_fallthru
          _
        // Predicated region
        $region41: #{tpu_custom_call.1} parent=23 // pred_check
          %p726 = pneg %p190
        $region42: #{tpu_custom_call.1} parent=23 // pred_check_branch
          %728 = sbr.rel (%p726) target = $region44
        $region43: #{tpu_custom_call.1} parent=23 // pred_region
          %p729 = scmp.lt.s32.totalorder %s62, 1
          %s730 = scalar_select %p729, %s62, 1
          %s731 = smul.addr %s730, 4
          %s732 = smul.addr %s731, 8
          %s733 = scalar_lea.vmem %s4, %s732
        $region44: #{tpu_custom_call.1} parent=23 // pred_fallthru
          _
        // Predicated region
        $region45: #{tpu_custom_call.1} parent=23 // pred_check
          %p734 = pneg %p216
        $region46: #{tpu_custom_call.1} parent=23 // pred_check_branch
          %736 = sbr.rel (%p734) target = $region48
        $region47: #{tpu_custom_call.1} parent=23 // pred_region
          %p737 = scmp.lt.s32.totalorder %s62, 1
          %s738 = scalar_select %p737, %s62, 1
          %s739 = smul.addr %s738, 4
          %s740 = smul.addr %s739, 8
          %s741 = scalar_lea.vmem %s5, %s740
        $region48: #{tpu_custom_call.1} parent=23 // pred_fallthru
          _
        // Predicated region
        $region49: #{tpu_custom_call.1} parent=23 // pred_check
          %p742 = pneg %p242
        $region50: #{tpu_custom_call.1} parent=23 // pred_check_branch
          %744 = sbr.rel (%p742) target = $region52
        $region51: #{tpu_custom_call.1} parent=23 // pred_region
          %s745 = sand.u32 %s54, 1
          %s746 = scalar_lea.sflag [#allocation9], %s745
          %s747 = sand.u32 %s232, 1
          %s748 = scalar_lea.vmem [#allocation10], %s747
          %s750 = ssub.s32 16, 16
          %751 = vsyncadd %s746, %s750
          %s752 = smul.addr %s62, 16
          %s753 = scalar_lea.hbm %s6, %s752
          %s755 = sshll.u32 %s748, 4
          %s756 = int_to_ptr.vmem [resolvable:$true] %s755
          %758 = dma.hbm_to_vmem [thread:$0]  %s753, 16, %s756, %s746
        $region52: #{tpu_custom_call.1} parent=23 // pred_fallthru
          _
        // Predicated region
        $region53: #{tpu_custom_call.1} parent=23 // pred_check
          %p759 = pneg %p268
        $region54: #{tpu_custom_call.1} parent=23 // pred_check_branch
          %761 = sbr.rel (%p759) target = $region56
        $region55: #{tpu_custom_call.1} parent=23 // pred_region
          %s762 = sand.u32 %s54, 1
          %s763 = scalar_lea.sflag [#allocation12], %s762
          %s764 = sand.u32 %s258, 1
          %s765 = scalar_lea.vmem [#allocation11], %s764
          %s767 = ssub.s32 16, 16
          %768 = vsyncadd %s763, %s767
          %s769 = smul.addr %s62, 16
          %s770 = scalar_lea.hbm %s7, %s769
          %s772 = sshll.u32 %s765, 4
          %s773 = int_to_ptr.vmem [resolvable:$true] %s772
          %775 = dma.hbm_to_vmem [thread:$0]  %s770, 16, %s773, %s763
        $region56: #{tpu_custom_call.1} parent=23 // pred_fallthru
          _
        // Predicated region
        $region57: #{tpu_custom_call.1} parent=23 // pred_check
          %p776 = pneg %p294
        $region58: #{tpu_custom_call.1} parent=23 // pred_check_branch
          %778 = sbr.rel (%p776) target = $region60
        $region59: #{tpu_custom_call.1} parent=23 // pred_region
          %s779 = sand.u32 %s54, 1
          %s780 = scalar_lea.sflag [#allocation12], %s779
          %s781 = sand.u32 %s284, 1
          %s782 = scalar_lea.vmem [#allocation13], %s781
          %s784 = ssub.s32 16, 16
          %785 = vsyncadd %s780, %s784
          %s786 = smul.addr %s62, 16
          %s787 = scalar_lea.hbm %s8, %s786
          %s789 = sshll.u32 %s782, 4
          %s790 = int_to_ptr.vmem [resolvable:$true] %s789
          %792 = dma.hbm_to_vmem [thread:$0]  %s787, 16, %s790, %s780
        $region60: #{tpu_custom_call.1} parent=23 // pred_fallthru
          _
        // Predicated region
        $region61: #{tpu_custom_call.1} parent=23 // pred_check
          %p793 = pneg %p320
        $region62: #{tpu_custom_call.1} parent=23 // pred_check_branch
          %795 = sbr.rel (%p793) target = $region64
        $region63: #{tpu_custom_call.1} parent=23 // pred_region
          %p796 = scmp.lt.s32.totalorder %s62, 1
          %s797 = scalar_select %p796, %s62, 1
          %s798 = smul.addr %s797, 4
          %s799 = smul.addr %s798, 8
          %s800 = scalar_lea.vmem %s9, %s799
        $region64: #{tpu_custom_call.1} parent=23 // pred_fallthru
          _
        // Predicated region
        $region65: #{tpu_custom_call.1} parent=23 // pred_check
          %p801 = pneg %p346
        $region66: #{tpu_custom_call.1} parent=23 // pred_check_branch
          %803 = sbr.rel (%p801) target = $region68
        $region67: #{tpu_custom_call.1} parent=23 // pred_region
          %s804 = sand.u32 %s54, 1
          %s805 = scalar_lea.sflag [#allocation15], %s804
          %s806 = sand.u32 %s336, 1
          %s807 = smul.addr %s806, 32
          %s808 = scalar_lea.vmem [#allocation14], %s807
          %s810 = ssub.s32 512, 512
          %811 = vsyncadd %s805, %s810
          %s812 = smul.addr %s62, 4
          %s813 = smul.addr %s812, 128
          %s814 = scalar_lea.hbm %s10, %s813
          %s815 = sshll.u32 %s808, 4
          %s816 = int_to_ptr.vmem [resolvable:$true] %s815
          %821 = dma.hbm_to_vmem [thread:$0]  %s814, 512, %s816, %s805, 128, 128, 8
        $region68: #{tpu_custom_call.1} parent=23 // pred_fallthru
          _
        // Predicated region
        $region69: #{tpu_custom_call.1} parent=23 // pred_check
          %p822 = pneg %p372
        $region70: #{tpu_custom_call.1} parent=23 // pred_check_branch
          %824 = sbr.rel (%p822) target = $region72
        $region71: #{tpu_custom_call.1} parent=23 // pred_region
          %s825 = sand.u32 %s54, 1
          %s826 = scalar_lea.sflag [#allocation15], %s825
          %s827 = sand.u32 %s362, 1
          %s828 = smul.addr %s827, 32
          %s829 = scalar_lea.vmem [#allocation16], %s828
          %s831 = ssub.s32 512, 512
          %832 = vsyncadd %s826, %s831
          %s833 = smul.addr %s62, 4
          %s834 = smul.addr %s833, 128
          %s835 = scalar_lea.hbm %s11, %s834
          %s836 = sshll.u32 %s829, 4
          %s837 = int_to_ptr.vmem [resolvable:$true] %s836
          %842 = dma.hbm_to_vmem [thread:$0]  %s835, 512, %s837, %s826, 128, 128, 8
        $region72: #{tpu_custom_call.1} parent=23 // pred_fallthru
          _
        // Predicated region
        $region73: #{tpu_custom_call.1} parent=23 // pred_check
          %p843 = pneg %p398
        $region74: #{tpu_custom_call.1} parent=23 // pred_check_branch
          %845 = sbr.rel (%p843) target = $region76
        $region75: #{tpu_custom_call.1} parent=23 // pred_region
          %s846 = sand.u32 %s54, 1
          %s847 = scalar_lea.sflag [#allocation18], %s846
          %s848 = sand.u32 %s388, 1
          %s849 = scalar_lea.vmem [#allocation17], %s848
          %s851 = ssub.s32 16, 16
          %852 = vsyncadd %s847, %s851
          %s853 = smul.addr %s62, 16
          %s854 = scalar_lea.hbm %s12, %s853
          %s856 = sshll.u32 %s849, 4
          %s857 = int_to_ptr.vmem [resolvable:$true] %s856
          %859 = dma.hbm_to_vmem [thread:$0]  %s854, 16, %s857, %s847
        $region76: #{tpu_custom_call.1} parent=23 // pred_fallthru
          _
        // Predicated region
        $region77: #{tpu_custom_call.1} parent=23 // pred_check
          %p860 = pneg %p424
        $region78: #{tpu_custom_call.1} parent=23 // pred_check_branch
          %862 = sbr.rel (%p860) target = $region80
        $region79: #{tpu_custom_call.1} parent=23 // pred_region
          %s863 = sand.u32 %s54, 1
          %s864 = scalar_lea.sflag [#allocation18], %s863
          %s865 = sand.u32 %s414, 1
          %s866 = scalar_lea.vmem [#allocation19], %s865
          %s868 = ssub.s32 16, 16
          %869 = vsyncadd %s864, %s868
          %s870 = smul.addr %s62, 16
          %s871 = scalar_lea.hbm %s13, %s870
          %s873 = sshll.u32 %s866, 4
          %s874 = int_to_ptr.vmem [resolvable:$true] %s873
          %876 = dma.hbm_to_vmem [thread:$0]  %s871, 16, %s874, %s864
        $region80: #{tpu_custom_call.1} parent=23 // pred_fallthru
          _
        // Predicated region
        $region81: #{tpu_custom_call.1} parent=23 // pred_check
          %p877 = pneg %p450
        $region82: #{tpu_custom_call.1} parent=23 // pred_check_branch
          %879 = sbr.rel (%p877) target = $region84
        $region83: #{tpu_custom_call.1} parent=23 // pred_region
          %s880 = sand.u32 %s54, 1
          %s881 = scalar_lea.sflag [#allocation21], %s880
          %s882 = sand.u32 %s440, 1
          %s883 = scalar_lea.vmem [#allocation20], %s882
          %s885 = ssub.s32 16, 16
          %886 = vsyncadd %s881, %s885
          %s887 = smul.addr %s62, 16
          %s888 = scalar_lea.hbm %s14, %s887
          %s890 = sshll.u32 %s883, 4
          %s891 = int_to_ptr.vmem [resolvable:$true] %s890
          %893 = dma.hbm_to_vmem [thread:$0]  %s888, 16, %s891, %s881
        $region84: #{tpu_custom_call.1} parent=23 // pred_fallthru
          _
        // Predicated region
        $region85: #{tpu_custom_call.1} parent=23 // pred_check
          %p894 = pneg %p476
        $region86: #{tpu_custom_call.1} parent=23 // pred_check_branch
          %896 = sbr.rel (%p894) target = $region88
        $region87: #{tpu_custom_call.1} parent=23 // pred_region
          %s897 = sand.u32 %s54, 1
          %s898 = scalar_lea.sflag [#allocation21], %s897
          %s899 = sand.u32 %s466, 1
          %s900 = smul.addr %s899, 32
          %s901 = scalar_lea.vmem [#allocation22], %s900
          %s903 = ssub.s32 512, 512
          %904 = vsyncadd %s898, %s903
          %s905 = smul.addr %s62, 4
          %s906 = smul.addr %s905, 128
          %s907 = scalar_lea.hbm %s15, %s906
          %s908 = sshll.u32 %s901, 4
          %s909 = int_to_ptr.vmem [resolvable:$true] %s908
          %914 = dma.hbm_to_vmem [thread:$0]  %s907, 512, %s909, %s898, 128, 128, 8
        $region88: #{tpu_custom_call.1} parent=23 // pred_fallthru
          _
        // Predicated region
        $region89: #{tpu_custom_call.1} parent=23 // pred_check
          %p915 = pneg %p502
        $region90: #{tpu_custom_call.1} parent=23 // pred_check_branch
          %917 = sbr.rel (%p915) target = $region92
        $region91: #{tpu_custom_call.1} parent=23 // pred_region
          %s918 = sand.u32 %s492, 1
          %s919 = scalar_lea.sflag [#allocation24], %s918
          %s920 = sand.u32 %s492, 1
          %s921 = scalar_lea.vmem [#allocation23], %s920
          %s923 = ssub.s32 16, 16
          %924 = vsyncadd %s919, %s923
          %s925 = smul.addr %s62, 16
          %s926 = scalar_lea.hbm %s16, %s925
          %s928 = sshll.u32 %s921, 4
          %s929 = int_to_ptr.vmem [resolvable:$true] %s928
          %931 = dma.hbm_to_vmem [thread:$0]  %s926, 16, %s929, %s919
        $region92: #{tpu_custom_call.1} parent=23 // pred_fallthru
          _
        // Predicated region
        $region93: #{tpu_custom_call.1} parent=23 // pred_check
          %p932 = pneg %p528
        $region94: #{tpu_custom_call.1} parent=23 // pred_check_branch
          %934 = sbr.rel (%p932) target = $region96
        $region95: #{tpu_custom_call.1} parent=23 // pred_region
          %p935 = scmp.lt.s32.totalorder %s62, 1
          %s936 = scalar_select %p935, %s62, 1
          %s937 = smul.addr %s936, 8
          %s938 = smul.addr %s937, 8
          %s939 = scalar_lea.vmem %s17, %s938
        $region96: #{tpu_custom_call.1} parent=23 // pred_fallthru
          _
        // Predicated region
        $region97: #{tpu_custom_call.1} parent=23 // pred_check
          %p940 = pneg %p554
        $region98: #{tpu_custom_call.1} parent=23 // pred_check_branch
          %942 = sbr.rel (%p940) target = $region100
        $region99: #{tpu_custom_call.1} parent=23 // pred_region
          %p943 = scmp.lt.s32.totalorder %s62, 1
          %s944 = scalar_select %p943, %s62, 1
          %s945 = scalar_lea.vmem %s18, %s944
        $region100: #{tpu_custom_call.1} parent=23 // pred_fallthru
          _
      $region24: #{tpu_custom_call.1} parent=5 // pred_fallthru
        _
      %p946 = scmp.le.s32.totalorder 1, %s54
      %p947 = scmp.lt.s32.totalorder %s54, 5
      %p948 = pnand %p946, %p947
      %p949 = pneg %p948
      // Predicated region
      $region101: #{tpu_custom_call.1} parent=5 // pred_check
        _
      $region102: #{tpu_custom_call.1} parent=5 // pred_check_branch
        %951 = sbr.rel (%p948) target = $region104
      $region103: #{tpu_custom_call.1} parent=5 // pred_region
        %s952 = ssub.s32 %s54, 1
        %s953 = sand.u32 %s79, 1
        %s954 = scalar_lea.sflag [#allocation3], %s953
        %s955 = sand.u32 %s79, 1
        %s956 = smul.addr %s955, 16
        %s957 = scalar_lea.vmem [#allocation2], %s956
        // Predicated region
        $region105: #{tpu_custom_call.1} parent=103 // pred_check
          %p958 = pneg %p92
        $region106: #{tpu_custom_call.1} parent=103 // pred_check_branch
          %960 = sbr.rel (%p958) target = $region108
        $region107: #{tpu_custom_call.1} parent=103 // pred_region
          %961 = dma.done %s954, 256
        $region108: #{tpu_custom_call.1} parent=103 // pred_fallthru
          _
        %s962 = sand.u32 %s59, 1
        %s963 = scalar_lea.sflag [#allocation6], %s962
        %s964 = sand.u32 %s105, 1
        %s965 = smul.addr %s964, 8
        %s966 = scalar_lea.vmem [#allocation5], %s965
        // Predicated region
        $region109: #{tpu_custom_call.1} parent=103 // pred_check
          %p967 = pneg %p118
        $region110: #{tpu_custom_call.1} parent=103 // pred_check_branch
          %969 = sbr.rel (%p967) target = $region112
        $region111: #{tpu_custom_call.1} parent=103 // pred_region
          %970 = dma.done %s963, 128
        $region112: #{tpu_custom_call.1} parent=103 // pred_fallthru
          _
        %s971 = sand.u32 %s59, 1
        %s972 = scalar_lea.sflag [#allocation6], %s971
        %s973 = sand.u32 %s131, 1
        %s974 = scalar_lea.vmem [#allocation7], %s973
        // Predicated region
        $region113: #{tpu_custom_call.1} parent=103 // pred_check
          %p975 = pneg %p144
        $region114: #{tpu_custom_call.1} parent=103 // pred_check_branch
          %977 = sbr.rel (%p975) target = $region116
        $region115: #{tpu_custom_call.1} parent=103 // pred_region
          %978 = dma.done %s972, 16
        $region116: #{tpu_custom_call.1} parent=103 // pred_fallthru
          _
        %s979 = sand.u32 %s59, 1
        %s980 = scalar_lea.sflag [#allocation9], %s979
        %s981 = sand.u32 %s157, 1
        %s982 = scalar_lea.vmem [#allocation8], %s981
        // Predicated region
        $region117: #{tpu_custom_call.1} parent=103 // pred_check
          %p983 = pneg %p170
        $region118: #{tpu_custom_call.1} parent=103 // pred_check_branch
          %985 = sbr.rel (%p983) target = $region120
        $region119: #{tpu_custom_call.1} parent=103 // pred_region
          %986 = dma.done %s980, 16
        $region120: #{tpu_custom_call.1} parent=103 // pred_fallthru
          _
        %s987 = sand.u32 %s59, 1
        %s988 = scalar_lea.sflag [#allocation9], %s987
        %s989 = sand.u32 %s235, 1
        %s990 = scalar_lea.vmem [#allocation10], %s989
        // Predicated region
        $region121: #{tpu_custom_call.1} parent=103 // pred_check
          %p991 = pneg %p248
        $region122: #{tpu_custom_call.1} parent=103 // pred_check_branch
          %993 = sbr.rel (%p991) target = $region124
        $region123: #{tpu_custom_call.1} parent=103 // pred_region
          %994 = dma.done %s988, 16
        $region124: #{tpu_custom_call.1} parent=103 // pred_fallthru
          _
        %s995 = sand.u32 %s59, 1
        %s996 = scalar_lea.sflag [#allocation12], %s995
        %s997 = sand.u32 %s261, 1
        %s998 = scalar_lea.vmem [#allocation11], %s997
        // Predicated region
        $region125: #{tpu_custom_call.1} parent=103 // pred_check
          %p999 = pneg %p274
        $region126: #{tpu_custom_call.1} parent=103 // pred_check_branch
          %1001 = sbr.rel (%p999) target = $region128
        $region127: #{tpu_custom_call.1} parent=103 // pred_region
          %1002 = dma.done %s996, 16
        $region128: #{tpu_custom_call.1} parent=103 // pred_fallthru
          _
        %s1003 = sand.u32 %s59, 1
        %s1004 = scalar_lea.sflag [#allocation12], %s1003
        %s1005 = sand.u32 %s287, 1
        %s1006 = scalar_lea.vmem [#allocation13], %s1005
        // Predicated region
        $region129: #{tpu_custom_call.1} parent=103 // pred_check
          %p1007 = pneg %p300
        $region130: #{tpu_custom_call.1} parent=103 // pred_check_branch
          %1009 = sbr.rel (%p1007) target = $region132
        $region131: #{tpu_custom_call.1} parent=103 // pred_region
          %1010 = dma.done %s1004, 16
        $region132: #{tpu_custom_call.1} parent=103 // pred_fallthru
          _
        %s1011 = sand.u32 %s59, 1
        %s1012 = scalar_lea.sflag [#allocation15], %s1011
        %s1013 = sand.u32 %s339, 1
        %s1014 = smul.addr %s1013, 32
        %s1015 = scalar_lea.vmem [#allocation14], %s1014
        // Predicated region
        $region133: #{tpu_custom_call.1} parent=103 // pred_check
          %p1016 = pneg %p352
        $region134: #{tpu_custom_call.1} parent=103 // pred_check_branch
          %1018 = sbr.rel (%p1016) target = $region136
        $region135: #{tpu_custom_call.1} parent=103 // pred_region
          %1019 = dma.done %s1012, 512
        $region136: #{tpu_custom_call.1} parent=103 // pred_fallthru
          _
        %s1020 = sand.u32 %s59, 1
        %s1021 = scalar_lea.sflag [#allocation15], %s1020
        %s1022 = sand.u32 %s365, 1
        %s1023 = smul.addr %s1022, 32
        %s1024 = scalar_lea.vmem [#allocation16], %s1023
        // Predicated region
        $region137: #{tpu_custom_call.1} parent=103 // pred_check
          %p1025 = pneg %p378
        $region138: #{tpu_custom_call.1} parent=103 // pred_check_branch
          %1027 = sbr.rel (%p1025) target = $region140
        $region139: #{tpu_custom_call.1} parent=103 // pred_region
          %1028 = dma.done %s1021, 512
        $region140: #{tpu_custom_call.1} parent=103 // pred_fallthru
          _
        %s1029 = sand.u32 %s59, 1
        %s1030 = scalar_lea.sflag [#allocation18], %s1029
        %s1031 = sand.u32 %s391, 1
        %s1032 = scalar_lea.vmem [#allocation17], %s1031
        // Predicated region
        $region141: #{tpu_custom_call.1} parent=103 // pred_check
          %p1033 = pneg %p404
        $region142: #{tpu_custom_call.1} parent=103 // pred_check_branch
          %1035 = sbr.rel (%p1033) target = $region144
        $region143: #{tpu_custom_call.1} parent=103 // pred_region
          %1036 = dma.done %s1030, 16
        $region144: #{tpu_custom_call.1} parent=103 // pred_fallthru
          _
        %s1037 = sand.u32 %s59, 1
        %s1038 = scalar_lea.sflag [#allocation18], %s1037
        %s1039 = sand.u32 %s417, 1
        %s1040 = scalar_lea.vmem [#allocation19], %s1039
        // Predicated region
        $region145: #{tpu_custom_call.1} parent=103 // pred_check
          %p1041 = pneg %p430
        $region146: #{tpu_custom_call.1} parent=103 // pred_check_branch
          %1043 = sbr.rel (%p1041) target = $region148
        $region147: #{tpu_custom_call.1} parent=103 // pred_region
          %1044 = dma.done %s1038, 16
        $region148: #{tpu_custom_call.1} parent=103 // pred_fallthru
          _
        %s1045 = sand.u32 %s59, 1
        %s1046 = scalar_lea.sflag [#allocation21], %s1045
        %s1047 = sand.u32 %s443, 1
        %s1048 = scalar_lea.vmem [#allocation20], %s1047
        // Predicated region
        $region149: #{tpu_custom_call.1} parent=103 // pred_check
          %p1049 = pneg %p456
        $region150: #{tpu_custom_call.1} parent=103 // pred_check_branch
          %1051 = sbr.rel (%p1049) target = $region152
        $region151: #{tpu_custom_call.1} parent=103 // pred_region
          %1052 = dma.done %s1046, 16
        $region152: #{tpu_custom_call.1} parent=103 // pred_fallthru
          _
        %s1053 = sand.u32 %s59, 1
        %s1054 = scalar_lea.sflag [#allocation21], %s1053
        %s1055 = sand.u32 %s469, 1
        %s1056 = smul.addr %s1055, 32
        %s1057 = scalar_lea.vmem [#allocation22], %s1056
        // Predicated region
        $region153: #{tpu_custom_call.1} parent=103 // pred_check
          %p1058 = pneg %p482
        $region154: #{tpu_custom_call.1} parent=103 // pred_check_branch
          %1060 = sbr.rel (%p1058) target = $region156
        $region155: #{tpu_custom_call.1} parent=103 // pred_region
          %1061 = dma.done %s1054, 512
        $region156: #{tpu_custom_call.1} parent=103 // pred_fallthru
          _
        %s1062 = sand.u32 %s495, 1
        %s1063 = scalar_lea.sflag [#allocation24], %s1062
        %s1064 = sand.u32 %s495, 1
        %s1065 = scalar_lea.vmem [#allocation23], %s1064
        // Predicated region
        $region157: #{tpu_custom_call.1} parent=103 // pred_check
          %p1066 = pneg %p508
        $region158: #{tpu_custom_call.1} parent=103 // pred_check_branch
          %1068 = sbr.rel (%p1066) target = $region160
        $region159: #{tpu_custom_call.1} parent=103 // pred_region
          %1069 = dma.done %s1063, 16
        $region160: #{tpu_custom_call.1} parent=103 // pred_fallthru
          _
        %s1070 = sand.u32 %s79, 1
        %s1071 = scalar_lea.sflag [#allocation3], %s1070
        %s1072 = sand.u32 %s79, 1
        %s1073 = smul.addr %s1072, 16
        %s1074 = scalar_lea.vmem [#allocation2], %s1073
        %p1075 = pneg %p92
        %p1076 = pneg %p89
        %s1077 = sand.u32 %s59, 1
        %s1078 = scalar_lea.sflag [#allocation6], %s1077
        %s1079 = sand.u32 %s105, 1
        %s1080 = smul.addr %s1079, 8
        %s1081 = scalar_lea.vmem [#allocation5], %s1080
        %p1082 = pneg %p118
        %p1083 = pneg %p115
        %s1084 = sand.u32 %s59, 1
        %s1085 = scalar_lea.sflag [#allocation6], %s1084
        %s1086 = sand.u32 %s131, 1
        %s1087 = scalar_lea.vmem [#allocation7], %s1086
        %p1088 = pneg %p144
        %p1089 = pneg %p141
        %s1090 = sand.u32 %s59, 1
        %s1091 = scalar_lea.sflag [#allocation9], %s1090
        %s1092 = sand.u32 %s157, 1
        %s1093 = scalar_lea.vmem [#allocation8], %s1092
        %p1094 = pneg %p170
        %p1095 = pneg %p167
        %p1096 = scmp.lt.s32.totalorder %s64, 1
        %s1097 = scalar_select %p1096, %s64, 1
        %s1098 = smul.addr %s1097, 4
        %s1099 = smul.addr %s1098, 8
        %s1100 = scalar_lea.vmem %s4, %s1099
        %p1101 = pneg %p196
        %p1102 = pneg %p193
        %p1103 = scmp.lt.s32.totalorder %s64, 1
        %s1104 = scalar_select %p1103, %s64, 1
        %s1105 = smul.addr %s1104, 4
        %s1106 = smul.addr %s1105, 8
        %s1107 = scalar_lea.vmem %s5, %s1106
        %p1108 = pneg %p222
        %p1109 = pneg %p219
        %s1110 = sand.u32 %s59, 1
        %s1111 = scalar_lea.sflag [#allocation9], %s1110
        %s1112 = sand.u32 %s235, 1
        %s1113 = scalar_lea.vmem [#allocation10], %s1112
        %p1114 = pneg %p248
        %p1115 = pneg %p245
        %s1116 = sand.u32 %s59, 1
        %s1117 = scalar_lea.sflag [#allocation12], %s1116
        %s1118 = sand.u32 %s261, 1
        %s1119 = scalar_lea.vmem [#allocation11], %s1118
        %p1120 = pneg %p274
        %p1121 = pneg %p271
        %s1122 = sand.u32 %s59, 1
        %s1123 = scalar_lea.sflag [#allocation12], %s1122
        %s1124 = sand.u32 %s287, 1
        %s1125 = scalar_lea.vmem [#allocation13], %s1124
        %p1126 = pneg %p300
        %p1127 = pneg %p297
        %p1128 = scmp.lt.s32.totalorder %s64, 1
        %s1129 = scalar_select %p1128, %s64, 1
        %s1130 = smul.addr %s1129, 4
        %s1131 = smul.addr %s1130, 8
        %s1132 = scalar_lea.vmem %s9, %s1131
        %p1133 = pneg %p326
        %p1134 = pneg %p323
        %s1135 = sand.u32 %s59, 1
        %s1136 = scalar_lea.sflag [#allocation15], %s1135
        %s1137 = sand.u32 %s339, 1
        %s1138 = smul.addr %s1137, 32
        %s1139 = scalar_lea.vmem [#allocation14], %s1138
        %p1140 = pneg %p352
        %p1141 = pneg %p349
        %s1142 = sand.u32 %s59, 1
        %s1143 = scalar_lea.sflag [#allocation15], %s1142
        %s1144 = sand.u32 %s365, 1
        %s1145 = smul.addr %s1144, 32
        %s1146 = scalar_lea.vmem [#allocation16], %s1145
        %p1147 = pneg %p378
        %p1148 = pneg %p375
        %s1149 = sand.u32 %s59, 1
        %s1150 = scalar_lea.sflag [#allocation18], %s1149
        %s1151 = sand.u32 %s391, 1
        %s1152 = scalar_lea.vmem [#allocation17], %s1151
        %p1153 = pneg %p404
        %p1154 = pneg %p401
        %s1155 = sand.u32 %s59, 1
        %s1156 = scalar_lea.sflag [#allocation18], %s1155
        %s1157 = sand.u32 %s417, 1
        %s1158 = scalar_lea.vmem [#allocation19], %s1157
        %p1159 = pneg %p430
        %p1160 = pneg %p427
        %s1161 = sand.u32 %s59, 1
        %s1162 = scalar_lea.sflag [#allocation21], %s1161
        %s1163 = sand.u32 %s443, 1
        %s1164 = scalar_lea.vmem [#allocation20], %s1163
        %p1165 = pneg %p456
        %p1166 = pneg %p453
        %s1167 = sand.u32 %s59, 1
        %s1168 = scalar_lea.sflag [#allocation21], %s1167
        %s1169 = sand.u32 %s469, 1
        %s1170 = smul.addr %s1169, 32
        %s1171 = scalar_lea.vmem [#allocation22], %s1170
        %p1172 = pneg %p482
        %p1173 = pneg %p479
        %s1174 = sand.u32 %s495, 1
        %s1175 = scalar_lea.sflag [#allocation24], %s1174
        %s1176 = sand.u32 %s495, 1
        %s1177 = scalar_lea.vmem [#allocation23], %s1176
        %p1178 = pneg %p508
        %p1179 = pneg %p505
        %p1180 = scmp.lt.s32.totalorder %s64, 1
        %s1181 = scalar_select %p1180, %s64, 1
        %s1182 = smul.addr %s1181, 8
        %s1183 = smul.addr %s1182, 8
        %s1184 = scalar_lea.vmem %s17, %s1183
        %p1185 = pneg %p534
        %p1186 = pneg %p531
        %p1187 = scmp.lt.s32.totalorder %s64, 1
        %s1188 = scalar_select %p1187, %s64, 1
        %s1189 = scalar_lea.vmem %s18, %s1188
        %p1190 = pneg %p560
        %p1191 = pneg %p557
        %p1192 = pneg %p581
        %p1193 = pneg %p578
        %p1194 = pneg %p602
        %p1195 = pneg %p599
        %p1196 = pneg %p628
        %p1197 = pneg %p625
        %s1198 = sand.u32 %s615, 1
        %s1199 = scalar_lea.sflag [#allocation4], %s1198
        %s1200 = sand.u32 %s615, 1
        %s1201 = smul.addr %s1200, 8
        %s1202 = scalar_lea.vmem [#allocation25], %s1201
        %s1203 = smul.u32 2, %s63
        %p1204 = scmp.lt.s32.totalorder %s64, 1
        %s1205 = scalar_select %p1204, %s64, 1
        %s1206 = smul.addr %s1205, 4
        %s1207 = smul.addr %s1206, 8
        %s1208 = scalar_lea.vmem %s4, %s1207
        %p1209 = scmp.lt.s32.totalorder %s64, 1
        %s1210 = scalar_select %p1209, %s64, 1
        %s1211 = smul.addr %s1210, 4
        %s1212 = smul.addr %s1211, 8
        %s1213 = scalar_lea.vmem %s5, %s1212
        %p1214 = scmp.lt.s32.totalorder %s64, 1
        %s1215 = scalar_select %p1214, %s64, 1
        %s1216 = smul.addr %s1215, 4
        %s1217 = smul.addr %s1216, 8
        %s1218 = scalar_lea.vmem %s9, %s1217
        %p1219 = scmp.lt.s32.totalorder %s64, 1
        %s1220 = scalar_select %p1219, %s64, 1
        %s1221 = smul.addr %s1220, 8
        %s1222 = smul.addr %s1221, 8
        %s1223 = scalar_lea.vmem %s17, %s1222
        %p1224 = scmp.lt.s32.totalorder %s64, 1
        %s1225 = scalar_select %p1224, %s64, 1
        %s1226 = scalar_lea.vmem %s18, %s1225
        %p1227 = scmp.eq.s32.totalorder %s64, 1
        %p1228 = scmp.eq.s32.totalorder %s64, 0
        // Predicated region
        $region161: #{tpu_custom_call.1} parent=103 // pred_check
          %p1229 = pneg %p1228
        $region162: #{tpu_custom_call.1} parent=103 // pred_check_branch
          %1231 = sbr.rel (%p1229) target = $region164
        $region163: #{tpu_custom_call.1} parent=103 // pred_region
          %v1232 = vld [vmem:[%s966] sm:$0xff]
          %vm1233 = vcmask 261120
          %1234 = vst.msk [vmem:[%s1202] sm:$0xff] %vm1233, %v1232
        $region164: #{tpu_custom_call.1} parent=103 // pred_fallthru
          _
        %v1235 = vld [vmem:[%s1202] sm:$0xff]
        %v1236 = vld [vmem:[%s957] sm:$0xff]
        %v1237 = vld [vmem:[%s957 + $0x8] sm:$0xff]
        %v1238 = vld [vmem:[%s974] sm:$0x1]
        %v1239 = vld [vmem:[%s982] sm:$0x1]
        %v1240 = vld [vmem:[%s1208] sm:$0xff]
        %v1241 = vld [vmem:[%s1208 + $0x8] sm:$0xff]
        %v1242 = vld [vmem:[%s1208 + $0x10] sm:$0xff]
        %v1243 = vld [vmem:[%s1208 + $0x18] sm:$0xff]
        %v1244 = vld [vmem:[%s1213] sm:$0xff]
        %v1245 = vld [vmem:[%s1213 + $0x8] sm:$0xff]
        %v1246 = vld [vmem:[%s1213 + $0x10] sm:$0xff]
        %v1247 = vld [vmem:[%s1213 + $0x18] sm:$0xff]
        %v1248 = vld [vmem:[%s990] sm:$0x1]
        %v1249 = vld [vmem:[%s998] sm:$0x1]
        %v1250 = vld [vmem:[%s1006] sm:$0x1]
        %v1251 = vld [vmem:[%s1218] sm:$0xff]
        %v1252 = vld [vmem:[%s1218 + $0x8] sm:$0xff]
        %v1253 = vld [vmem:[%s1218 + $0x10] sm:$0xff]
        %v1254 = vld [vmem:[%s1218 + $0x18] sm:$0xff]
        %v1255 = vld [vmem:[%s1015] sm:$0xff]
        %v1256 = vld [vmem:[%s1015 + $0x8] sm:$0xff]
        %v1257 = vld [vmem:[%s1015 + $0x10] sm:$0xff]
        %v1258 = vld [vmem:[%s1015 + $0x18] sm:$0xff]
        %v1259 = vld [vmem:[%s1024] sm:$0xff]
        %v1260 = vld [vmem:[%s1024 + $0x8] sm:$0xff]
        %v1261 = vld [vmem:[%s1024 + $0x10] sm:$0xff]
        %v1262 = vld [vmem:[%s1024 + $0x18] sm:$0xff]
        %v1263 = vld [vmem:[%s1032] sm:$0x1]
        %v1264 = vld [vmem:[%s1040] sm:$0x1]
        %v1265 = vld [vmem:[%s1048] sm:$0x1]
        %v1266 = vld [vmem:[%s1057] sm:$0xff]
        %v1267 = vld [vmem:[%s1057 + $0x8] sm:$0xff]
        %v1268 = vld [vmem:[%s1057 + $0x10] sm:$0xff]
        %v1269 = vld [vmem:[%s1057 + $0x18] sm:$0xff]
        %v1270 = vld [vmem:[%s1065] sm:$0x1]
        %v1271 = vld [vmem:[%s1223] sm:$0xff]
        %v1272 = vld [vmem:[%s1223 + $0x8] sm:$0xff]
        %v1273 = vld [vmem:[%s1223 + $0x10] sm:$0xff]
        %v1274 = vld [vmem:[%s1223 + $0x18] sm:$0xff]
        %v1275 = vld [vmem:[%s1223 + $0x20] sm:$0xff]
        %v1276 = vld [vmem:[%s1223 + $0x28] sm:$0xff]
        %v1277 = vld [vmem:[%s1223 + $0x30] sm:$0xff]
        %v1278 = vld [vmem:[%s1223 + $0x38] sm:$0xff]
        %v1279 = vld [vmem:[%s1226] sm:$0x1]
        %vm1280 = vcmask 261120
        %v1281 = vsel %vm1280, %v1235, 0.0
        %1282 = vadd.xlane.f32.xlu0 %v1281
        %v1283 = vpop.xlane.xlu0 %1282
        %v1284 = vrcp.pop 32.0
        %v1285 = vmul.f32 %v1283, %v1284
        %v1286 = vsub.f32 %v1235, %v1285
        %v1287 = vmul.f32 %v1286, %v1286
        %v1288 = vsel %vm1280, %v1287, 0.0
        %1289 = vadd.xlane.f32.xlu0 %v1288
        %v1290 = vpop.xlane.xlu0 %1289
        %v1291 = vmul.f32 %v1290, %v1284
        %v1292 = vadd.f32 %v1291, 1e-05
        %v1293 = vrsqrt.pop %v1292
        %v1294 = vmul.f32 %v1286, %v1293
        %v1296 = vlaneseq
        %v1297 = vshrl.u32 %v1296, 7
        %v1298 = vsub.s32 0, %v1297
        %v1299 = vrot.slane %v1238, %v1298
        %v1301 = vmul.f32 %v1294, %v1299
        %v1303 = vlaneseq
        %v1304 = vshrl.u32 %v1303, 7
        %v1305 = vsub.s32 0, %v1304
        %v1306 = vrot.slane %v1239, %v1305
        %v1308 = vadd.f32 %v1301, %v1306
        %v1310 = vsel %vm1280, %v1308, 0
        %1312 = vmatprep.subr.mxu0 0.0
        %1313 = vmatpush1.msra.mxu0 %v1240
        %1314 = vmatprep.subr.mxu0 0.0
        %1315 = vmatpush1.msra.mxu0 %v1241
        %1316 = vmatprep.subr.mxu0 0.0
        %1317 = vmatpush1.msra.mxu0 %v1242
        %1318 = vmatprep.subr.mxu0 0.0
        %1319 = vmatpush1.msra.mxu0 %v1243
        %1320 = vmatprep.subr.mxu0 0.0
        %1321 = vmatpush1.msra.mxu0 0.0
        %1322 = vmatprep.subr.mxu0 0.0
        %1323 = vmatpush1.msra.mxu0 0.0
        %1324 = vmatprep.subr.mxu0 0.0
        %1325 = vmatpush1.msra.mxu0 0.0
        %1326 = vmatprep.subr.mxu0 0.0
        %1327 = vmatpush1.msra.mxu0 0.0
        %1328 = vmatprep.subr.mxu0 0.0
        %1329 = vmatpush1.msra.mxu0 0.0
        %1330 = vmatprep.subr.mxu0 0.0
        %1331 = vmatpush1.msra.mxu0 0.0
        %1332 = vmatprep.subr.mxu0 0.0
        %1333 = vmatpush1.msra.mxu0 0.0
        %1334 = vmatprep.subr.mxu0 0.0
        %1335 = vmatpush1.msra.mxu0 0.0
        %1336 = vmatprep.subr.mxu0 0.0
        %1337 = vmatpush1.msra.mxu0 0.0
        %1338 = vmatprep.subr.mxu0 0.0
        %1339 = vmatpush1.msra.mxu0 0.0
        %1340 = vmatprep.subr.mxu0 0.0
        %1341 = vmatpush1.msra.mxu0 0.0
        %1342 = vmatprep.subr.mxu0 0.0
        %1343 = vmatpush1.msra.mxu0 0.0
        %1344 = vmatprep.subr.mxu0 0.0
        %1345 = vmatpush1.msra.mxu0 0.0
        %1346 = vmatprep.subr.mxu0 0.0
        %1347 = vmatpush1.msra.mxu0 0.0
        %1348 = vmatprep.subr.mxu0 0.0
        %1349 = vmatpush1.msra.mxu0 0.0
        %1350 = vmatprep.subr.mxu0 0.0
        %1351 = vmatpush1.msra.mxu0 0.0
        %1352 = vmatprep.subr.mxu0 0.0
        %1353 = vmatpush1.msra.mxu0 0.0
        %1354 = vmatprep.subr.mxu0 0.0
        %1355 = vmatpush1.msra.mxu0 0.0
        %1356 = vmatprep.subr.mxu0 0.0
        %1357 = vmatpush1.msra.mxu0 0.0
        %1358 = vmatprep.subr.mxu0 0.0
        %1359 = vmatpush1.msra.mxu0 0.0
        %1360 = vmatprep.subr.mxu0 0.0
        %1361 = vmatpush1.msra.mxu0 0.0
        %1362 = vmatprep.subr.mxu0 0.0
        %1363 = vmatpush1.msra.mxu0 0.0
        %1364 = vmatprep.subr.mxu0 0.0
        %1365 = vmatpush1.msra.mxu0 0.0
        %1366 = vmatprep.subr.mxu0 0.0
        %1367 = vmatpush1.msra.mxu0 0.0
        %1368 = vmatprep.subr.mxu0 0.0
        %1369 = vmatpush1.msra.mxu0 0.0
        %1370 = vmatprep.subr.mxu0 0.0
        %1371 = vmatpush1.msra.mxu0 0.0
        %1372 = vmatprep.subr.mxu0 0.0
        %1373 = vmatpush1.msra.mxu0 0.0
        %1374 = vmatprep.subr.mxu0 0.0
        %1375 = vmatpush1.msra.mxu0 0.0
        %1376 = vmatprep.mubr.f32.mxu0 0.0
        %1377 = vmatmul.mubr.f32.gmra.mrb[0].mxu0 %v1310
        %v1378 = vpop.f32.mrb[0].mxu0
        %v1379 = vadd.f32 0.0, %v1378
        %v1380 = vpop.f32.mrb[0].mxu0
        %1381 = vdwg.mxu0
        %1383 = vrot.lane.b32.xlu0 %v1379, 112
        %v1384 = vpop.permute.xlu0 %1383
        %v1386 = vcombine.high %v1379, 0.0
        %v1388 = vunpack.c.l.s4 1983009808
        %v1389 = vunpack.c.0.s8 %v1388
        %v1390 = vlaneseq
        %v1391 = vshrl.u32 %v1390, 7
        %v1392 = vsub.s32 %v1389, %v1391
        %v1393 = vrot.slane %v1379, %v1392
        %v1395 = vunpack.c.l.s4 1983009808
        %v1396 = vunpack.c.0.s8 %v1395
        %v1397 = vlaneseq
        %v1398 = vshrl.u32 %v1397, 7
        %v1399 = vsub.s32 %v1396, %v1398
        %v1400 = vrot.slane %v1386, %v1399
        %v1401 = vcombine.high %v1384, 0.0
        %v1403 = vunpack.c.l.s4 1983009808
        %v1404 = vunpack.c.0.s8 %v1403
        %v1405 = vlaneseq
        %v1406 = vshrl.u32 %v1405, 7
        %v1407 = vsub.s32 %v1404, %v1406
        %v1408 = vrot.slane %v1384, %v1407
        %v1410 = vunpack.c.l.s4 1983009808
        %v1411 = vunpack.c.0.s8 %v1410
        %v1412 = vlaneseq
        %v1413 = vshrl.u32 %v1412, 7
        %v1414 = vsub.s32 %v1411, %v1413
        %v1415 = vrot.slane %v1401, %v1414
        %v1416 = vcombine.low %v1393, %v1408
        %v1417 = vcombine.high %v1393, %v1408
        %v1419 = vunpack.c.l.s4 1934713408
        %v1420 = vunpack.c.0.s8 %v1419
        %v1421 = vlaneseq
        %v1422 = vshrl.u32 %v1421, 7
        %v1423 = vsub.s32 %v1420, %v1422
        %v1424 = vrot.slane %v1416, %v1423
        %v1426 = vunpack.c.l.s4 1934713408
        %v1427 = vunpack.c.0.s8 %v1426
        %v1428 = vlaneseq
        %v1429 = vshrl.u32 %v1428, 7
        %v1430 = vsub.s32 %v1427, %v1429
        %v1431 = vrot.slane %v1417, %v1430
        %v1432 = vcombine.low %v1400, %v1415
        %v1433 = vcombine.high %v1400, %v1415
        %v1435 = vunpack.c.l.s4 1934713408
        %v1436 = vunpack.c.0.s8 %v1435
        %v1437 = vlaneseq
        %v1438 = vshrl.u32 %v1437, 7
        %v1439 = vsub.s32 %v1436, %v1438
        %v1440 = vrot.slane %v1432, %v1439
        %v1442 = vunpack.c.l.s4 1934713408
        %v1443 = vunpack.c.0.s8 %v1442
        %v1444 = vlaneseq
        %v1445 = vshrl.u32 %v1444, 7
        %v1446 = vsub.s32 %v1443, %v1445
        %v1447 = vrot.slane %v1433, %v1446
        %v1448 = vcombine.high %v1424, 0.0
        %v1449 = vcombine.high %v1431, 0.0
        %v1450 = vcombine.high %v1440, 0.0
        %v1451 = vcombine.high %v1447, 0.0
        %v1452 = vcombine.low %v1424, %v1431
        %v1454 = vunpack.c.l.s4 1983009808
        %v1455 = vunpack.c.0.s8 %v1454
        %v1456 = vlaneseq
        %v1457 = vshrl.u32 %v1456, 7
        %v1458 = vsub.s32 %v1455, %v1457
        %v1459 = vrot.slane %v1452, %v1458
        %v1460 = vcombine.low %v1448, %v1449
        %v1462 = vunpack.c.l.s4 1983009808
        %v1463 = vunpack.c.0.s8 %v1462
        %v1464 = vlaneseq
        %v1465 = vshrl.u32 %v1464, 7
        %v1466 = vsub.s32 %v1463, %v1465
        %v1467 = vrot.slane %v1460, %v1466
        %v1468 = vcombine.low %v1440, %v1447
        %v1470 = vunpack.c.l.s4 1983009808
        %v1471 = vunpack.c.0.s8 %v1470
        %v1472 = vlaneseq
        %v1473 = vshrl.u32 %v1472, 7
        %v1474 = vsub.s32 %v1471, %v1473
        %v1475 = vrot.slane %v1468, %v1474
        %v1476 = vcombine.low %v1450, %v1451
        %v1478 = vunpack.c.l.s4 1983009808
        %v1479 = vunpack.c.0.s8 %v1478
        %v1480 = vlaneseq
        %v1481 = vshrl.u32 %v1480, 7
        %v1482 = vsub.s32 %v1479, %v1481
        %v1483 = vrot.slane %v1476, %v1482
        %v1484 = vcombine.low %v1459, %v1467
        %v1486 = vunpack.c.l.s4 1934713408
        %v1487 = vunpack.c.0.s8 %v1486
        %v1488 = vlaneseq
        %v1489 = vshrl.u32 %v1488, 7
        %v1490 = vsub.s32 %v1487, %v1489
        %v1491 = vrot.slane %v1484, %v1490
        %v1492 = vcombine.low %v1475, %v1483
        %v1494 = vunpack.c.l.s4 1934713408
        %v1495 = vunpack.c.0.s8 %v1494
        %v1496 = vlaneseq
        %v1497 = vshrl.u32 %v1496, 7
        %v1498 = vsub.s32 %v1495, %v1497
        %v1499 = vrot.slane %v1492, %v1498
        %v1500 = vcombine.low %v1491, %v1499
        %v1501 = vcombine.high %v1491, %v1499
        %1502 = vrot.lane.b32.xlu0 %v1379, 96
        %v1503 = vpop.permute.xlu0 %1502
        %1504 = vrot.lane.b32.xlu0 %v1384, 96
        %v1505 = vpop.permute.xlu0 %1504
        %v1508 = vcombine.high %v1503, 0.0
        %v1510 = vunpack.c.l.s4 1983009808
        %v1511 = vunpack.c.0.s8 %v1510
        %v1512 = vlaneseq
        %v1513 = vshrl.u32 %v1512, 7
        %v1514 = vsub.s32 %v1511, %v1513
        %v1515 = vrot.slane %v1503, %v1514
        %v1517 = vunpack.c.l.s4 1983009808
        %v1518 = vunpack.c.0.s8 %v1517
        %v1519 = vlaneseq
        %v1520 = vshrl.u32 %v1519, 7
        %v1521 = vsub.s32 %v1518, %v1520
        %v1522 = vrot.slane %v1508, %v1521
        %v1523 = vcombine.high %v1505, 0.0
        %v1525 = vunpack.c.l.s4 1983009808
        %v1526 = vunpack.c.0.s8 %v1525
        %v1527 = vlaneseq
        %v1528 = vshrl.u32 %v1527, 7
        %v1529 = vsub.s32 %v1526, %v1528
        %v1530 = vrot.slane %v1505, %v1529
        %v1532 = vunpack.c.l.s4 1983009808
        %v1533 = vunpack.c.0.s8 %v1532
        %v1534 = vlaneseq
        %v1535 = vshrl.u32 %v1534, 7
        %v1536 = vsub.s32 %v1533, %v1535
        %v1537 = vrot.slane %v1523, %v1536
        %v1538 = vcombine.low %v1515, %v1530
        %v1539 = vcombine.high %v1515, %v1530
        %v1541 = vunpack.c.l.s4 1934713408
        %v1542 = vunpack.c.0.s8 %v1541
        %v1543 = vlaneseq
        %v1544 = vshrl.u32 %v1543, 7
        %v1545 = vsub.s32 %v1542, %v1544
        %v1546 = vrot.slane %v1538, %v1545
        %v1548 = vunpack.c.l.s4 1934713408
        %v1549 = vunpack.c.0.s8 %v1548
        %v1550 = vlaneseq
        %v1551 = vshrl.u32 %v1550, 7
        %v1552 = vsub.s32 %v1549, %v1551
        %v1553 = vrot.slane %v1539, %v1552
        %v1554 = vcombine.low %v1522, %v1537
        %v1555 = vcombine.high %v1522, %v1537
        %v1557 = vunpack.c.l.s4 1934713408
        %v1558 = vunpack.c.0.s8 %v1557
        %v1559 = vlaneseq
        %v1560 = vshrl.u32 %v1559, 7
        %v1561 = vsub.s32 %v1558, %v1560
        %v1562 = vrot.slane %v1554, %v1561
        %v1564 = vunpack.c.l.s4 1934713408
        %v1565 = vunpack.c.0.s8 %v1564
        %v1566 = vlaneseq
        %v1567 = vshrl.u32 %v1566, 7
        %v1568 = vsub.s32 %v1565, %v1567
        %v1569 = vrot.slane %v1555, %v1568
        %v1570 = vcombine.high %v1546, 0.0
        %v1571 = vcombine.high %v1553, 0.0
        %v1572 = vcombine.high %v1562, 0.0
        %v1573 = vcombine.high %v1569, 0.0
        %v1574 = vcombine.low %v1546, %v1553
        %v1576 = vunpack.c.l.s4 1983009808
        %v1577 = vunpack.c.0.s8 %v1576
        %v1578 = vlaneseq
        %v1579 = vshrl.u32 %v1578, 7
        %v1580 = vsub.s32 %v1577, %v1579
        %v1581 = vrot.slane %v1574, %v1580
        %v1582 = vcombine.low %v1570, %v1571
        %v1584 = vunpack.c.l.s4 1983009808
        %v1585 = vunpack.c.0.s8 %v1584
        %v1586 = vlaneseq
        %v1587 = vshrl.u32 %v1586, 7
        %v1588 = vsub.s32 %v1585, %v1587
        %v1589 = vrot.slane %v1582, %v1588
        %v1590 = vcombine.low %v1562, %v1569
        %v1592 = vunpack.c.l.s4 1983009808
        %v1593 = vunpack.c.0.s8 %v1592
        %v1594 = vlaneseq
        %v1595 = vshrl.u32 %v1594, 7
        %v1596 = vsub.s32 %v1593, %v1595
        %v1597 = vrot.slane %v1590, %v1596
        %v1598 = vcombine.low %v1572, %v1573
        %v1600 = vunpack.c.l.s4 1983009808
        %v1601 = vunpack.c.0.s8 %v1600
        %v1602 = vlaneseq
        %v1603 = vshrl.u32 %v1602, 7
        %v1604 = vsub.s32 %v1601, %v1603
        %v1605 = vrot.slane %v1598, %v1604
        %v1606 = vcombine.low %v1581, %v1589
        %v1608 = vunpack.c.l.s4 1934713408
        %v1609 = vunpack.c.0.s8 %v1608
        %v1610 = vlaneseq
        %v1611 = vshrl.u32 %v1610, 7
        %v1612 = vsub.s32 %v1609, %v1611
        %v1613 = vrot.slane %v1606, %v1612
        %v1614 = vcombine.low %v1597, %v1605
        %v1616 = vunpack.c.l.s4 1934713408
        %v1617 = vunpack.c.0.s8 %v1616
        %v1618 = vlaneseq
        %v1619 = vshrl.u32 %v1618, 7
        %v1620 = vsub.s32 %v1617, %v1619
        %v1621 = vrot.slane %v1614, %v1620
        %v1622 = vcombine.low %v1613, %v1621
        %v1623 = vcombine.high %v1613, %v1621
        %1624 = vrot.lane.b32.xlu0 %v1379, 64
        %v1625 = vpop.permute.xlu0 %1624
        %1626 = vrot.lane.b32.xlu0 %v1384, 64
        %v1627 = vpop.permute.xlu0 %1626
        %v1630 = vcombine.high %v1625, 0.0
        %v1632 = vunpack.c.l.s4 1983009808
        %v1633 = vunpack.c.0.s8 %v1632
        %v1634 = vlaneseq
        %v1635 = vshrl.u32 %v1634, 7
        %v1636 = vsub.s32 %v1633, %v1635
        %v1637 = vrot.slane %v1625, %v1636
        %v1639 = vunpack.c.l.s4 1983009808
        %v1640 = vunpack.c.0.s8 %v1639
        %v1641 = vlaneseq
        %v1642 = vshrl.u32 %v1641, 7
        %v1643 = vsub.s32 %v1640, %v1642
        %v1644 = vrot.slane %v1630, %v1643
        %v1645 = vcombine.high %v1627, 0.0
        %v1647 = vunpack.c.l.s4 1983009808
        %v1648 = vunpack.c.0.s8 %v1647
        %v1649 = vlaneseq
        %v1650 = vshrl.u32 %v1649, 7
        %v1651 = vsub.s32 %v1648, %v1650
        %v1652 = vrot.slane %v1627, %v1651
        %v1654 = vunpack.c.l.s4 1983009808
        %v1655 = vunpack.c.0.s8 %v1654
        %v1656 = vlaneseq
        %v1657 = vshrl.u32 %v1656, 7
        %v1658 = vsub.s32 %v1655, %v1657
        %v1659 = vrot.slane %v1645, %v1658
        %v1660 = vcombine.low %v1637, %v1652
        %v1661 = vcombine.high %v1637, %v1652
        %v1663 = vunpack.c.l.s4 1934713408
        %v1664 = vunpack.c.0.s8 %v1663
        %v1665 = vlaneseq
        %v1666 = vshrl.u32 %v1665, 7
        %v1667 = vsub.s32 %v1664, %v1666
        %v1668 = vrot.slane %v1660, %v1667
        %v1670 = vunpack.c.l.s4 1934713408
        %v1671 = vunpack.c.0.s8 %v1670
        %v1672 = vlaneseq
        %v1673 = vshrl.u32 %v1672, 7
        %v1674 = vsub.s32 %v1671, %v1673
        %v1675 = vrot.slane %v1661, %v1674
        %v1676 = vcombine.low %v1644, %v1659
        %v1677 = vcombine.high %v1644, %v1659
        %v1679 = vunpack.c.l.s4 1934713408
        %v1680 = vunpack.c.0.s8 %v1679
        %v1681 = vlaneseq
        %v1682 = vshrl.u32 %v1681, 7
        %v1683 = vsub.s32 %v1680, %v1682
        %v1684 = vrot.slane %v1676, %v1683
        %v1686 = vunpack.c.l.s4 1934713408
        %v1687 = vunpack.c.0.s8 %v1686
        %v1688 = vlaneseq
        %v1689 = vshrl.u32 %v1688, 7
        %v1690 = vsub.s32 %v1687, %v1689
        %v1691 = vrot.slane %v1677, %v1690
        %v1692 = vcombine.high %v1668, 0.0
        %v1693 = vcombine.high %v1675, 0.0
        %v1694 = vcombine.high %v1684, 0.0
        %v1695 = vcombine.high %v1691, 0.0
        %v1696 = vcombine.low %v1668, %v1675
        %v1698 = vunpack.c.l.s4 1983009808
        %v1699 = vunpack.c.0.s8 %v1698
        %v1700 = vlaneseq
        %v1701 = vshrl.u32 %v1700, 7
        %v1702 = vsub.s32 %v1699, %v1701
        %v1703 = vrot.slane %v1696, %v1702
        %v1704 = vcombine.low %v1692, %v1693
        %v1706 = vunpack.c.l.s4 1983009808
        %v1707 = vunpack.c.0.s8 %v1706
        %v1708 = vlaneseq
        %v1709 = vshrl.u32 %v1708, 7
        %v1710 = vsub.s32 %v1707, %v1709
        %v1711 = vrot.slane %v1704, %v1710
        %v1712 = vcombine.low %v1684, %v1691
        %v1714 = vunpack.c.l.s4 1983009808
        %v1715 = vunpack.c.0.s8 %v1714
        %v1716 = vlaneseq
        %v1717 = vshrl.u32 %v1716, 7
        %v1718 = vsub.s32 %v1715, %v1717
        %v1719 = vrot.slane %v1712, %v1718
        %v1720 = vcombine.low %v1694, %v1695
        %v1722 = vunpack.c.l.s4 1983009808
        %v1723 = vunpack.c.0.s8 %v1722
        %v1724 = vlaneseq
        %v1725 = vshrl.u32 %v1724, 7
        %v1726 = vsub.s32 %v1723, %v1725
        %v1727 = vrot.slane %v1720, %v1726
        %v1728 = vcombine.low %v1703, %v1711
        %v1730 = vunpack.c.l.s4 1934713408
        %v1731 = vunpack.c.0.s8 %v1730
        %v1732 = vlaneseq
        %v1733 = vshrl.u32 %v1732, 7
        %v1734 = vsub.s32 %v1731, %v1733
        %v1735 = vrot.slane %v1728, %v1734
        %v1736 = vcombine.low %v1719, %v1727
        %v1738 = vunpack.c.l.s4 1934713408
        %v1739 = vunpack.c.0.s8 %v1738
        %v1740 = vlaneseq
        %v1741 = vshrl.u32 %v1740, 7
        %v1742 = vsub.s32 %v1739, %v1741
        %v1743 = vrot.slane %v1736, %v1742
        %v1744 = vcombine.low %v1735, %v1743
        %v1745 = vcombine.high %v1735, %v1743
        %vm1746 = vcmask 130048
        %v1748 = vsel %vm1746, %v1500, 0
        %v1751 = vsel %vm1746, %v1622, 0
        %1753 = vmatprep.subr.mxu0 0.0
        %1754 = vmatpush1.xpose.msra.mxu0 %v1751
        %1755 = vmatprep.subr.mxu0 0.0
        %1756 = vmatpush1.xpose.msra.mxu0 0.0
        %1757 = vmatprep.subr.mxu0 0.0
        %1758 = vmatpush1.xpose.msra.mxu0 0.0
        %1759 = vmatprep.subr.mxu0 0.0
        %1760 = vmatpush1.xpose.msra.mxu0 0.0
        %1761 = vmatprep.subr.mxu0 0.0
        %1762 = vmatpush1.xpose.msra.mxu0 0.0
        %1763 = vmatprep.subr.mxu0 0.0
        %1764 = vmatpush1.xpose.msra.mxu0 0.0
        %1765 = vmatprep.subr.mxu0 0.0
        %1766 = vmatpush1.xpose.msra.mxu0 0.0
        %1767 = vmatprep.subr.mxu0 0.0
        %1768 = vmatpush1.xpose.msra.mxu0 0.0
        %1769 = vmatprep.subr.mxu0 0.0
        %1770 = vmatpush1.xpose.msra.mxu0 0.0
        %1771 = vmatprep.subr.mxu0 0.0
        %1772 = vmatpush1.xpose.msra.mxu0 0.0
        %1773 = vmatprep.subr.mxu0 0.0
        %1774 = vmatpush1.xpose.msra.mxu0 0.0
        %1775 = vmatprep.subr.mxu0 0.0
        %1776 = vmatpush1.xpose.msra.mxu0 0.0
        %1777 = vmatprep.subr.mxu0 0.0
        %1778 = vmatpush1.xpose.msra.mxu0 0.0
        %1779 = vmatprep.subr.mxu0 0.0
        %1780 = vmatpush1.xpose.msra.mxu0 0.0
        %1781 = vmatprep.subr.mxu0 0.0
        %1782 = vmatpush1.xpose.msra.mxu0 0.0
        %1783 = vmatprep.subr.mxu0 0.0
        %1784 = vmatpush1.xpose.msra.mxu0 0.0
        %1785 = vmatprep.subr.mxu0 0.0
        %1786 = vmatpush1.xpose.msra.mxu0 0.0
        %1787 = vmatprep.subr.mxu0 0.0
        %1788 = vmatpush1.xpose.msra.mxu0 0.0
        %1789 = vmatprep.subr.mxu0 0.0
        %1790 = vmatpush1.xpose.msra.mxu0 0.0
        %1791 = vmatprep.subr.mxu0 0.0
        %1792 = vmatpush1.xpose.msra.mxu0 0.0
        %1793 = vmatprep.subr.mxu0 0.0
        %1794 = vmatpush1.xpose.msra.mxu0 0.0
        %1795 = vmatprep.subr.mxu0 0.0
        %1796 = vmatpush1.xpose.msra.mxu0 0.0
        %1797 = vmatprep.subr.mxu0 0.0
        %1798 = vmatpush1.xpose.msra.mxu0 0.0
        %1799 = vmatprep.subr.mxu0 0.0
        %1800 = vmatpush1.xpose.msra.mxu0 0.0
        %1801 = vmatprep.subr.mxu0 0.0
        %1802 = vmatpush1.xpose.msra.mxu0 0.0
        %1803 = vmatprep.subr.mxu0 0.0
        %1804 = vmatpush1.xpose.msra.mxu0 0.0
        %1805 = vmatprep.subr.mxu0 0.0
        %1806 = vmatpush1.xpose.msra.mxu0 0.0
        %1807 = vmatprep.subr.mxu0 0.0
        %1808 = vmatpush1.xpose.msra.mxu0 0.0
        %1809 = vmatprep.subr.mxu0 0.0
        %1810 = vmatpush1.xpose.msra.mxu0 0.0
        %1811 = vmatprep.subr.mxu0 0.0
        %1812 = vmatpush1.xpose.msra.mxu0 0.0
        %1813 = vmatprep.subr.mxu0 0.0
        %1814 = vmatpush1.xpose.msra.mxu0 0.0
        %1815 = vmatprep.subr.mxu0 0.0
        %1816 = vmatpush1.xpose.msra.mxu0 0.0
        %1817 = vmatprep.mubr.f32.mxu0 0.0
        %1818 = vmatmul.mubr.f32.gmra.mrb[0].mxu0 %v1748
        %v1819 = vpop.f32.mrb[0].mxu0
        %v1820 = vadd.f32 0.0, %v1819
        %v1821 = vpop.f32.mrb[0].mxu0
        %1822 = vdwg.mxu0
        %v1824 = vsel %vm1746, %v1501, 0
        %v1827 = vsel %vm1746, %v1623, 0
        %1829 = vmatprep.subr.mxu0 0.0
        %1830 = vmatpush1.xpose.msra.mxu0 %v1827
        %1831 = vmatprep.subr.mxu0 0.0
        %1832 = vmatpush1.xpose.msra.mxu0 0.0
        %1833 = vmatprep.subr.mxu0 0.0
        %1834 = vmatpush1.xpose.msra.mxu0 0.0
        %1835 = vmatprep.subr.mxu0 0.0
        %1836 = vmatpush1.xpose.msra.mxu0 0.0
        %1837 = vmatprep.subr.mxu0 0.0
        %1838 = vmatpush1.xpose.msra.mxu0 0.0
        %1839 = vmatprep.subr.mxu0 0.0
        %1840 = vmatpush1.xpose.msra.mxu0 0.0
        %1841 = vmatprep.subr.mxu0 0.0
        %1842 = vmatpush1.xpose.msra.mxu0 0.0
        %1843 = vmatprep.subr.mxu0 0.0
        %1844 = vmatpush1.xpose.msra.mxu0 0.0
        %1845 = vmatprep.subr.mxu0 0.0
        %1846 = vmatpush1.xpose.msra.mxu0 0.0
        %1847 = vmatprep.subr.mxu0 0.0
        %1848 = vmatpush1.xpose.msra.mxu0 0.0
        %1849 = vmatprep.subr.mxu0 0.0
        %1850 = vmatpush1.xpose.msra.mxu0 0.0
        %1851 = vmatprep.subr.mxu0 0.0
        %1852 = vmatpush1.xpose.msra.mxu0 0.0
        %1853 = vmatprep.subr.mxu0 0.0
        %1854 = vmatpush1.xpose.msra.mxu0 0.0
        %1855 = vmatprep.subr.mxu0 0.0
        %1856 = vmatpush1.xpose.msra.mxu0 0.0
        %1857 = vmatprep.subr.mxu0 0.0
        %1858 = vmatpush1.xpose.msra.mxu0 0.0
        %1859 = vmatprep.subr.mxu0 0.0
        %1860 = vmatpush1.xpose.msra.mxu0 0.0
        %1861 = vmatprep.subr.mxu0 0.0
        %1862 = vmatpush1.xpose.msra.mxu0 0.0
        %1863 = vmatprep.subr.mxu0 0.0
        %1864 = vmatpush1.xpose.msra.mxu0 0.0
        %1865 = vmatprep.subr.mxu0 0.0
        %1866 = vmatpush1.xpose.msra.mxu0 0.0
        %1867 = vmatprep.subr.mxu0 0.0
        %1868 = vmatpush1.xpose.msra.mxu0 0.0
        %1869 = vmatprep.subr.mxu0 0.0
        %1870 = vmatpush1.xpose.msra.mxu0 0.0
        %1871 = vmatprep.subr.mxu0 0.0
        %1872 = vmatpush1.xpose.msra.mxu0 0.0
        %1873 = vmatprep.subr.mxu0 0.0
        %1874 = vmatpush1.xpose.msra.mxu0 0.0
        %1875 = vmatprep.subr.mxu0 0.0
        %1876 = vmatpush1.xpose.msra.mxu0 0.0
        %1877 = vmatprep.subr.mxu0 0.0
        %1878 = vmatpush1.xpose.msra.mxu0 0.0
        %1879 = vmatprep.subr.mxu0 0.0
        %1880 = vmatpush1.xpose.msra.mxu0 0.0
        %1881 = vmatprep.subr.mxu0 0.0
        %1882 = vmatpush1.xpose.msra.mxu0 0.0
        %1883 = vmatprep.subr.mxu0 0.0
        %1884 = vmatpush1.xpose.msra.mxu0 0.0
        %1885 = vmatprep.subr.mxu0 0.0
        %1886 = vmatpush1.xpose.msra.mxu0 0.0
        %1887 = vmatprep.subr.mxu0 0.0
        %1888 = vmatpush1.xpose.msra.mxu0 0.0
        %1889 = vmatprep.subr.mxu0 0.0
        %1890 = vmatpush1.xpose.msra.mxu0 0.0
        %1891 = vmatprep.subr.mxu0 0.0
        %1892 = vmatpush1.xpose.msra.mxu0 0.0
        %1893 = vmatprep.mubr.f32.mxu0 0.0
        %1894 = vmatmul.mubr.f32.gmra.mrb[0].mxu0 %v1824
        %v1895 = vpop.f32.mrb[0].mxu0
        %v1896 = vadd.f32 0.0, %v1895
        %v1897 = vpop.f32.mrb[0].mxu0
        %1898 = vdwg.mxu0
        %v1899 = vmul.f32 %v1820, 0.25
        %v1900 = vmul.f32 %v1896, 0.25
        %vm1901 = vcmask 64512
        %v1902 = vsel %vm1901, %v1899, -inf
        %1903 = vmax.xlane.f32.xlu0 %v1902
        %v1904 = vpop.xlane.xlu0 %1903
        %v1905 = vsel %vm1901, %v1900, -inf
        %1906 = vmax.xlane.f32.xlu0 %v1905
        %v1907 = vpop.xlane.xlu0 %1906
        %v1908 = vsub.f32 %v1899, %v1904
        %v1909 = vsub.f32 %v1900, %v1907
        %v1910 = vmul.f32 %v1908, 1.442695
        %v1911 = vpow.pop %v1910
        %v1912 = vmul.f32 %v1909, 1.442695
        %v1913 = vpow.pop %v1912
        %v1914 = vsel %vm1901, %v1911, 0.0
        %1915 = vadd.xlane.f32.xlu0 %v1914
        %v1916 = vpop.xlane.xlu0 %1915
        %v1917 = vsel %vm1901, %v1913, 0.0
        %1918 = vadd.xlane.f32.xlu0 %v1917
        %v1919 = vpop.xlane.xlu0 %1918
        %v1920 = vrcp.pop %v1916
        %v1921 = vmul.f32 %v1911, %v1920
        %v1922 = vrcp.pop %v1919
        %v1923 = vmul.f32 %v1913, %v1922
        %v1925 = vsel %vm1901, %v1921, 0
        %1927 = vmatprep.subr.mxu0 0.0
        %1928 = vmatpush1.msra.mxu0 %v1744
        %1929 = vmatprep.subr.mxu0 0.0
        %1930 = vmatpush1.msra.mxu0 0.0
        %1931 = vmatprep.subr.mxu0 0.0
        %1932 = vmatpush1.msra.mxu0 0.0
        %1933 = vmatprep.subr.mxu0 0.0
        %1934 = vmatpush1.msra.mxu0 0.0
        %1935 = vmatprep.subr.mxu0 0.0
        %1936 = vmatpush1.msra.mxu0 0.0
        %1937 = vmatprep.subr.mxu0 0.0
        %1938 = vmatpush1.msra.mxu0 0.0
        %1939 = vmatprep.subr.mxu0 0.0
        %1940 = vmatpush1.msra.mxu0 0.0
        %1941 = vmatprep.subr.mxu0 0.0
        %1942 = vmatpush1.msra.mxu0 0.0
        %1943 = vmatprep.subr.mxu0 0.0
        %1944 = vmatpush1.msra.mxu0 0.0
        %1945 = vmatprep.subr.mxu0 0.0
        %1946 = vmatpush1.msra.mxu0 0.0
        %1947 = vmatprep.subr.mxu0 0.0
        %1948 = vmatpush1.msra.mxu0 0.0
        %1949 = vmatprep.subr.mxu0 0.0
        %1950 = vmatpush1.msra.mxu0 0.0
        %1951 = vmatprep.subr.mxu0 0.0
        %1952 = vmatpush1.msra.mxu0 0.0
        %1953 = vmatprep.subr.mxu0 0.0
        %1954 = vmatpush1.msra.mxu0 0.0
        %1955 = vmatprep.subr.mxu0 0.0
        %1956 = vmatpush1.msra.mxu0 0.0
        %1957 = vmatprep.subr.mxu0 0.0
        %1958 = vmatpush1.msra.mxu0 0.0
        %1959 = vmatprep.subr.mxu0 0.0
        %1960 = vmatpush1.msra.mxu0 0.0
        %1961 = vmatprep.subr.mxu0 0.0
        %1962 = vmatpush1.msra.mxu0 0.0
        %1963 = vmatprep.subr.mxu0 0.0
        %1964 = vmatpush1.msra.mxu0 0.0
        %1965 = vmatprep.subr.mxu0 0.0
        %1966 = vmatpush1.msra.mxu0 0.0
        %1967 = vmatprep.subr.mxu0 0.0
        %1968 = vmatpush1.msra.mxu0 0.0
        %1969 = vmatprep.subr.mxu0 0.0
        %1970 = vmatpush1.msra.mxu0 0.0
        %1971 = vmatprep.subr.mxu0 0.0
        %1972 = vmatpush1.msra.mxu0 0.0
        %1973 = vmatprep.subr.mxu0 0.0
        %1974 = vmatpush1.msra.mxu0 0.0
        %1975 = vmatprep.subr.mxu0 0.0
        %1976 = vmatpush1.msra.mxu0 0.0
        %1977 = vmatprep.subr.mxu0 0.0
        %1978 = vmatpush1.msra.mxu0 0.0
        %1979 = vmatprep.subr.mxu0 0.0
        %1980 = vmatpush1.msra.mxu0 0.0
        %1981 = vmatprep.subr.mxu0 0.0
        %1982 = vmatpush1.msra.mxu0 0.0
        %1983 = vmatprep.subr.mxu0 0.0
        %1984 = vmatpush1.msra.mxu0 0.0
        %1985 = vmatprep.subr.mxu0 0.0
        %1986 = vmatpush1.msra.mxu0 0.0
        %1987 = vmatprep.subr.mxu0 0.0
        %1988 = vmatpush1.msra.mxu0 0.0
        %1989 = vmatprep.subr.mxu0 0.0
        %1990 = vmatpush1.msra.mxu0 0.0
        %1991 = vmatprep.mubr.f32.mxu0 0.0
        %1992 = vmatmul.mubr.f32.gmra.mrb[0].mxu0 %v1925
        %v1993 = vpop.f32.mrb[0].mxu0
        %v1994 = vadd.f32 0.0, %v1993
        %v1995 = vpop.f32.mrb[0].mxu0
        %1996 = vdwg.mxu0
        %v1998 = vsel %vm1901, %v1923, 0
        %2000 = vmatprep.subr.mxu0 0.0
        %2001 = vmatpush1.msra.mxu0 %v1745
        %2002 = vmatprep.subr.mxu0 0.0
        %2003 = vmatpush1.msra.mxu0 0.0
        %2004 = vmatprep.subr.mxu0 0.0
        %2005 = vmatpush1.msra.mxu0 0.0
        %2006 = vmatprep.subr.mxu0 0.0
        %2007 = vmatpush1.msra.mxu0 0.0
        %2008 = vmatprep.subr.mxu0 0.0
        %2009 = vmatpush1.msra.mxu0 0.0
        %2010 = vmatprep.subr.mxu0 0.0
        %2011 = vmatpush1.msra.mxu0 0.0
        %2012 = vmatprep.subr.mxu0 0.0
        %2013 = vmatpush1.msra.mxu0 0.0
        %2014 = vmatprep.subr.mxu0 0.0
        %2015 = vmatpush1.msra.mxu0 0.0
        %2016 = vmatprep.subr.mxu0 0.0
        %2017 = vmatpush1.msra.mxu0 0.0
        %2018 = vmatprep.subr.mxu0 0.0
        %2019 = vmatpush1.msra.mxu0 0.0
        %2020 = vmatprep.subr.mxu0 0.0
        %2021 = vmatpush1.msra.mxu0 0.0
        %2022 = vmatprep.subr.mxu0 0.0
        %2023 = vmatpush1.msra.mxu0 0.0
        %2024 = vmatprep.subr.mxu0 0.0
        %2025 = vmatpush1.msra.mxu0 0.0
        %2026 = vmatprep.subr.mxu0 0.0
        %2027 = vmatpush1.msra.mxu0 0.0
        %2028 = vmatprep.subr.mxu0 0.0
        %2029 = vmatpush1.msra.mxu0 0.0
        %2030 = vmatprep.subr.mxu0 0.0
        %2031 = vmatpush1.msra.mxu0 0.0
        %2032 = vmatprep.subr.mxu0 0.0
        %2033 = vmatpush1.msra.mxu0 0.0
        %2034 = vmatprep.subr.mxu0 0.0
        %2035 = vmatpush1.msra.mxu0 0.0
        %2036 = vmatprep.subr.mxu0 0.0
        %2037 = vmatpush1.msra.mxu0 0.0
        %2038 = vmatprep.subr.mxu0 0.0
        %2039 = vmatpush1.msra.mxu0 0.0
        %2040 = vmatprep.subr.mxu0 0.0
        %2041 = vmatpush1.msra.mxu0 0.0
        %2042 = vmatprep.subr.mxu0 0.0
        %2043 = vmatpush1.msra.mxu0 0.0
        %2044 = vmatprep.subr.mxu0 0.0
        %2045 = vmatpush1.msra.mxu0 0.0
        %2046 = vmatprep.subr.mxu0 0.0
        %2047 = vmatpush1.msra.mxu0 0.0
        %2048 = vmatprep.subr.mxu0 0.0
        %2049 = vmatpush1.msra.mxu0 0.0
        %2050 = vmatprep.subr.mxu0 0.0
        %2051 = vmatpush1.msra.mxu0 0.0
        %2052 = vmatprep.subr.mxu0 0.0
        %2053 = vmatpush1.msra.mxu0 0.0
        %2054 = vmatprep.subr.mxu0 0.0
        %2055 = vmatpush1.msra.mxu0 0.0
        %2056 = vmatprep.subr.mxu0 0.0
        %2057 = vmatpush1.msra.mxu0 0.0
        %2058 = vmatprep.subr.mxu0 0.0
        %2059 = vmatpush1.msra.mxu0 0.0
        %2060 = vmatprep.subr.mxu0 0.0
        %2061 = vmatpush1.msra.mxu0 0.0
        %2062 = vmatprep.subr.mxu0 0.0
        %2063 = vmatpush1.msra.mxu0 0.0
        %2064 = vmatprep.mubr.f32.mxu0 0.0
        %2065 = vmatmul.mubr.f32.gmra.mrb[0].mxu0 %v1998
        %v2066 = vpop.f32.mrb[0].mxu0
        %v2067 = vadd.f32 0.0, %v2066
        %v2068 = vpop.f32.mrb[0].mxu0
        %2069 = vdwg.mxu0
        %v2070 = vcombine.high %v1994, 0.0
        %v2072 = vunpack.c.l.s4 1983009808
        %v2073 = vunpack.c.0.s8 %v2072
        %v2074 = vlaneseq
        %v2075 = vshrl.u32 %v2074, 7
        %v2076 = vsub.s32 %v2073, %v2075
        %v2077 = vrot.slane %v1994, %v2076
        %v2079 = vunpack.c.l.s4 1983009808
        %v2080 = vunpack.c.0.s8 %v2079
        %v2081 = vlaneseq
        %v2082 = vshrl.u32 %v2081, 7
        %v2083 = vsub.s32 %v2080, %v2082
        %v2084 = vrot.slane %v2070, %v2083
        %v2085 = vcombine.high %v2067, 0.0
        %v2087 = vunpack.c.l.s4 1983009808
        %v2088 = vunpack.c.0.s8 %v2087
        %v2089 = vlaneseq
        %v2090 = vshrl.u32 %v2089, 7
        %v2091 = vsub.s32 %v2088, %v2090
        %v2092 = vrot.slane %v2067, %v2091
        %v2094 = vunpack.c.l.s4 1983009808
        %v2095 = vunpack.c.0.s8 %v2094
        %v2096 = vlaneseq
        %v2097 = vshrl.u32 %v2096, 7
        %v2098 = vsub.s32 %v2095, %v2097
        %v2099 = vrot.slane %v2085, %v2098
        %v2100 = vcombine.low %v2077, %v2092
        %v2101 = vcombine.high %v2077, %v2092
        %v2103 = vunpack.c.l.s4 1934713408
        %v2104 = vunpack.c.0.s8 %v2103
        %v2105 = vlaneseq
        %v2106 = vshrl.u32 %v2105, 7
        %v2107 = vsub.s32 %v2104, %v2106
        %v2108 = vrot.slane %v2100, %v2107
        %v2110 = vunpack.c.l.s4 1934713408
        %v2111 = vunpack.c.0.s8 %v2110
        %v2112 = vlaneseq
        %v2113 = vshrl.u32 %v2112, 7
        %v2114 = vsub.s32 %v2111, %v2113
        %v2115 = vrot.slane %v2101, %v2114
        %v2116 = vcombine.low %v2084, %v2099
        %v2117 = vcombine.high %v2084, %v2099
        %v2119 = vunpack.c.l.s4 1934713408
        %v2120 = vunpack.c.0.s8 %v2119
        %v2121 = vlaneseq
        %v2122 = vshrl.u32 %v2121, 7
        %v2123 = vsub.s32 %v2120, %v2122
        %v2124 = vrot.slane %v2116, %v2123
        %v2126 = vunpack.c.l.s4 1934713408
        %v2127 = vunpack.c.0.s8 %v2126
        %v2128 = vlaneseq
        %v2129 = vshrl.u32 %v2128, 7
        %v2130 = vsub.s32 %v2127, %v2129
        %v2131 = vrot.slane %v2117, %v2130
        %v2132 = vcombine.high %v2108, 0.0
        %v2133 = vcombine.high %v2115, 0.0
        %v2134 = vcombine.high %v2124, 0.0
        %v2135 = vcombine.high %v2131, 0.0
        %v2136 = vcombine.low %v2108, %v2115
        %v2138 = vunpack.c.l.s4 1983009808
        %v2139 = vunpack.c.0.s8 %v2138
        %v2140 = vlaneseq
        %v2141 = vshrl.u32 %v2140, 7
        %v2142 = vsub.s32 %v2139, %v2141
        %v2143 = vrot.slane %v2136, %v2142
        %v2144 = vcombine.low %v2132, %v2133
        %v2146 = vunpack.c.l.s4 1983009808
        %v2147 = vunpack.c.0.s8 %v2146
        %v2148 = vlaneseq
        %v2149 = vshrl.u32 %v2148, 7
        %v2150 = vsub.s32 %v2147, %v2149
        %v2151 = vrot.slane %v2144, %v2150
        %v2152 = vcombine.low %v2124, %v2131
        %v2154 = vunpack.c.l.s4 1983009808
        %v2155 = vunpack.c.0.s8 %v2154
        %v2156 = vlaneseq
        %v2157 = vshrl.u32 %v2156, 7
        %v2158 = vsub.s32 %v2155, %v2157
        %v2159 = vrot.slane %v2152, %v2158
        %v2160 = vcombine.low %v2134, %v2135
        %v2162 = vunpack.c.l.s4 1983009808
        %v2163 = vunpack.c.0.s8 %v2162
        %v2164 = vlaneseq
        %v2165 = vshrl.u32 %v2164, 7
        %v2166 = vsub.s32 %v2163, %v2165
        %v2167 = vrot.slane %v2160, %v2166
        %v2168 = vcombine.low %v2143, %v2151
        %v2170 = vunpack.c.l.s4 1934713408
        %v2171 = vunpack.c.0.s8 %v2170
        %v2172 = vlaneseq
        %v2173 = vshrl.u32 %v2172, 7
        %v2174 = vsub.s32 %v2171, %v2173
        %v2175 = vrot.slane %v2168, %v2174
        %v2176 = vcombine.low %v2159, %v2167
        %v2178 = vunpack.c.l.s4 1934713408
        %v2179 = vunpack.c.0.s8 %v2178
        %v2180 = vlaneseq
        %v2181 = vshrl.u32 %v2180, 7
        %v2182 = vsub.s32 %v2179, %v2181
        %v2183 = vrot.slane %v2176, %v2182
        %v2184 = vcombine.low %v2175, %v2183
        %v2185 = vcombine.high %v2175, %v2183
        %2187 = vrot.lane.b32.xlu0 %v2185, 16
        %v2188 = vpop.permute.xlu0 %2187
        %v2190 = vsel %vm1746, %v2184, %v2188
        %v2192 = vlaneseq
        %v2193 = vshrl.u32 %v2192, 7
        %v2194 = vsub.s32 0, %v2193
        %v2195 = vrot.slane %v1248, %v2194
        %v2198 = vsel %vm1280, %v2190, 0
        %2200 = vmatprep.subr.mxu0 0.0
        %2201 = vmatpush1.msra.mxu0 %v1244
        %2202 = vmatprep.subr.mxu0 0.0
        %2203 = vmatpush1.msra.mxu0 %v1245
        %2204 = vmatprep.subr.mxu0 0.0
        %2205 = vmatpush1.msra.mxu0 %v1246
        %2206 = vmatprep.subr.mxu0 0.0
        %2207 = vmatpush1.msra.mxu0 %v1247
        %2208 = vmatprep.subr.mxu0 0.0
        %2209 = vmatpush1.msra.mxu0 0.0
        %2210 = vmatprep.subr.mxu0 0.0
        %2211 = vmatpush1.msra.mxu0 0.0
        %2212 = vmatprep.subr.mxu0 0.0
        %2213 = vmatpush1.msra.mxu0 0.0
        %2214 = vmatprep.subr.mxu0 0.0
        %2215 = vmatpush1.msra.mxu0 0.0
        %2216 = vmatprep.subr.mxu0 0.0
        %2217 = vmatpush1.msra.mxu0 0.0
        %2218 = vmatprep.subr.mxu0 0.0
        %2219 = vmatpush1.msra.mxu0 0.0
        %2220 = vmatprep.subr.mxu0 0.0
        %2221 = vmatpush1.msra.mxu0 0.0
        %2222 = vmatprep.subr.mxu0 0.0
        %2223 = vmatpush1.msra.mxu0 0.0
        %2224 = vmatprep.subr.mxu0 0.0
        %2225 = vmatpush1.msra.mxu0 0.0
        %2226 = vmatprep.subr.mxu0 0.0
        %2227 = vmatpush1.msra.mxu0 0.0
        %2228 = vmatprep.subr.mxu0 0.0
        %2229 = vmatpush1.msra.mxu0 0.0
        %2230 = vmatprep.subr.mxu0 0.0
        %2231 = vmatpush1.msra.mxu0 0.0
        %2232 = vmatprep.subr.mxu0 0.0
        %2233 = vmatpush1.msra.mxu0 0.0
        %2234 = vmatprep.subr.mxu0 0.0
        %2235 = vmatpush1.msra.mxu0 0.0
        %2236 = vmatprep.subr.mxu0 0.0
        %2237 = vmatpush1.msra.mxu0 0.0
        %2238 = vmatprep.subr.mxu0 0.0
        %2239 = vmatpush1.msra.mxu0 0.0
        %2240 = vmatprep.subr.mxu0 0.0
        %2241 = vmatpush1.msra.mxu0 0.0
        %2242 = vmatprep.subr.mxu0 0.0
        %2243 = vmatpush1.msra.mxu0 0.0
        %2244 = vmatprep.subr.mxu0 0.0
        %2245 = vmatpush1.msra.mxu0 0.0
        %2246 = vmatprep.subr.mxu0 0.0
        %2247 = vmatpush1.msra.mxu0 0.0
        %2248 = vmatprep.subr.mxu0 0.0
        %2249 = vmatpush1.msra.mxu0 0.0
        %2250 = vmatprep.subr.mxu0 0.0
        %2251 = vmatpush1.msra.mxu0 0.0
        %2252 = vmatprep.subr.mxu0 0.0
        %2253 = vmatpush1.msra.mxu0 0.0
        %2254 = vmatprep.subr.mxu0 0.0
        %2255 = vmatpush1.msra.mxu0 0.0
        %2256 = vmatprep.subr.mxu0 0.0
        %2257 = vmatpush1.msra.mxu0 0.0
        %2258 = vmatprep.subr.mxu0 0.0
        %2259 = vmatpush1.msra.mxu0 0.0
        %2260 = vmatprep.subr.mxu0 0.0
        %2261 = vmatpush1.msra.mxu0 0.0
        %2262 = vmatprep.subr.mxu0 0.0
        %2263 = vmatpush1.msra.mxu0 0.0
        %2264 = vmatprep.mubr.f32.mxu0 0.0
        %2265 = vmatmul.mubr.f32.gmra.mrb[0].mxu0 %v2198
        %v2266 = vpop.f32.mrb[0].mxu0
        %v2267 = vadd.f32 %v2195, %v2266
        %v2268 = vpop.f32.mrb[0].mxu0
        %2269 = vdwg.mxu0
        %v2270 = vadd.f32 %v2267, %v1235
        %v2271 = vsel %vm1280, %v2270, 0.0
        %2272 = vadd.xlane.f32.xlu0 %v2271
        %v2273 = vpop.xlane.xlu0 %2272
        %v2274 = vmul.f32 %v2273, %v1284
        %v2275 = vsub.f32 %v2270, %v2274
        %v2276 = vmul.f32 %v2275, %v2275
        %v2277 = vsel %vm1280, %v2276, 0.0
        %2278 = vadd.xlane.f32.xlu0 %v2277
        %v2279 = vpop.xlane.xlu0 %2278
        %v2280 = vmul.f32 %v2279, %v1284
        %v2281 = vadd.f32 %v2280, 1e-05
        %v2282 = vrsqrt.pop %v2281
        %v2283 = vmul.f32 %v2275, %v2282
        %v2285 = vlaneseq
        %v2286 = vshrl.u32 %v2285, 7
        %v2287 = vsub.s32 0, %v2286
        %v2288 = vrot.slane %v1249, %v2287
        %v2290 = vmul.f32 %v2283, %v2288
        %v2292 = vlaneseq
        %v2293 = vshrl.u32 %v2292, 7
        %v2294 = vsub.s32 0, %v2293
        %v2295 = vrot.slane %v1250, %v2294
        %v2297 = vadd.f32 %v2290, %v2295
        %v2299 = vsel %vm1280, %v2297, 0
        %2301 = vmatprep.subr.mxu0 0.0
        %2302 = vmatpush1.msra.mxu0 %v1251
        %2303 = vmatprep.subr.mxu0 0.0
        %2304 = vmatpush1.msra.mxu0 %v1252
        %2305 = vmatprep.subr.mxu0 0.0
        %2306 = vmatpush1.msra.mxu0 %v1253
        %2307 = vmatprep.subr.mxu0 0.0
        %2308 = vmatpush1.msra.mxu0 %v1254
        %2309 = vmatprep.subr.mxu0 0.0
        %2310 = vmatpush1.msra.mxu0 0.0
        %2311 = vmatprep.subr.mxu0 0.0
        %2312 = vmatpush1.msra.mxu0 0.0
        %2313 = vmatprep.subr.mxu0 0.0
        %2314 = vmatpush1.msra.mxu0 0.0
        %2315 = vmatprep.subr.mxu0 0.0
        %2316 = vmatpush1.msra.mxu0 0.0
        %2317 = vmatprep.subr.mxu0 0.0
        %2318 = vmatpush1.msra.mxu0 0.0
        %2319 = vmatprep.subr.mxu0 0.0
        %2320 = vmatpush1.msra.mxu0 0.0
        %2321 = vmatprep.subr.mxu0 0.0
        %2322 = vmatpush1.msra.mxu0 0.0
        %2323 = vmatprep.subr.mxu0 0.0
        %2324 = vmatpush1.msra.mxu0 0.0
        %2325 = vmatprep.subr.mxu0 0.0
        %2326 = vmatpush1.msra.mxu0 0.0
        %2327 = vmatprep.subr.mxu0 0.0
        %2328 = vmatpush1.msra.mxu0 0.0
        %2329 = vmatprep.subr.mxu0 0.0
        %2330 = vmatpush1.msra.mxu0 0.0
        %2331 = vmatprep.subr.mxu0 0.0
        %2332 = vmatpush1.msra.mxu0 0.0
        %2333 = vmatprep.subr.mxu0 0.0
        %2334 = vmatpush1.msra.mxu0 0.0
        %2335 = vmatprep.subr.mxu0 0.0
        %2336 = vmatpush1.msra.mxu0 0.0
        %2337 = vmatprep.subr.mxu0 0.0
        %2338 = vmatpush1.msra.mxu0 0.0
        %2339 = vmatprep.subr.mxu0 0.0
        %2340 = vmatpush1.msra.mxu0 0.0
        %2341 = vmatprep.subr.mxu0 0.0
        %2342 = vmatpush1.msra.mxu0 0.0
        %2343 = vmatprep.subr.mxu0 0.0
        %2344 = vmatpush1.msra.mxu0 0.0
        %2345 = vmatprep.subr.mxu0 0.0
        %2346 = vmatpush1.msra.mxu0 0.0
        %2347 = vmatprep.subr.mxu0 0.0
        %2348 = vmatpush1.msra.mxu0 0.0
        %2349 = vmatprep.subr.mxu0 0.0
        %2350 = vmatpush1.msra.mxu0 0.0
        %2351 = vmatprep.subr.mxu0 0.0
        %2352 = vmatpush1.msra.mxu0 0.0
        %2353 = vmatprep.subr.mxu0 0.0
        %2354 = vmatpush1.msra.mxu0 0.0
        %2355 = vmatprep.subr.mxu0 0.0
        %2356 = vmatpush1.msra.mxu0 0.0
        %2357 = vmatprep.subr.mxu0 0.0
        %2358 = vmatpush1.msra.mxu0 0.0
        %2359 = vmatprep.subr.mxu0 0.0
        %2360 = vmatpush1.msra.mxu0 0.0
        %2361 = vmatprep.subr.mxu0 0.0
        %2362 = vmatpush1.msra.mxu0 0.0
        %2363 = vmatprep.subr.mxu0 0.0
        %2364 = vmatpush1.msra.mxu0 0.0
        %2365 = vmatprep.mubr.f32.mxu0 0.0
        %2366 = vmatmul.mubr.f32.gmra.mrb[0].mxu0 %v2299
        %v2367 = vpop.f32.mrb[0].mxu0
        %v2368 = vadd.f32 0.0, %v2367
        %v2369 = vpop.f32.mrb[0].mxu0
        %2370 = vdwg.mxu0
        %v2372 = vsel %vm1280, %v1236, 0
        %v2375 = vsel %vm1280, %v1237, 0
        %2377 = vmatprep.subr.mxu0 0.0
        %2378 = vmatpush1.msra.mxu0 %v1255
        %2379 = vmatprep.subr.mxu0 0.0
        %2380 = vmatpush1.msra.mxu0 %v1256
        %2381 = vmatprep.subr.mxu0 0.0
        %2382 = vmatpush1.msra.mxu0 %v1257
        %2383 = vmatprep.subr.mxu0 0.0
        %2384 = vmatpush1.msra.mxu0 %v1258
        %2385 = vmatprep.subr.mxu0 0.0
        %2386 = vmatpush1.msra.mxu0 0.0
        %2387 = vmatprep.subr.mxu0 0.0
        %2388 = vmatpush1.msra.mxu0 0.0
        %2389 = vmatprep.subr.mxu0 0.0
        %2390 = vmatpush1.msra.mxu0 0.0
        %2391 = vmatprep.subr.mxu0 0.0
        %2392 = vmatpush1.msra.mxu0 0.0
        %2393 = vmatprep.subr.mxu0 0.0
        %2394 = vmatpush1.msra.mxu0 0.0
        %2395 = vmatprep.subr.mxu0 0.0
        %2396 = vmatpush1.msra.mxu0 0.0
        %2397 = vmatprep.subr.mxu0 0.0
        %2398 = vmatpush1.msra.mxu0 0.0
        %2399 = vmatprep.subr.mxu0 0.0
        %2400 = vmatpush1.msra.mxu0 0.0
        %2401 = vmatprep.subr.mxu0 0.0
        %2402 = vmatpush1.msra.mxu0 0.0
        %2403 = vmatprep.subr.mxu0 0.0
        %2404 = vmatpush1.msra.mxu0 0.0
        %2405 = vmatprep.subr.mxu0 0.0
        %2406 = vmatpush1.msra.mxu0 0.0
        %2407 = vmatprep.subr.mxu0 0.0
        %2408 = vmatpush1.msra.mxu0 0.0
        %2409 = vmatprep.subr.mxu0 0.0
        %2410 = vmatpush1.msra.mxu0 0.0
        %2411 = vmatprep.subr.mxu0 0.0
        %2412 = vmatpush1.msra.mxu0 0.0
        %2413 = vmatprep.subr.mxu0 0.0
        %2414 = vmatpush1.msra.mxu0 0.0
        %2415 = vmatprep.subr.mxu0 0.0
        %2416 = vmatpush1.msra.mxu0 0.0
        %2417 = vmatprep.subr.mxu0 0.0
        %2418 = vmatpush1.msra.mxu0 0.0
        %2419 = vmatprep.subr.mxu0 0.0
        %2420 = vmatpush1.msra.mxu0 0.0
        %2421 = vmatprep.subr.mxu0 0.0
        %2422 = vmatpush1.msra.mxu0 0.0
        %2423 = vmatprep.subr.mxu0 0.0
        %2424 = vmatpush1.msra.mxu0 0.0
        %2425 = vmatprep.subr.mxu0 0.0
        %2426 = vmatpush1.msra.mxu0 0.0
        %2427 = vmatprep.subr.mxu0 0.0
        %2428 = vmatpush1.msra.mxu0 0.0
        %2429 = vmatprep.subr.mxu0 0.0
        %2430 = vmatpush1.msra.mxu0 0.0
        %2431 = vmatprep.subr.mxu0 0.0
        %2432 = vmatpush1.msra.mxu0 0.0
        %2433 = vmatprep.subr.mxu0 0.0
        %2434 = vmatpush1.msra.mxu0 0.0
        %2435 = vmatprep.subr.mxu0 0.0
        %2436 = vmatpush1.msra.mxu0 0.0
        %2437 = vmatprep.subr.mxu0 0.0
        %2438 = vmatpush1.msra.mxu0 0.0
        %2439 = vmatprep.subr.mxu0 0.0
        %2440 = vmatpush1.msra.mxu0 0.0
        %2441 = vmatprep.mubr.f32.mxu0 0.0
        %2442 = vmatmul.mubr.f32.gmra.mrb[0].mxu0 %v2372
        %v2443 = vpop.f32.mrb[0].mxu0
        %v2444 = vadd.f32 0.0, %v2443
        %v2445 = vpop.f32.mrb[0].mxu0
        %2446 = vmatprep.mubr.f32.mxu0 0.0
        %2447 = vmatmul.mubr.f32.gmra.mrb[0].mxu0 %v2375
        %v2448 = vpop.f32.mrb[0].mxu0
        %v2449 = vadd.f32 0.0, %v2448
        %v2450 = vpop.f32.mrb[0].mxu0
        %2451 = vdwg.mxu0
        %2453 = vrot.lane.b32.xlu0 %v2368, 112
        %v2454 = vpop.permute.xlu0 %2453
        %v2456 = vcombine.high %v2368, 0.0
        %v2458 = vunpack.c.l.s4 1983009808
        %v2459 = vunpack.c.0.s8 %v2458
        %v2460 = vlaneseq
        %v2461 = vshrl.u32 %v2460, 7
        %v2462 = vsub.s32 %v2459, %v2461
        %v2463 = vrot.slane %v2368, %v2462
        %v2465 = vunpack.c.l.s4 1983009808
        %v2466 = vunpack.c.0.s8 %v2465
        %v2467 = vlaneseq
        %v2468 = vshrl.u32 %v2467, 7
        %v2469 = vsub.s32 %v2466, %v2468
        %v2470 = vrot.slane %v2456, %v2469
        %v2471 = vcombine.high %v2454, 0.0
        %v2473 = vunpack.c.l.s4 1983009808
        %v2474 = vunpack.c.0.s8 %v2473
        %v2475 = vlaneseq
        %v2476 = vshrl.u32 %v2475, 7
        %v2477 = vsub.s32 %v2474, %v2476
        %v2478 = vrot.slane %v2454, %v2477
        %v2480 = vunpack.c.l.s4 1983009808
        %v2481 = vunpack.c.0.s8 %v2480
        %v2482 = vlaneseq
        %v2483 = vshrl.u32 %v2482, 7
        %v2484 = vsub.s32 %v2481, %v2483
        %v2485 = vrot.slane %v2471, %v2484
        %v2486 = vcombine.low %v2463, %v2478
        %v2487 = vcombine.high %v2463, %v2478
        %v2489 = vunpack.c.l.s4 1934713408
        %v2490 = vunpack.c.0.s8 %v2489
        %v2491 = vlaneseq
        %v2492 = vshrl.u32 %v2491, 7
        %v2493 = vsub.s32 %v2490, %v2492
        %v2494 = vrot.slane %v2486, %v2493
        %v2496 = vunpack.c.l.s4 1934713408
        %v2497 = vunpack.c.0.s8 %v2496
        %v2498 = vlaneseq
        %v2499 = vshrl.u32 %v2498, 7
        %v2500 = vsub.s32 %v2497, %v2499
        %v2501 = vrot.slane %v2487, %v2500
        %v2502 = vcombine.low %v2470, %v2485
        %v2503 = vcombine.high %v2470, %v2485
        %v2505 = vunpack.c.l.s4 1934713408
        %v2506 = vunpack.c.0.s8 %v2505
        %v2507 = vlaneseq
        %v2508 = vshrl.u32 %v2507, 7
        %v2509 = vsub.s32 %v2506, %v2508
        %v2510 = vrot.slane %v2502, %v2509
        %v2512 = vunpack.c.l.s4 1934713408
        %v2513 = vunpack.c.0.s8 %v2512
        %v2514 = vlaneseq
        %v2515 = vshrl.u32 %v2514, 7
        %v2516 = vsub.s32 %v2513, %v2515
        %v2517 = vrot.slane %v2503, %v2516
        %v2518 = vcombine.high %v2494, 0.0
        %v2519 = vcombine.high %v2501, 0.0
        %v2520 = vcombine.high %v2510, 0.0
        %v2521 = vcombine.high %v2517, 0.0
        %v2522 = vcombine.low %v2494, %v2501
        %v2524 = vunpack.c.l.s4 1983009808
        %v2525 = vunpack.c.0.s8 %v2524
        %v2526 = vlaneseq
        %v2527 = vshrl.u32 %v2526, 7
        %v2528 = vsub.s32 %v2525, %v2527
        %v2529 = vrot.slane %v2522, %v2528
        %v2530 = vcombine.low %v2518, %v2519
        %v2532 = vunpack.c.l.s4 1983009808
        %v2533 = vunpack.c.0.s8 %v2532
        %v2534 = vlaneseq
        %v2535 = vshrl.u32 %v2534, 7
        %v2536 = vsub.s32 %v2533, %v2535
        %v2537 = vrot.slane %v2530, %v2536
        %v2538 = vcombine.low %v2510, %v2517
        %v2540 = vunpack.c.l.s4 1983009808
        %v2541 = vunpack.c.0.s8 %v2540
        %v2542 = vlaneseq
        %v2543 = vshrl.u32 %v2542, 7
        %v2544 = vsub.s32 %v2541, %v2543
        %v2545 = vrot.slane %v2538, %v2544
        %v2546 = vcombine.low %v2520, %v2521
        %v2548 = vunpack.c.l.s4 1983009808
        %v2549 = vunpack.c.0.s8 %v2548
        %v2550 = vlaneseq
        %v2551 = vshrl.u32 %v2550, 7
        %v2552 = vsub.s32 %v2549, %v2551
        %v2553 = vrot.slane %v2546, %v2552
        %v2554 = vcombine.low %v2529, %v2537
        %v2556 = vunpack.c.l.s4 1934713408
        %v2557 = vunpack.c.0.s8 %v2556
        %v2558 = vlaneseq
        %v2559 = vshrl.u32 %v2558, 7
        %v2560 = vsub.s32 %v2557, %v2559
        %v2561 = vrot.slane %v2554, %v2560
        %v2562 = vcombine.low %v2545, %v2553
        %v2564 = vunpack.c.l.s4 1934713408
        %v2565 = vunpack.c.0.s8 %v2564
        %v2566 = vlaneseq
        %v2567 = vshrl.u32 %v2566, 7
        %v2568 = vsub.s32 %v2565, %v2567
        %v2569 = vrot.slane %v2562, %v2568
        %v2570 = vcombine.low %v2561, %v2569
        %v2571 = vcombine.high %v2561, %v2569
        %2574 = vrot.lane.b32.xlu0 %v2444, 112
        %v2575 = vpop.permute.xlu0 %2574
        %2576 = vrot.lane.b32.xlu0 %v2449, 112
        %v2577 = vpop.permute.xlu0 %2576
        %v2580 = vcombine.high %v2444, 0.0
        %v2582 = vunpack.c.l.s4 1983009808
        %v2583 = vunpack.c.0.s8 %v2582
        %v2584 = vlaneseq
        %v2585 = vshrl.u32 %v2584, 7
        %v2586 = vsub.s32 %v2583, %v2585
        %v2587 = vrot.slane %v2444, %v2586
        %v2589 = vunpack.c.l.s4 1983009808
        %v2590 = vunpack.c.0.s8 %v2589
        %v2591 = vlaneseq
        %v2592 = vshrl.u32 %v2591, 7
        %v2593 = vsub.s32 %v2590, %v2592
        %v2594 = vrot.slane %v2580, %v2593
        %v2595 = vcombine.high %v2575, 0.0
        %v2597 = vunpack.c.l.s4 1983009808
        %v2598 = vunpack.c.0.s8 %v2597
        %v2599 = vlaneseq
        %v2600 = vshrl.u32 %v2599, 7
        %v2601 = vsub.s32 %v2598, %v2600
        %v2602 = vrot.slane %v2575, %v2601
        %v2604 = vunpack.c.l.s4 1983009808
        %v2605 = vunpack.c.0.s8 %v2604
        %v2606 = vlaneseq
        %v2607 = vshrl.u32 %v2606, 7
        %v2608 = vsub.s32 %v2605, %v2607
        %v2609 = vrot.slane %v2595, %v2608
        %v2610 = vcombine.low %v2587, %v2602
        %v2611 = vcombine.high %v2587, %v2602
        %v2613 = vunpack.c.l.s4 1934713408
        %v2614 = vunpack.c.0.s8 %v2613
        %v2615 = vlaneseq
        %v2616 = vshrl.u32 %v2615, 7
        %v2617 = vsub.s32 %v2614, %v2616
        %v2618 = vrot.slane %v2610, %v2617
        %v2620 = vunpack.c.l.s4 1934713408
        %v2621 = vunpack.c.0.s8 %v2620
        %v2622 = vlaneseq
        %v2623 = vshrl.u32 %v2622, 7
        %v2624 = vsub.s32 %v2621, %v2623
        %v2625 = vrot.slane %v2611, %v2624
        %v2626 = vcombine.low %v2594, %v2609
        %v2627 = vcombine.high %v2594, %v2609
        %v2629 = vunpack.c.l.s4 1934713408
        %v2630 = vunpack.c.0.s8 %v2629
        %v2631 = vlaneseq
        %v2632 = vshrl.u32 %v2631, 7
        %v2633 = vsub.s32 %v2630, %v2632
        %v2634 = vrot.slane %v2626, %v2633
        %v2636 = vunpack.c.l.s4 1934713408
        %v2637 = vunpack.c.0.s8 %v2636
        %v2638 = vlaneseq
        %v2639 = vshrl.u32 %v2638, 7
        %v2640 = vsub.s32 %v2637, %v2639
        %v2641 = vrot.slane %v2627, %v2640
        %v2642 = vcombine.high %v2618, 0.0
        %v2643 = vcombine.high %v2625, 0.0
        %v2644 = vcombine.high %v2634, 0.0
        %v2645 = vcombine.high %v2641, 0.0
        %v2646 = vcombine.high %v2449, 0.0
        %v2648 = vunpack.c.l.s4 1983009808
        %v2649 = vunpack.c.0.s8 %v2648
        %v2650 = vlaneseq
        %v2651 = vshrl.u32 %v2650, 7
        %v2652 = vsub.s32 %v2649, %v2651
        %v2653 = vrot.slane %v2449, %v2652
        %v2655 = vunpack.c.l.s4 1983009808
        %v2656 = vunpack.c.0.s8 %v2655
        %v2657 = vlaneseq
        %v2658 = vshrl.u32 %v2657, 7
        %v2659 = vsub.s32 %v2656, %v2658
        %v2660 = vrot.slane %v2646, %v2659
        %v2661 = vcombine.high %v2577, 0.0
        %v2663 = vunpack.c.l.s4 1983009808
        %v2664 = vunpack.c.0.s8 %v2663
        %v2665 = vlaneseq
        %v2666 = vshrl.u32 %v2665, 7
        %v2667 = vsub.s32 %v2664, %v2666
        %v2668 = vrot.slane %v2577, %v2667
        %v2670 = vunpack.c.l.s4 1983009808
        %v2671 = vunpack.c.0.s8 %v2670
        %v2672 = vlaneseq
        %v2673 = vshrl.u32 %v2672, 7
        %v2674 = vsub.s32 %v2671, %v2673
        %v2675 = vrot.slane %v2661, %v2674
        %v2676 = vcombine.low %v2653, %v2668
        %v2677 = vcombine.high %v2653, %v2668
        %v2679 = vunpack.c.l.s4 1934713408
        %v2680 = vunpack.c.0.s8 %v2679
        %v2681 = vlaneseq
        %v2682 = vshrl.u32 %v2681, 7
        %v2683 = vsub.s32 %v2680, %v2682
        %v2684 = vrot.slane %v2676, %v2683
        %v2686 = vunpack.c.l.s4 1934713408
        %v2687 = vunpack.c.0.s8 %v2686
        %v2688 = vlaneseq
        %v2689 = vshrl.u32 %v2688, 7
        %v2690 = vsub.s32 %v2687, %v2689
        %v2691 = vrot.slane %v2677, %v2690
        %v2692 = vcombine.low %v2660, %v2675
        %v2693 = vcombine.high %v2660, %v2675
        %v2695 = vunpack.c.l.s4 1934713408
        %v2696 = vunpack.c.0.s8 %v2695
        %v2697 = vlaneseq
        %v2698 = vshrl.u32 %v2697, 7
        %v2699 = vsub.s32 %v2696, %v2698
        %v2700 = vrot.slane %v2692, %v2699
        %v2702 = vunpack.c.l.s4 1934713408
        %v2703 = vunpack.c.0.s8 %v2702
        %v2704 = vlaneseq
        %v2705 = vshrl.u32 %v2704, 7
        %v2706 = vsub.s32 %v2703, %v2705
        %v2707 = vrot.slane %v2693, %v2706
        %v2708 = vcombine.high %v2684, 0.0
        %v2709 = vcombine.high %v2691, 0.0
        %v2710 = vcombine.high %v2700, 0.0
        %v2711 = vcombine.high %v2707, 0.0
        %v2712 = vcombine.low %v2618, %v2625
        %v2714 = vunpack.c.l.s4 1983009808
        %v2715 = vunpack.c.0.s8 %v2714
        %v2716 = vlaneseq
        %v2717 = vshrl.u32 %v2716, 7
        %v2718 = vsub.s32 %v2715, %v2717
        %v2719 = vrot.slane %v2712, %v2718
        %v2720 = vcombine.low %v2642, %v2643
        %v2722 = vunpack.c.l.s4 1983009808
        %v2723 = vunpack.c.0.s8 %v2722
        %v2724 = vlaneseq
        %v2725 = vshrl.u32 %v2724, 7
        %v2726 = vsub.s32 %v2723, %v2725
        %v2727 = vrot.slane %v2720, %v2726
        %v2728 = vcombine.low %v2634, %v2641
        %v2730 = vunpack.c.l.s4 1983009808
        %v2731 = vunpack.c.0.s8 %v2730
        %v2732 = vlaneseq
        %v2733 = vshrl.u32 %v2732, 7
        %v2734 = vsub.s32 %v2731, %v2733
        %v2735 = vrot.slane %v2728, %v2734
        %v2736 = vcombine.low %v2644, %v2645
        %v2738 = vunpack.c.l.s4 1983009808
        %v2739 = vunpack.c.0.s8 %v2738
        %v2740 = vlaneseq
        %v2741 = vshrl.u32 %v2740, 7
        %v2742 = vsub.s32 %v2739, %v2741
        %v2743 = vrot.slane %v2736, %v2742
        %v2744 = vcombine.low %v2719, %v2727
        %v2746 = vunpack.c.l.s4 1934713408
        %v2747 = vunpack.c.0.s8 %v2746
        %v2748 = vlaneseq
        %v2749 = vshrl.u32 %v2748, 7
        %v2750 = vsub.s32 %v2747, %v2749
        %v2751 = vrot.slane %v2744, %v2750
        %v2752 = vcombine.low %v2735, %v2743
        %v2754 = vunpack.c.l.s4 1934713408
        %v2755 = vunpack.c.0.s8 %v2754
        %v2756 = vlaneseq
        %v2757 = vshrl.u32 %v2756, 7
        %v2758 = vsub.s32 %v2755, %v2757
        %v2759 = vrot.slane %v2752, %v2758
        %v2760 = vcombine.low %v2751, %v2759
        %v2761 = vcombine.high %v2751, %v2759
        %v2762 = vcombine.low %v2684, %v2691
        %v2764 = vunpack.c.l.s4 1983009808
        %v2765 = vunpack.c.0.s8 %v2764
        %v2766 = vlaneseq
        %v2767 = vshrl.u32 %v2766, 7
        %v2768 = vsub.s32 %v2765, %v2767
        %v2769 = vrot.slane %v2762, %v2768
        %v2770 = vcombine.low %v2708, %v2709
        %v2772 = vunpack.c.l.s4 1983009808
        %v2773 = vunpack.c.0.s8 %v2772
        %v2774 = vlaneseq
        %v2775 = vshrl.u32 %v2774, 7
        %v2776 = vsub.s32 %v2773, %v2775
        %v2777 = vrot.slane %v2770, %v2776
        %v2778 = vcombine.low %v2700, %v2707
        %v2780 = vunpack.c.l.s4 1983009808
        %v2781 = vunpack.c.0.s8 %v2780
        %v2782 = vlaneseq
        %v2783 = vshrl.u32 %v2782, 7
        %v2784 = vsub.s32 %v2781, %v2783
        %v2785 = vrot.slane %v2778, %v2784
        %v2786 = vcombine.low %v2710, %v2711
        %v2788 = vunpack.c.l.s4 1983009808
        %v2789 = vunpack.c.0.s8 %v2788
        %v2790 = vlaneseq
        %v2791 = vshrl.u32 %v2790, 7
        %v2792 = vsub.s32 %v2789, %v2791
        %v2793 = vrot.slane %v2786, %v2792
        %v2794 = vcombine.low %v2769, %v2777
        %v2796 = vunpack.c.l.s4 1934713408
        %v2797 = vunpack.c.0.s8 %v2796
        %v2798 = vlaneseq
        %v2799 = vshrl.u32 %v2798, 7
        %v2800 = vsub.s32 %v2797, %v2799
        %v2801 = vrot.slane %v2794, %v2800
        %v2802 = vcombine.low %v2785, %v2793
        %v2804 = vunpack.c.l.s4 1934713408
        %v2805 = vunpack.c.0.s8 %v2804
        %v2806 = vlaneseq
        %v2807 = vshrl.u32 %v2806, 7
        %v2808 = vsub.s32 %v2805, %v2807
        %v2809 = vrot.slane %v2802, %v2808
        %v2810 = vcombine.low %v2801, %v2809
        %v2811 = vcombine.high %v2801, %v2809
        %2812 = vrot.lane.b32.xlu0 %v2444, 96
        %v2813 = vpop.permute.xlu0 %2812
        %2814 = vrot.lane.b32.xlu0 %v2449, 96
        %v2815 = vpop.permute.xlu0 %2814
        %2816 = vrot.lane.b32.xlu0 %v2575, 96
        %v2817 = vpop.permute.xlu0 %2816
        %2818 = vrot.lane.b32.xlu0 %v2577, 96
        %v2819 = vpop.permute.xlu0 %2818
        %v2824 = vcombine.high %v2813, 0.0
        %v2826 = vunpack.c.l.s4 1983009808
        %v2827 = vunpack.c.0.s8 %v2826
        %v2828 = vlaneseq
        %v2829 = vshrl.u32 %v2828, 7
        %v2830 = vsub.s32 %v2827, %v2829
        %v2831 = vrot.slane %v2813, %v2830
        %v2833 = vunpack.c.l.s4 1983009808
        %v2834 = vunpack.c.0.s8 %v2833
        %v2835 = vlaneseq
        %v2836 = vshrl.u32 %v2835, 7
        %v2837 = vsub.s32 %v2834, %v2836
        %v2838 = vrot.slane %v2824, %v2837
        %v2839 = vcombine.high %v2817, 0.0
        %v2841 = vunpack.c.l.s4 1983009808
        %v2842 = vunpack.c.0.s8 %v2841
        %v2843 = vlaneseq
        %v2844 = vshrl.u32 %v2843, 7
        %v2845 = vsub.s32 %v2842, %v2844
        %v2846 = vrot.slane %v2817, %v2845
        %v2848 = vunpack.c.l.s4 1983009808
        %v2849 = vunpack.c.0.s8 %v2848
        %v2850 = vlaneseq
        %v2851 = vshrl.u32 %v2850, 7
        %v2852 = vsub.s32 %v2849, %v2851
        %v2853 = vrot.slane %v2839, %v2852
        %v2854 = vcombine.low %v2831, %v2846
        %v2855 = vcombine.high %v2831, %v2846
        %v2857 = vunpack.c.l.s4 1934713408
        %v2858 = vunpack.c.0.s8 %v2857
        %v2859 = vlaneseq
        %v2860 = vshrl.u32 %v2859, 7
        %v2861 = vsub.s32 %v2858, %v2860
        %v2862 = vrot.slane %v2854, %v2861
        %v2864 = vunpack.c.l.s4 1934713408
        %v2865 = vunpack.c.0.s8 %v2864
        %v2866 = vlaneseq
        %v2867 = vshrl.u32 %v2866, 7
        %v2868 = vsub.s32 %v2865, %v2867
        %v2869 = vrot.slane %v2855, %v2868
        %v2870 = vcombine.low %v2838, %v2853
        %v2871 = vcombine.high %v2838, %v2853
        %v2873 = vunpack.c.l.s4 1934713408
        %v2874 = vunpack.c.0.s8 %v2873
        %v2875 = vlaneseq
        %v2876 = vshrl.u32 %v2875, 7
        %v2877 = vsub.s32 %v2874, %v2876
        %v2878 = vrot.slane %v2870, %v2877
        %v2880 = vunpack.c.l.s4 1934713408
        %v2881 = vunpack.c.0.s8 %v2880
        %v2882 = vlaneseq
        %v2883 = vshrl.u32 %v2882, 7
        %v2884 = vsub.s32 %v2881, %v2883
        %v2885 = vrot.slane %v2871, %v2884
        %v2886 = vcombine.high %v2862, 0.0
        %v2887 = vcombine.high %v2869, 0.0
        %v2888 = vcombine.high %v2878, 0.0
        %v2889 = vcombine.high %v2885, 0.0
        %v2890 = vcombine.high %v2815, 0.0
        %v2892 = vunpack.c.l.s4 1983009808
        %v2893 = vunpack.c.0.s8 %v2892
        %v2894 = vlaneseq
        %v2895 = vshrl.u32 %v2894, 7
        %v2896 = vsub.s32 %v2893, %v2895
        %v2897 = vrot.slane %v2815, %v2896
        %v2899 = vunpack.c.l.s4 1983009808
        %v2900 = vunpack.c.0.s8 %v2899
        %v2901 = vlaneseq
        %v2902 = vshrl.u32 %v2901, 7
        %v2903 = vsub.s32 %v2900, %v2902
        %v2904 = vrot.slane %v2890, %v2903
        %v2905 = vcombine.high %v2819, 0.0
        %v2907 = vunpack.c.l.s4 1983009808
        %v2908 = vunpack.c.0.s8 %v2907
        %v2909 = vlaneseq
        %v2910 = vshrl.u32 %v2909, 7
        %v2911 = vsub.s32 %v2908, %v2910
        %v2912 = vrot.slane %v2819, %v2911
        %v2914 = vunpack.c.l.s4 1983009808
        %v2915 = vunpack.c.0.s8 %v2914
        %v2916 = vlaneseq
        %v2917 = vshrl.u32 %v2916, 7
        %v2918 = vsub.s32 %v2915, %v2917
        %v2919 = vrot.slane %v2905, %v2918
        %v2920 = vcombine.low %v2897, %v2912
        %v2921 = vcombine.high %v2897, %v2912
        %v2923 = vunpack.c.l.s4 1934713408
        %v2924 = vunpack.c.0.s8 %v2923
        %v2925 = vlaneseq
        %v2926 = vshrl.u32 %v2925, 7
        %v2927 = vsub.s32 %v2924, %v2926
        %v2928 = vrot.slane %v2920, %v2927
        %v2930 = vunpack.c.l.s4 1934713408
        %v2931 = vunpack.c.0.s8 %v2930
        %v2932 = vlaneseq
        %v2933 = vshrl.u32 %v2932, 7
        %v2934 = vsub.s32 %v2931, %v2933
        %v2935 = vrot.slane %v2921, %v2934
        %v2936 = vcombine.low %v2904, %v2919
        %v2937 = vcombine.high %v2904, %v2919
        %v2939 = vunpack.c.l.s4 1934713408
        %v2940 = vunpack.c.0.s8 %v2939
        %v2941 = vlaneseq
        %v2942 = vshrl.u32 %v2941, 7
        %v2943 = vsub.s32 %v2940, %v2942
        %v2944 = vrot.slane %v2936, %v2943
        %v2946 = vunpack.c.l.s4 1934713408
        %v2947 = vunpack.c.0.s8 %v2946
        %v2948 = vlaneseq
        %v2949 = vshrl.u32 %v2948, 7
        %v2950 = vsub.s32 %v2947, %v2949
        %v2951 = vrot.slane %v2937, %v2950
        %v2952 = vcombine.high %v2928, 0.0
        %v2953 = vcombine.high %v2935, 0.0
        %v2954 = vcombine.high %v2944, 0.0
        %v2955 = vcombine.high %v2951, 0.0
        %v2956 = vcombine.low %v2862, %v2869
        %v2958 = vunpack.c.l.s4 1983009808
        %v2959 = vunpack.c.0.s8 %v2958
        %v2960 = vlaneseq
        %v2961 = vshrl.u32 %v2960, 7
        %v2962 = vsub.s32 %v2959, %v2961
        %v2963 = vrot.slane %v2956, %v2962
        %v2964 = vcombine.low %v2886, %v2887
        %v2966 = vunpack.c.l.s4 1983009808
        %v2967 = vunpack.c.0.s8 %v2966
        %v2968 = vlaneseq
        %v2969 = vshrl.u32 %v2968, 7
        %v2970 = vsub.s32 %v2967, %v2969
        %v2971 = vrot.slane %v2964, %v2970
        %v2972 = vcombine.low %v2878, %v2885
        %v2974 = vunpack.c.l.s4 1983009808
        %v2975 = vunpack.c.0.s8 %v2974
        %v2976 = vlaneseq
        %v2977 = vshrl.u32 %v2976, 7
        %v2978 = vsub.s32 %v2975, %v2977
        %v2979 = vrot.slane %v2972, %v2978
        %v2980 = vcombine.low %v2888, %v2889
        %v2982 = vunpack.c.l.s4 1983009808
        %v2983 = vunpack.c.0.s8 %v2982
        %v2984 = vlaneseq
        %v2985 = vshrl.u32 %v2984, 7
        %v2986 = vsub.s32 %v2983, %v2985
        %v2987 = vrot.slane %v2980, %v2986
        %v2988 = vcombine.low %v2963, %v2971
        %v2990 = vunpack.c.l.s4 1934713408
        %v2991 = vunpack.c.0.s8 %v2990
        %v2992 = vlaneseq
        %v2993 = vshrl.u32 %v2992, 7
        %v2994 = vsub.s32 %v2991, %v2993
        %v2995 = vrot.slane %v2988, %v2994
        %v2996 = vcombine.low %v2979, %v2987
        %v2998 = vunpack.c.l.s4 1934713408
        %v2999 = vunpack.c.0.s8 %v2998
        %v3000 = vlaneseq
        %v3001 = vshrl.u32 %v3000, 7
        %v3002 = vsub.s32 %v2999, %v3001
        %v3003 = vrot.slane %v2996, %v3002
        %v3004 = vcombine.low %v2995, %v3003
        %v3005 = vcombine.high %v2995, %v3003
        %v3006 = vcombine.low %v2928, %v2935
        %v3008 = vunpack.c.l.s4 1983009808
        %v3009 = vunpack.c.0.s8 %v3008
        %v3010 = vlaneseq
        %v3011 = vshrl.u32 %v3010, 7
        %v3012 = vsub.s32 %v3009, %v3011
        %v3013 = vrot.slane %v3006, %v3012
        %v3014 = vcombine.low %v2952, %v2953
        %v3016 = vunpack.c.l.s4 1983009808
        %v3017 = vunpack.c.0.s8 %v3016
        %v3018 = vlaneseq
        %v3019 = vshrl.u32 %v3018, 7
        %v3020 = vsub.s32 %v3017, %v3019
        %v3021 = vrot.slane %v3014, %v3020
        %v3022 = vcombine.low %v2944, %v2951
        %v3024 = vunpack.c.l.s4 1983009808
        %v3025 = vunpack.c.0.s8 %v3024
        %v3026 = vlaneseq
        %v3027 = vshrl.u32 %v3026, 7
        %v3028 = vsub.s32 %v3025, %v3027
        %v3029 = vrot.slane %v3022, %v3028
        %v3030 = vcombine.low %v2954, %v2955
        %v3032 = vunpack.c.l.s4 1983009808
        %v3033 = vunpack.c.0.s8 %v3032
        %v3034 = vlaneseq
        %v3035 = vshrl.u32 %v3034, 7
        %v3036 = vsub.s32 %v3033, %v3035
        %v3037 = vrot.slane %v3030, %v3036
        %v3038 = vcombine.low %v3013, %v3021
        %v3040 = vunpack.c.l.s4 1934713408
        %v3041 = vunpack.c.0.s8 %v3040
        %v3042 = vlaneseq
        %v3043 = vshrl.u32 %v3042, 7
        %v3044 = vsub.s32 %v3041, %v3043
        %v3045 = vrot.slane %v3038, %v3044
        %v3046 = vcombine.low %v3029, %v3037
        %v3048 = vunpack.c.l.s4 1934713408
        %v3049 = vunpack.c.0.s8 %v3048
        %v3050 = vlaneseq
        %v3051 = vshrl.u32 %v3050, 7
        %v3052 = vsub.s32 %v3049, %v3051
        %v3053 = vrot.slane %v3046, %v3052
        %v3054 = vcombine.low %v3045, %v3053
        %v3055 = vcombine.high %v3045, %v3053
        %v3057 = vsel %vm1746, %v2570, 0
        %v3060 = vsel %vm1746, %v2760, 0
        %v3063 = vsel %vm1746, %v2810, 0
        %3065 = vmatprep.subr.mxu0 0.0
        %3066 = vmatpush1.xpose.msra.mxu0 %v3060
        %3067 = vmatprep.subr.mxu0 0.0
        %3068 = vmatpush1.xpose.msra.mxu0 %v3063
        %3069 = vmatprep.subr.mxu0 0.0
        %3070 = vmatpush1.xpose.msra.mxu0 0.0
        %3071 = vmatprep.subr.mxu0 0.0
        %3072 = vmatpush1.xpose.msra.mxu0 0.0
        %3073 = vmatprep.subr.mxu0 0.0
        %3074 = vmatpush1.xpose.msra.mxu0 0.0
        %3075 = vmatprep.subr.mxu0 0.0
        %3076 = vmatpush1.xpose.msra.mxu0 0.0
        %3077 = vmatprep.subr.mxu0 0.0
        %3078 = vmatpush1.xpose.msra.mxu0 0.0
        %3079 = vmatprep.subr.mxu0 0.0
        %3080 = vmatpush1.xpose.msra.mxu0 0.0
        %3081 = vmatprep.subr.mxu0 0.0
        %3082 = vmatpush1.xpose.msra.mxu0 0.0
        %3083 = vmatprep.subr.mxu0 0.0
        %3084 = vmatpush1.xpose.msra.mxu0 0.0
        %3085 = vmatprep.subr.mxu0 0.0
        %3086 = vmatpush1.xpose.msra.mxu0 0.0
        %3087 = vmatprep.subr.mxu0 0.0
        %3088 = vmatpush1.xpose.msra.mxu0 0.0
        %3089 = vmatprep.subr.mxu0 0.0
        %3090 = vmatpush1.xpose.msra.mxu0 0.0
        %3091 = vmatprep.subr.mxu0 0.0
        %3092 = vmatpush1.xpose.msra.mxu0 0.0
        %3093 = vmatprep.subr.mxu0 0.0
        %3094 = vmatpush1.xpose.msra.mxu0 0.0
        %3095 = vmatprep.subr.mxu0 0.0
        %3096 = vmatpush1.xpose.msra.mxu0 0.0
        %3097 = vmatprep.subr.mxu0 0.0
        %3098 = vmatpush1.xpose.msra.mxu0 0.0
        %3099 = vmatprep.subr.mxu0 0.0
        %3100 = vmatpush1.xpose.msra.mxu0 0.0
        %3101 = vmatprep.subr.mxu0 0.0
        %3102 = vmatpush1.xpose.msra.mxu0 0.0
        %3103 = vmatprep.subr.mxu0 0.0
        %3104 = vmatpush1.xpose.msra.mxu0 0.0
        %3105 = vmatprep.subr.mxu0 0.0
        %3106 = vmatpush1.xpose.msra.mxu0 0.0
        %3107 = vmatprep.subr.mxu0 0.0
        %3108 = vmatpush1.xpose.msra.mxu0 0.0
        %3109 = vmatprep.subr.mxu0 0.0
        %3110 = vmatpush1.xpose.msra.mxu0 0.0
        %3111 = vmatprep.subr.mxu0 0.0
        %3112 = vmatpush1.xpose.msra.mxu0 0.0
        %3113 = vmatprep.subr.mxu0 0.0
        %3114 = vmatpush1.xpose.msra.mxu0 0.0
        %3115 = vmatprep.subr.mxu0 0.0
        %3116 = vmatpush1.xpose.msra.mxu0 0.0
        %3117 = vmatprep.subr.mxu0 0.0
        %3118 = vmatpush1.xpose.msra.mxu0 0.0
        %3119 = vmatprep.subr.mxu0 0.0
        %3120 = vmatpush1.xpose.msra.mxu0 0.0
        %3121 = vmatprep.subr.mxu0 0.0
        %3122 = vmatpush1.xpose.msra.mxu0 0.0
        %3123 = vmatprep.subr.mxu0 0.0
        %3124 = vmatpush1.xpose.msra.mxu0 0.0
        %3125 = vmatprep.subr.mxu0 0.0
        %3126 = vmatpush1.xpose.msra.mxu0 0.0
        %3127 = vmatprep.subr.mxu0 0.0
        %3128 = vmatpush1.xpose.msra.mxu0 0.0
        %3129 = vmatprep.mubr.f32.mxu0 0.0
        %3130 = vmatmul.mubr.f32.gmra.mrb[0].mxu0 %v3057
        %v3131 = vpop.f32.mrb[0].mxu0
        %v3132 = vadd.f32 0.0, %v3131
        %v3133 = vpop.f32.mrb[0].mxu0
        %3134 = vdwg.mxu0
        %v3136 = vsel %vm1746, %v2571, 0
        %v3139 = vsel %vm1746, %v2761, 0
        %v3142 = vsel %vm1746, %v2811, 0
        %3144 = vmatprep.subr.mxu0 0.0
        %3145 = vmatpush1.xpose.msra.mxu0 %v3139
        %3146 = vmatprep.subr.mxu0 0.0
        %3147 = vmatpush1.xpose.msra.mxu0 %v3142
        %3148 = vmatprep.subr.mxu0 0.0
        %3149 = vmatpush1.xpose.msra.mxu0 0.0
        %3150 = vmatprep.subr.mxu0 0.0
        %3151 = vmatpush1.xpose.msra.mxu0 0.0
        %3152 = vmatprep.subr.mxu0 0.0
        %3153 = vmatpush1.xpose.msra.mxu0 0.0
        %3154 = vmatprep.subr.mxu0 0.0
        %3155 = vmatpush1.xpose.msra.mxu0 0.0
        %3156 = vmatprep.subr.mxu0 0.0
        %3157 = vmatpush1.xpose.msra.mxu0 0.0
        %3158 = vmatprep.subr.mxu0 0.0
        %3159 = vmatpush1.xpose.msra.mxu0 0.0
        %3160 = vmatprep.subr.mxu0 0.0
        %3161 = vmatpush1.xpose.msra.mxu0 0.0
        %3162 = vmatprep.subr.mxu0 0.0
        %3163 = vmatpush1.xpose.msra.mxu0 0.0
        %3164 = vmatprep.subr.mxu0 0.0
        %3165 = vmatpush1.xpose.msra.mxu0 0.0
        %3166 = vmatprep.subr.mxu0 0.0
        %3167 = vmatpush1.xpose.msra.mxu0 0.0
        %3168 = vmatprep.subr.mxu0 0.0
        %3169 = vmatpush1.xpose.msra.mxu0 0.0
        %3170 = vmatprep.subr.mxu0 0.0
        %3171 = vmatpush1.xpose.msra.mxu0 0.0
        %3172 = vmatprep.subr.mxu0 0.0
        %3173 = vmatpush1.xpose.msra.mxu0 0.0
        %3174 = vmatprep.subr.mxu0 0.0
        %3175 = vmatpush1.xpose.msra.mxu0 0.0
        %3176 = vmatprep.subr.mxu0 0.0
        %3177 = vmatpush1.xpose.msra.mxu0 0.0
        %3178 = vmatprep.subr.mxu0 0.0
        %3179 = vmatpush1.xpose.msra.mxu0 0.0
        %3180 = vmatprep.subr.mxu0 0.0
        %3181 = vmatpush1.xpose.msra.mxu0 0.0
        %3182 = vmatprep.subr.mxu0 0.0
        %3183 = vmatpush1.xpose.msra.mxu0 0.0
        %3184 = vmatprep.subr.mxu0 0.0
        %3185 = vmatpush1.xpose.msra.mxu0 0.0
        %3186 = vmatprep.subr.mxu0 0.0
        %3187 = vmatpush1.xpose.msra.mxu0 0.0
        %3188 = vmatprep.subr.mxu0 0.0
        %3189 = vmatpush1.xpose.msra.mxu0 0.0
        %3190 = vmatprep.subr.mxu0 0.0
        %3191 = vmatpush1.xpose.msra.mxu0 0.0
        %3192 = vmatprep.subr.mxu0 0.0
        %3193 = vmatpush1.xpose.msra.mxu0 0.0
        %3194 = vmatprep.subr.mxu0 0.0
        %3195 = vmatpush1.xpose.msra.mxu0 0.0
        %3196 = vmatprep.subr.mxu0 0.0
        %3197 = vmatpush1.xpose.msra.mxu0 0.0
        %3198 = vmatprep.subr.mxu0 0.0
        %3199 = vmatpush1.xpose.msra.mxu0 0.0
        %3200 = vmatprep.subr.mxu0 0.0
        %3201 = vmatpush1.xpose.msra.mxu0 0.0
        %3202 = vmatprep.subr.mxu0 0.0
        %3203 = vmatpush1.xpose.msra.mxu0 0.0
        %3204 = vmatprep.subr.mxu0 0.0
        %3205 = vmatpush1.xpose.msra.mxu0 0.0
        %3206 = vmatprep.subr.mxu0 0.0
        %3207 = vmatpush1.xpose.msra.mxu0 0.0
        %3208 = vmatprep.mubr.f32.mxu0 0.0
        %3209 = vmatmul.mubr.f32.gmra.mrb[0].mxu0 %v3136
        %v3210 = vpop.f32.mrb[0].mxu0
        %v3211 = vadd.f32 0.0, %v3210
        %v3212 = vpop.f32.mrb[0].mxu0
        %3213 = vdwg.mxu0
        %v3214 = vmul.f32 %v3132, 0.25
        %v3215 = vmul.f32 %v3211, 0.25
        %v3216 = vsel %vm1746, %v3214, -inf
        %3217 = vmax.xlane.f32.xlu0 %v3216
        %v3218 = vpop.xlane.xlu0 %3217
        %v3219 = vsel %vm1746, %v3215, -inf
        %3220 = vmax.xlane.f32.xlu0 %v3219
        %v3221 = vpop.xlane.xlu0 %3220
        %v3222 = vsub.f32 %v3214, %v3218
        %v3223 = vsub.f32 %v3215, %v3221
        %v3224 = vmul.f32 %v3222, 1.442695
        %v3225 = vpow.pop %v3224
        %v3226 = vmul.f32 %v3223, 1.442695
        %v3227 = vpow.pop %v3226
        %v3228 = vsel %vm1746, %v3225, 0.0
        %3229 = vadd.xlane.f32.xlu0 %v3228
        %v3230 = vpop.xlane.xlu0 %3229
        %v3231 = vsel %vm1746, %v3227, 0.0
        %3232 = vadd.xlane.f32.xlu0 %v3231
        %v3233 = vpop.xlane.xlu0 %3232
        %v3234 = vrcp.pop %v3230
        %v3235 = vmul.f32 %v3225, %v3234
        %v3236 = vrcp.pop %v3233
        %v3237 = vmul.f32 %v3227, %v3236
        %v3239 = vsel %vm1746, %v3235, 0
        %3241 = vmatprep.subr.mxu0 0.0
        %3242 = vmatpush1.msra.mxu0 %v3004
        %3243 = vmatprep.subr.mxu0 0.0
        %3244 = vmatpush1.msra.mxu0 %v3054
        %3245 = vmatprep.subr.mxu0 0.0
        %3246 = vmatpush1.msra.mxu0 0.0
        %3247 = vmatprep.subr.mxu0 0.0
        %3248 = vmatpush1.msra.mxu0 0.0
        %3249 = vmatprep.subr.mxu0 0.0
        %3250 = vmatpush1.msra.mxu0 0.0
        %3251 = vmatprep.subr.mxu0 0.0
        %3252 = vmatpush1.msra.mxu0 0.0
        %3253 = vmatprep.subr.mxu0 0.0
        %3254 = vmatpush1.msra.mxu0 0.0
        %3255 = vmatprep.subr.mxu0 0.0
        %3256 = vmatpush1.msra.mxu0 0.0
        %3257 = vmatprep.subr.mxu0 0.0
        %3258 = vmatpush1.msra.mxu0 0.0
        %3259 = vmatprep.subr.mxu0 0.0
        %3260 = vmatpush1.msra.mxu0 0.0
        %3261 = vmatprep.subr.mxu0 0.0
        %3262 = vmatpush1.msra.mxu0 0.0
        %3263 = vmatprep.subr.mxu0 0.0
        %3264 = vmatpush1.msra.mxu0 0.0
        %3265 = vmatprep.subr.mxu0 0.0
        %3266 = vmatpush1.msra.mxu0 0.0
        %3267 = vmatprep.subr.mxu0 0.0
        %3268 = vmatpush1.msra.mxu0 0.0
        %3269 = vmatprep.subr.mxu0 0.0
        %3270 = vmatpush1.msra.mxu0 0.0
        %3271 = vmatprep.subr.mxu0 0.0
        %3272 = vmatpush1.msra.mxu0 0.0
        %3273 = vmatprep.subr.mxu0 0.0
        %3274 = vmatpush1.msra.mxu0 0.0
        %3275 = vmatprep.subr.mxu0 0.0
        %3276 = vmatpush1.msra.mxu0 0.0
        %3277 = vmatprep.subr.mxu0 0.0
        %3278 = vmatpush1.msra.mxu0 0.0
        %3279 = vmatprep.subr.mxu0 0.0
        %3280 = vmatpush1.msra.mxu0 0.0
        %3281 = vmatprep.subr.mxu0 0.0
        %3282 = vmatpush1.msra.mxu0 0.0
        %3283 = vmatprep.subr.mxu0 0.0
        %3284 = vmatpush1.msra.mxu0 0.0
        %3285 = vmatprep.subr.mxu0 0.0
        %3286 = vmatpush1.msra.mxu0 0.0
        %3287 = vmatprep.subr.mxu0 0.0
        %3288 = vmatpush1.msra.mxu0 0.0
        %3289 = vmatprep.subr.mxu0 0.0
        %3290 = vmatpush1.msra.mxu0 0.0
        %3291 = vmatprep.subr.mxu0 0.0
        %3292 = vmatpush1.msra.mxu0 0.0
        %3293 = vmatprep.subr.mxu0 0.0
        %3294 = vmatpush1.msra.mxu0 0.0
        %3295 = vmatprep.subr.mxu0 0.0
        %3296 = vmatpush1.msra.mxu0 0.0
        %3297 = vmatprep.subr.mxu0 0.0
        %3298 = vmatpush1.msra.mxu0 0.0
        %3299 = vmatprep.subr.mxu0 0.0
        %3300 = vmatpush1.msra.mxu0 0.0
        %3301 = vmatprep.subr.mxu0 0.0
        %3302 = vmatpush1.msra.mxu0 0.0
        %3303 = vmatprep.subr.mxu0 0.0
        %3304 = vmatpush1.msra.mxu0 0.0
        %3305 = vmatprep.mubr.f32.mxu0 0.0
        %3306 = vmatmul.mubr.f32.gmra.mrb[0].mxu0 %v3239
        %v3307 = vpop.f32.mrb[0].mxu0
        %v3308 = vadd.f32 0.0, %v3307
        %v3309 = vpop.f32.mrb[0].mxu0
        %3310 = vdwg.mxu0
        %v3312 = vsel %vm1746, %v3237, 0
        %3314 = vmatprep.subr.mxu0 0.0
        %3315 = vmatpush1.msra.mxu0 %v3005
        %3316 = vmatprep.subr.mxu0 0.0
        %3317 = vmatpush1.msra.mxu0 %v3055
        %3318 = vmatprep.subr.mxu0 0.0
        %3319 = vmatpush1.msra.mxu0 0.0
        %3320 = vmatprep.subr.mxu0 0.0
        %3321 = vmatpush1.msra.mxu0 0.0
        %3322 = vmatprep.subr.mxu0 0.0
        %3323 = vmatpush1.msra.mxu0 0.0
        %3324 = vmatprep.subr.mxu0 0.0
        %3325 = vmatpush1.msra.mxu0 0.0
        %3326 = vmatprep.subr.mxu0 0.0
        %3327 = vmatpush1.msra.mxu0 0.0
        %3328 = vmatprep.subr.mxu0 0.0
        %3329 = vmatpush1.msra.mxu0 0.0
        %3330 = vmatprep.subr.mxu0 0.0
        %3331 = vmatpush1.msra.mxu0 0.0
        %3332 = vmatprep.subr.mxu0 0.0
        %3333 = vmatpush1.msra.mxu0 0.0
        %3334 = vmatprep.subr.mxu0 0.0
        %3335 = vmatpush1.msra.mxu0 0.0
        %3336 = vmatprep.subr.mxu0 0.0
        %3337 = vmatpush1.msra.mxu0 0.0
        %3338 = vmatprep.subr.mxu0 0.0
        %3339 = vmatpush1.msra.mxu0 0.0
        %3340 = vmatprep.subr.mxu0 0.0
        %3341 = vmatpush1.msra.mxu0 0.0
        %3342 = vmatprep.subr.mxu0 0.0
        %3343 = vmatpush1.msra.mxu0 0.0
        %3344 = vmatprep.subr.mxu0 0.0
        %3345 = vmatpush1.msra.mxu0 0.0
        %3346 = vmatprep.subr.mxu0 0.0
        %3347 = vmatpush1.msra.mxu0 0.0
        %3348 = vmatprep.subr.mxu0 0.0
        %3349 = vmatpush1.msra.mxu0 0.0
        %3350 = vmatprep.subr.mxu0 0.0
        %3351 = vmatpush1.msra.mxu0 0.0
        %3352 = vmatprep.subr.mxu0 0.0
        %3353 = vmatpush1.msra.mxu0 0.0
        %3354 = vmatprep.subr.mxu0 0.0
        %3355 = vmatpush1.msra.mxu0 0.0
        %3356 = vmatprep.subr.mxu0 0.0
        %3357 = vmatpush1.msra.mxu0 0.0
        %3358 = vmatprep.subr.mxu0 0.0
        %3359 = vmatpush1.msra.mxu0 0.0
        %3360 = vmatprep.subr.mxu0 0.0
        %3361 = vmatpush1.msra.mxu0 0.0
        %3362 = vmatprep.subr.mxu0 0.0
        %3363 = vmatpush1.msra.mxu0 0.0
        %3364 = vmatprep.subr.mxu0 0.0
        %3365 = vmatpush1.msra.mxu0 0.0
        %3366 = vmatprep.subr.mxu0 0.0
        %3367 = vmatpush1.msra.mxu0 0.0
        %3368 = vmatprep.subr.mxu0 0.0
        %3369 = vmatpush1.msra.mxu0 0.0
        %3370 = vmatprep.subr.mxu0 0.0
        %3371 = vmatpush1.msra.mxu0 0.0
        %3372 = vmatprep.subr.mxu0 0.0
        %3373 = vmatpush1.msra.mxu0 0.0
        %3374 = vmatprep.subr.mxu0 0.0
        %3375 = vmatpush1.msra.mxu0 0.0
        %3376 = vmatprep.subr.mxu0 0.0
        %3377 = vmatpush1.msra.mxu0 0.0
        %3378 = vmatprep.mubr.f32.mxu0 0.0
        %3379 = vmatmul.mubr.f32.gmra.mrb[0].mxu0 %v3312
        %v3380 = vpop.f32.mrb[0].mxu0
        %v3381 = vadd.f32 0.0, %v3380
        %v3382 = vpop.f32.mrb[0].mxu0
        %3383 = vdwg.mxu0
        %v3384 = vcombine.high %v3308, 0.0
        %v3386 = vunpack.c.l.s4 1983009808
        %v3387 = vunpack.c.0.s8 %v3386
        %v3388 = vlaneseq
        %v3389 = vshrl.u32 %v3388, 7
        %v3390 = vsub.s32 %v3387, %v3389
        %v3391 = vrot.slane %v3308, %v3390
        %v3393 = vunpack.c.l.s4 1983009808
        %v3394 = vunpack.c.0.s8 %v3393
        %v3395 = vlaneseq
        %v3396 = vshrl.u32 %v3395, 7
        %v3397 = vsub.s32 %v3394, %v3396
        %v3398 = vrot.slane %v3384, %v3397
        %v3399 = vcombine.high %v3381, 0.0
        %v3401 = vunpack.c.l.s4 1983009808
        %v3402 = vunpack.c.0.s8 %v3401
        %v3403 = vlaneseq
        %v3404 = vshrl.u32 %v3403, 7
        %v3405 = vsub.s32 %v3402, %v3404
        %v3406 = vrot.slane %v3381, %v3405
        %v3408 = vunpack.c.l.s4 1983009808
        %v3409 = vunpack.c.0.s8 %v3408
        %v3410 = vlaneseq
        %v3411 = vshrl.u32 %v3410, 7
        %v3412 = vsub.s32 %v3409, %v3411
        %v3413 = vrot.slane %v3399, %v3412
        %v3414 = vcombine.low %v3391, %v3406
        %v3415 = vcombine.high %v3391, %v3406
        %v3417 = vunpack.c.l.s4 1934713408
        %v3418 = vunpack.c.0.s8 %v3417
        %v3419 = vlaneseq
        %v3420 = vshrl.u32 %v3419, 7
        %v3421 = vsub.s32 %v3418, %v3420
        %v3422 = vrot.slane %v3414, %v3421
        %v3424 = vunpack.c.l.s4 1934713408
        %v3425 = vunpack.c.0.s8 %v3424
        %v3426 = vlaneseq
        %v3427 = vshrl.u32 %v3426, 7
        %v3428 = vsub.s32 %v3425, %v3427
        %v3429 = vrot.slane %v3415, %v3428
        %v3430 = vcombine.low %v3398, %v3413
        %v3431 = vcombine.high %v3398, %v3413
        %v3433 = vunpack.c.l.s4 1934713408
        %v3434 = vunpack.c.0.s8 %v3433
        %v3435 = vlaneseq
        %v3436 = vshrl.u32 %v3435, 7
        %v3437 = vsub.s32 %v3434, %v3436
        %v3438 = vrot.slane %v3430, %v3437
        %v3440 = vunpack.c.l.s4 1934713408
        %v3441 = vunpack.c.0.s8 %v3440
        %v3442 = vlaneseq
        %v3443 = vshrl.u32 %v3442, 7
        %v3444 = vsub.s32 %v3441, %v3443
        %v3445 = vrot.slane %v3431, %v3444
        %v3446 = vcombine.high %v3422, 0.0
        %v3447 = vcombine.high %v3429, 0.0
        %v3448 = vcombine.high %v3438, 0.0
        %v3449 = vcombine.high %v3445, 0.0
        %v3450 = vcombine.low %v3422, %v3429
        %v3452 = vunpack.c.l.s4 1983009808
        %v3453 = vunpack.c.0.s8 %v3452
        %v3454 = vlaneseq
        %v3455 = vshrl.u32 %v3454, 7
        %v3456 = vsub.s32 %v3453, %v3455
        %v3457 = vrot.slane %v3450, %v3456
        %v3458 = vcombine.low %v3446, %v3447
        %v3460 = vunpack.c.l.s4 1983009808
        %v3461 = vunpack.c.0.s8 %v3460
        %v3462 = vlaneseq
        %v3463 = vshrl.u32 %v3462, 7
        %v3464 = vsub.s32 %v3461, %v3463
        %v3465 = vrot.slane %v3458, %v3464
        %v3466 = vcombine.low %v3438, %v3445
        %v3468 = vunpack.c.l.s4 1983009808
        %v3469 = vunpack.c.0.s8 %v3468
        %v3470 = vlaneseq
        %v3471 = vshrl.u32 %v3470, 7
        %v3472 = vsub.s32 %v3469, %v3471
        %v3473 = vrot.slane %v3466, %v3472
        %v3474 = vcombine.low %v3448, %v3449
        %v3476 = vunpack.c.l.s4 1983009808
        %v3477 = vunpack.c.0.s8 %v3476
        %v3478 = vlaneseq
        %v3479 = vshrl.u32 %v3478, 7
        %v3480 = vsub.s32 %v3477, %v3479
        %v3481 = vrot.slane %v3474, %v3480
        %v3482 = vcombine.low %v3457, %v3465
        %v3484 = vunpack.c.l.s4 1934713408
        %v3485 = vunpack.c.0.s8 %v3484
        %v3486 = vlaneseq
        %v3487 = vshrl.u32 %v3486, 7
        %v3488 = vsub.s32 %v3485, %v3487
        %v3489 = vrot.slane %v3482, %v3488
        %v3490 = vcombine.low %v3473, %v3481
        %v3492 = vunpack.c.l.s4 1934713408
        %v3493 = vunpack.c.0.s8 %v3492
        %v3494 = vlaneseq
        %v3495 = vshrl.u32 %v3494, 7
        %v3496 = vsub.s32 %v3493, %v3495
        %v3497 = vrot.slane %v3490, %v3496
        %v3498 = vcombine.low %v3489, %v3497
        %v3499 = vcombine.high %v3489, %v3497
        %3501 = vrot.lane.b32.xlu0 %v3499, 16
        %v3502 = vpop.permute.xlu0 %3501
        %v3504 = vsel %vm1746, %v3498, %v3502
        %v3506 = vlaneseq
        %v3507 = vshrl.u32 %v3506, 7
        %v3508 = vsub.s32 0, %v3507
        %v3509 = vrot.slane %v1263, %v3508
        %v3512 = vsel %vm1280, %v3504, 0
        %3514 = vmatprep.subr.mxu0 0.0
        %3515 = vmatpush1.msra.mxu0 %v1259
        %3516 = vmatprep.subr.mxu0 0.0
        %3517 = vmatpush1.msra.mxu0 %v1260
        %3518 = vmatprep.subr.mxu0 0.0
        %3519 = vmatpush1.msra.mxu0 %v1261
        %3520 = vmatprep.subr.mxu0 0.0
        %3521 = vmatpush1.msra.mxu0 %v1262
        %3522 = vmatprep.subr.mxu0 0.0
        %3523 = vmatpush1.msra.mxu0 0.0
        %3524 = vmatprep.subr.mxu0 0.0
        %3525 = vmatpush1.msra.mxu0 0.0
        %3526 = vmatprep.subr.mxu0 0.0
        %3527 = vmatpush1.msra.mxu0 0.0
        %3528 = vmatprep.subr.mxu0 0.0
        %3529 = vmatpush1.msra.mxu0 0.0
        %3530 = vmatprep.subr.mxu0 0.0
        %3531 = vmatpush1.msra.mxu0 0.0
        %3532 = vmatprep.subr.mxu0 0.0
        %3533 = vmatpush1.msra.mxu0 0.0
        %3534 = vmatprep.subr.mxu0 0.0
        %3535 = vmatpush1.msra.mxu0 0.0
        %3536 = vmatprep.subr.mxu0 0.0
        %3537 = vmatpush1.msra.mxu0 0.0
        %3538 = vmatprep.subr.mxu0 0.0
        %3539 = vmatpush1.msra.mxu0 0.0
        %3540 = vmatprep.subr.mxu0 0.0
        %3541 = vmatpush1.msra.mxu0 0.0
        %3542 = vmatprep.subr.mxu0 0.0
        %3543 = vmatpush1.msra.mxu0 0.0
        %3544 = vmatprep.subr.mxu0 0.0
        %3545 = vmatpush1.msra.mxu0 0.0
        %3546 = vmatprep.subr.mxu0 0.0
        %3547 = vmatpush1.msra.mxu0 0.0
        %3548 = vmatprep.subr.mxu0 0.0
        %3549 = vmatpush1.msra.mxu0 0.0
        %3550 = vmatprep.subr.mxu0 0.0
        %3551 = vmatpush1.msra.mxu0 0.0
        %3552 = vmatprep.subr.mxu0 0.0
        %3553 = vmatpush1.msra.mxu0 0.0
        %3554 = vmatprep.subr.mxu0 0.0
        %3555 = vmatpush1.msra.mxu0 0.0
        %3556 = vmatprep.subr.mxu0 0.0
        %3557 = vmatpush1.msra.mxu0 0.0
        %3558 = vmatprep.subr.mxu0 0.0
        %3559 = vmatpush1.msra.mxu0 0.0
        %3560 = vmatprep.subr.mxu0 0.0
        %3561 = vmatpush1.msra.mxu0 0.0
        %3562 = vmatprep.subr.mxu0 0.0
        %3563 = vmatpush1.msra.mxu0 0.0
        %3564 = vmatprep.subr.mxu0 0.0
        %3565 = vmatpush1.msra.mxu0 0.0
        %3566 = vmatprep.subr.mxu0 0.0
        %3567 = vmatpush1.msra.mxu0 0.0
        %3568 = vmatprep.subr.mxu0 0.0
        %3569 = vmatpush1.msra.mxu0 0.0
        %3570 = vmatprep.subr.mxu0 0.0
        %3571 = vmatpush1.msra.mxu0 0.0
        %3572 = vmatprep.subr.mxu0 0.0
        %3573 = vmatpush1.msra.mxu0 0.0
        %3574 = vmatprep.subr.mxu0 0.0
        %3575 = vmatpush1.msra.mxu0 0.0
        %3576 = vmatprep.subr.mxu0 0.0
        %3577 = vmatpush1.msra.mxu0 0.0
        %3578 = vmatprep.mubr.f32.mxu0 0.0
        %3579 = vmatmul.mubr.f32.gmra.mrb[0].mxu0 %v3512
        %v3580 = vpop.f32.mrb[0].mxu0
        %v3581 = vadd.f32 %v3509, %v3580
        %v3582 = vpop.f32.mrb[0].mxu0
        %3583 = vdwg.mxu0
        %v3584 = vadd.f32 %v3581, %v2297
        %v3585 = vsel %vm1280, %v3584, 0.0
        %3586 = vadd.xlane.f32.xlu0 %v3585
        %v3587 = vpop.xlane.xlu0 %3586
        %v3588 = vmul.f32 %v3587, %v1284
        %v3589 = vsub.f32 %v3584, %v3588
        %v3590 = vmul.f32 %v3589, %v3589
        %v3591 = vsel %vm1280, %v3590, 0.0
        %3592 = vadd.xlane.f32.xlu0 %v3591
        %v3593 = vpop.xlane.xlu0 %3592
        %v3594 = vmul.f32 %v3593, %v1284
        %v3595 = vadd.f32 %v3594, 1e-05
        %v3596 = vrsqrt.pop %v3595
        %v3597 = vmul.f32 %v3589, %v3596
        %v3599 = vlaneseq
        %v3600 = vshrl.u32 %v3599, 7
        %v3601 = vsub.s32 0, %v3600
        %v3602 = vrot.slane %v1264, %v3601
        %v3604 = vmul.f32 %v3597, %v3602
        %v3606 = vlaneseq
        %v3607 = vshrl.u32 %v3606, 7
        %v3608 = vsub.s32 0, %v3607
        %v3609 = vrot.slane %v1265, %v3608
        %v3611 = vadd.f32 %v3604, %v3609
        %v3613 = vlaneseq
        %v3614 = vshrl.u32 %v3613, 7
        %v3615 = vsub.s32 0, %v3614
        %v3616 = vrot.slane %v1270, %v3615
        %v3619 = vsel %vm1280, %v3611, 0
        %3621 = vmatprep.subr.mxu0 0.0
        %3622 = vmatpush1.msra.mxu0 %v1266
        %3623 = vmatprep.subr.mxu0 0.0
        %3624 = vmatpush1.msra.mxu0 %v1267
        %3625 = vmatprep.subr.mxu0 0.0
        %3626 = vmatpush1.msra.mxu0 %v1268
        %3627 = vmatprep.subr.mxu0 0.0
        %3628 = vmatpush1.msra.mxu0 %v1269
        %3629 = vmatprep.subr.mxu0 0.0
        %3630 = vmatpush1.msra.mxu0 0.0
        %3631 = vmatprep.subr.mxu0 0.0
        %3632 = vmatpush1.msra.mxu0 0.0
        %3633 = vmatprep.subr.mxu0 0.0
        %3634 = vmatpush1.msra.mxu0 0.0
        %3635 = vmatprep.subr.mxu0 0.0
        %3636 = vmatpush1.msra.mxu0 0.0
        %3637 = vmatprep.subr.mxu0 0.0
        %3638 = vmatpush1.msra.mxu0 0.0
        %3639 = vmatprep.subr.mxu0 0.0
        %3640 = vmatpush1.msra.mxu0 0.0
        %3641 = vmatprep.subr.mxu0 0.0
        %3642 = vmatpush1.msra.mxu0 0.0
        %3643 = vmatprep.subr.mxu0 0.0
        %3644 = vmatpush1.msra.mxu0 0.0
        %3645 = vmatprep.subr.mxu0 0.0
        %3646 = vmatpush1.msra.mxu0 0.0
        %3647 = vmatprep.subr.mxu0 0.0
        %3648 = vmatpush1.msra.mxu0 0.0
        %3649 = vmatprep.subr.mxu0 0.0
        %3650 = vmatpush1.msra.mxu0 0.0
        %3651 = vmatprep.subr.mxu0 0.0
        %3652 = vmatpush1.msra.mxu0 0.0
        %3653 = vmatprep.subr.mxu0 0.0
        %3654 = vmatpush1.msra.mxu0 0.0
        %3655 = vmatprep.subr.mxu0 0.0
        %3656 = vmatpush1.msra.mxu0 0.0
        %3657 = vmatprep.subr.mxu0 0.0
        %3658 = vmatpush1.msra.mxu0 0.0
        %3659 = vmatprep.subr.mxu0 0.0
        %3660 = vmatpush1.msra.mxu0 0.0
        %3661 = vmatprep.subr.mxu0 0.0
        %3662 = vmatpush1.msra.mxu0 0.0
        %3663 = vmatprep.subr.mxu0 0.0
        %3664 = vmatpush1.msra.mxu0 0.0
        %3665 = vmatprep.subr.mxu0 0.0
        %3666 = vmatpush1.msra.mxu0 0.0
        %3667 = vmatprep.subr.mxu0 0.0
        %3668 = vmatpush1.msra.mxu0 0.0
        %3669 = vmatprep.subr.mxu0 0.0
        %3670 = vmatpush1.msra.mxu0 0.0
        %3671 = vmatprep.subr.mxu0 0.0
        %3672 = vmatpush1.msra.mxu0 0.0
        %3673 = vmatprep.subr.mxu0 0.0
        %3674 = vmatpush1.msra.mxu0 0.0
        %3675 = vmatprep.subr.mxu0 0.0
        %3676 = vmatpush1.msra.mxu0 0.0
        %3677 = vmatprep.subr.mxu0 0.0
        %3678 = vmatpush1.msra.mxu0 0.0
        %3679 = vmatprep.subr.mxu0 0.0
        %3680 = vmatpush1.msra.mxu0 0.0
        %3681 = vmatprep.subr.mxu0 0.0
        %3682 = vmatpush1.msra.mxu0 0.0
        %3683 = vmatprep.subr.mxu0 0.0
        %3684 = vmatpush1.msra.mxu0 0.0
        %3685 = vmatprep.mubr.f32.mxu0 0.0
        %3686 = vmatmul.mubr.f32.gmra.mrb[0].mxu0 %v3619
        %v3687 = vpop.f32.mrb[0].mxu0
        %v3688 = vadd.f32 %v3616, %v3687
        %v3689 = vpop.f32.mrb[0].mxu0
        %3690 = vdwg.mxu0
        %v3691 = vtanh.pop %v3688
        %v3693 = vlaneseq
        %v3694 = vshrl.u32 %v3693, 7
        %v3695 = vsub.s32 0, %v3694
        %v3696 = vrot.slane %v1279, %v3695
        %vm3698 = vcmask 523264
        %v3700 = vsel %vm3698, %v3691, 0
        %3702 = vmatprep.subr.mxu0 0.0
        %3703 = vmatpush1.msra.mxu0 %v1271
        %3704 = vmatprep.subr.mxu0 0.0
        %3705 = vmatpush1.msra.mxu0 %v1272
        %3706 = vmatprep.subr.mxu0 0.0
        %3707 = vmatpush1.msra.mxu0 %v1273
        %3708 = vmatprep.subr.mxu0 0.0
        %3709 = vmatpush1.msra.mxu0 %v1274
        %3710 = vmatprep.subr.mxu0 0.0
        %3711 = vmatpush1.msra.mxu0 %v1275
        %3712 = vmatprep.subr.mxu0 0.0
        %3713 = vmatpush1.msra.mxu0 %v1276
        %3714 = vmatprep.subr.mxu0 0.0
        %3715 = vmatpush1.msra.mxu0 %v1277
        %3716 = vmatprep.subr.mxu0 0.0
        %3717 = vmatpush1.msra.mxu0 %v1278
        %3718 = vmatprep.subr.mxu0 0.0
        %3719 = vmatpush1.msra.mxu0 0.0
        %3720 = vmatprep.subr.mxu0 0.0
        %3721 = vmatpush1.msra.mxu0 0.0
        %3722 = vmatprep.subr.mxu0 0.0
        %3723 = vmatpush1.msra.mxu0 0.0
        %3724 = vmatprep.subr.mxu0 0.0
        %3725 = vmatpush1.msra.mxu0 0.0
        %3726 = vmatprep.subr.mxu0 0.0
        %3727 = vmatpush1.msra.mxu0 0.0
        %3728 = vmatprep.subr.mxu0 0.0
        %3729 = vmatpush1.msra.mxu0 0.0
        %3730 = vmatprep.subr.mxu0 0.0
        %3731 = vmatpush1.msra.mxu0 0.0
        %3732 = vmatprep.subr.mxu0 0.0
        %3733 = vmatpush1.msra.mxu0 0.0
        %3734 = vmatprep.subr.mxu0 0.0
        %3735 = vmatpush1.msra.mxu0 0.0
        %3736 = vmatprep.subr.mxu0 0.0
        %3737 = vmatpush1.msra.mxu0 0.0
        %3738 = vmatprep.subr.mxu0 0.0
        %3739 = vmatpush1.msra.mxu0 0.0
        %3740 = vmatprep.subr.mxu0 0.0
        %3741 = vmatpush1.msra.mxu0 0.0
        %3742 = vmatprep.subr.mxu0 0.0
        %3743 = vmatpush1.msra.mxu0 0.0
        %3744 = vmatprep.subr.mxu0 0.0
        %3745 = vmatpush1.msra.mxu0 0.0
        %3746 = vmatprep.subr.mxu0 0.0
        %3747 = vmatpush1.msra.mxu0 0.0
        %3748 = vmatprep.subr.mxu0 0.0
        %3749 = vmatpush1.msra.mxu0 0.0
        %3750 = vmatprep.subr.mxu0 0.0
        %3751 = vmatpush1.msra.mxu0 0.0
        %3752 = vmatprep.subr.mxu0 0.0
        %3753 = vmatpush1.msra.mxu0 0.0
        %3754 = vmatprep.subr.mxu0 0.0
        %3755 = vmatpush1.msra.mxu0 0.0
        %3756 = vmatprep.subr.mxu0 0.0
        %3757 = vmatpush1.msra.mxu0 0.0
        %3758 = vmatprep.subr.mxu0 0.0
        %3759 = vmatpush1.msra.mxu0 0.0
        %3760 = vmatprep.subr.mxu0 0.0
        %3761 = vmatpush1.msra.mxu0 0.0
        %3762 = vmatprep.subr.mxu0 0.0
        %3763 = vmatpush1.msra.mxu0 0.0
        %3764 = vmatprep.subr.mxu0 0.0
        %3765 = vmatpush1.msra.mxu0 0.0
        %3766 = vmatprep.mubr.f32.mxu0 0.0
        %3767 = vmatmul.mubr.f32.gmra.mrb[0].mxu0 %v3700
        %v3768 = vpop.f32.mrb[0].mxu0
        %v3769 = vadd.f32 %v3696, %v3768
        %v3770 = vpop.f32.mrb[0].mxu0
        %3771 = vdwg.mxu0
        %v3772 = vadd.f32 %v3769, %v3584
        %p3773 = scmp.ne.s32.totalorder %s64, 1
        // Predicated region
        $region165: #{tpu_custom_call.1} parent=103 // pred_check
          %p3774 = pneg %p3773
        $region166: #{tpu_custom_call.1} parent=103 // pred_check_branch
          %3776 = sbr.rel (%p3774) target = $region168
        $region167: #{tpu_custom_call.1} parent=103 // pred_region
          %3777 = vst.msk [vmem:[%s1202] sm:$0xff] %vm1280, %v3772
        $region168: #{tpu_custom_call.1} parent=103 // pred_fallthru
          _
        // Predicated region
        $region169: #{tpu_custom_call.1} parent=103 // pred_check
          %p3778 = pneg %p1227
        $region170: #{tpu_custom_call.1} parent=103 // pred_check_branch
          %3780 = sbr.rel (%p3778) target = $region172
        $region171: #{tpu_custom_call.1} parent=103 // pred_region
          %v3781 = vld [vmem:[%s19] sm:$0x1]
          %v3782 = vld [vmem:[%s20] sm:$0x1]
          %v3783 = vsel %vm1280, %v3772, 0.0
          %3784 = vadd.xlane.f32.xlu0 %v3783
          %v3785 = vpop.xlane.xlu0 %3784
          %v3786 = vmul.f32 %v3785, %v1284
          %v3787 = vsub.f32 %v3772, %v3786
          %v3788 = vmul.f32 %v3787, %v3787
          %v3789 = vsel %vm1280, %v3788, 0.0
          %3790 = vadd.xlane.f32.xlu0 %v3789
          %v3791 = vpop.xlane.xlu0 %3790
          %v3792 = vmul.f32 %v3791, %v1284
          %v3793 = vadd.f32 %v3792, 1e-05
          %v3794 = vrsqrt.pop %v3793
          %v3795 = vmul.f32 %v3787, %v3794
          %v3797 = vlaneseq
          %v3798 = vshrl.u32 %v3797, 7
          %v3799 = vsub.s32 0, %v3798
          %v3800 = vrot.slane %v3781, %v3799
          %v3802 = vmul.f32 %v3795, %v3800
          %v3804 = vlaneseq
          %v3805 = vshrl.u32 %v3804, 7
          %v3806 = vsub.s32 0, %v3805
          %v3807 = vrot.slane %v3782, %v3806
          %v3809 = vadd.f32 %v3802, %v3807
          %3810 = vst.msk [vmem:[%s1202] sm:$0xff] %vm1280, %v3809
        $region172: #{tpu_custom_call.1} parent=103 // pred_fallthru
          _
        %s3811 = sand.u32 %s615, 1
        %s3812 = scalar_lea.sflag [#allocation4], %s3811
        %s3813 = sand.u32 %s615, 1
        %s3814 = smul.addr %s3813, 8
        %s3815 = scalar_lea.vmem [#allocation25], %s3814
        // Predicated region
        $region173: #{tpu_custom_call.1} parent=103 // pred_check
          %p3816 = pneg %p625
        $region174: #{tpu_custom_call.1} parent=103 // pred_check_branch
          %3818 = sbr.rel (%p3816) target = $region176
        $region175: #{tpu_custom_call.1} parent=103 // pred_region
          %s3820 = ssub.s32 128, 128
          %3821 = vsyncadd %s3812, %s3820
          %s3822 = smul.addr %s63, 128
          %s3823 = scalar_lea.hbm %s21, %s3822
          %s3825 = sshll.u32 %s3815, 4
          %s3826 = int_to_ptr.vmem [resolvable:$true] %s3825
          %3828 = dma.vmem_to_hbm [thread:$0]  %s3826, 128, %s3823, %s3812
        $region176: #{tpu_custom_call.1} parent=103 // pred_fallthru
          _
      $region104: #{tpu_custom_call.1} parent=5 // pred_fallthru
        _
      %p3829 = scmp.le.s32.totalorder 2, %s54
      // Predicated region
      $region177: #{tpu_custom_call.1} parent=5 // pred_check
        %p3830 = pneg %p3829
      $region178: #{tpu_custom_call.1} parent=5 // pred_check_branch
        %3832 = sbr.rel (%p3830) target = $region180
      $region179: #{tpu_custom_call.1} parent=5 // pred_region
        %s3833 = ssub.s32 %s54, 2
        // Predicated region
        $region181: #{tpu_custom_call.1} parent=179 // pred_check
          %p3834 = pneg %p631
        $region182: #{tpu_custom_call.1} parent=179 // pred_check_branch
          %3836 = sbr.rel (%p3834) target = $region184
        $region183: #{tpu_custom_call.1} parent=179 // pred_region
          %s3837 = sand.u32 %s616, 1
          %s3838 = scalar_lea.sflag [#allocation4], %s3837
          %s3839 = sand.u32 %s616, 1
          %s3840 = smul.addr %s3839, 8
          %s3841 = scalar_lea.vmem [#allocation25], %s3840
          %3842 = dma.done %s3838, 128
        $region184: #{tpu_custom_call.1} parent=179 // pred_fallthru
          _
      $region180: #{tpu_custom_call.1} parent=5 // pred_fallthru
        _
    $region6: #{tpu_custom_call.1} parent=1 // loop_footer
      %s58 = sadd.s32 1, %s54
    $region7: #{tpu_custom_call.1} parent=1 // loop_footer_branch
      %53 = sbr.rel target = $region3
    $region8: #{tpu_custom_call.1} parent=1 // loop_exit
      _
    %3843 = vsyncpa [#allocation3], 1
    %s3844 = scalar_lea.sflag [#allocation3], 1
    %3845 = vsyncpa %s3844, 1
    %3846 = vsyncpa [#allocation6], 1
    %s3847 = scalar_lea.sflag [#allocation6], 1
    %3848 = vsyncpa %s3847, 1
    %3849 = vsyncpa [#allocation9], 1
    %s3850 = scalar_lea.sflag [#allocation9], 1
    %3851 = vsyncpa %s3850, 1
    %3852 = vsyncpa [#allocation12], 1
    %s3853 = scalar_lea.sflag [#allocation12], 1
    %3854 = vsyncpa %s3853, 1
    %3855 = vsyncpa [#allocation15], 1
    %s3856 = scalar_lea.sflag [#allocation15], 1
    %3857 = vsyncpa %s3856, 1
    %3858 = vsyncpa [#allocation18], 1
    %s3859 = scalar_lea.sflag [#allocation18], 1
    %3860 = vsyncpa %s3859, 1
    %3861 = vsyncpa [#allocation21], 1
    %s3862 = scalar_lea.sflag [#allocation21], 1
    %3863 = vsyncpa %s3862, 1
    %3864 = vsyncpa [#allocation24], 1
    %s3865 = scalar_lea.sflag [#allocation24], 1
    %3866 = vsyncpa %s3865, 1
    %3867 = vsyncpa [#allocation4], 1
    %s3868 = scalar_lea.sflag [#allocation4], 1
    %3869 = vsyncpa %s3868, 1

</llo_original>
